<compile_context>
chip_gen: v7x
topology: tpu7x:2x2x1
jax: 0.10.0
libtpu: 0.0.40
codegen_flags: <defaults>
</compile_context>

<pallas_src>
import functools

import jax
import jax.numpy as jnp
from jax.experimental import pallas as pl
from jax.experimental.pallas import tpu as pltpu


def _round_up(v, m):
    return -(-v // m) * m


def _vmem_limit(nbytes):
    # Stay within v7x's 64 MiB physical VMEM while leaving headroom.
    return int(min(64 * 1024 * 1024, max(32 * 1024 * 1024, int(nbytes))))


# ------------------------------------------------------------------ kernels

def frame_kernel(x_ref, tw_ref, cb_ref, gap_ref, hw_ref, hb_ref, g_ref, be_ref,
                 pw_ref, pb_ref, o_ref, *, img_h, img_w):
    """Fused per-frame stack: conv3x3 + ReLU + GAP + Linear + LayerNorm + proj.

    x_ref  : (n, H+2, (W+2)*C)   bf16  zero-padded frames, (w, c) flattened
    tw_ref : (3*(W+2)*C, W*C2)   bf16  fused banded conv matrix (all 3 row shifts)
    gap_ref: (W*C2, C2)          bf16  stacked identities (width-group sum)
    """
    h = img_h
    # Stack the three row-shifted views along the contraction axis: the 3x3
    # conv becomes ONE K = 3*(W+2)*C matmul instead of three K = (W+2)*C ones.
    xcat = jnp.concatenate(
        [x_ref[:, 0:h, :], x_ref[:, 1:h + 1, :], x_ref[:, 2:h + 2, :]], axis=-1)
    conv = jnp.einsum("nhx,xo->nho", xcat, tw_ref[...],
                      preferred_element_type=jnp.float32)
    conv = jnp.maximum(conv + cb_ref[...], 0.0)                # (n, H, W*C2) f32

    # Global average pool: mean over rows, then width-group sum via one MXU
    # matmul (replaces W-1 narrow 32-lane slice+adds on the VPU).
    rows = jnp.mean(conv, axis=1)                              # (n, W*C2)
    pooled = jnp.dot(rows.astype(gap_ref.dtype), gap_ref[...],
                     preferred_element_type=jnp.float32) * (1.0 / img_w)

    # Linear(C2 -> 1280) + LayerNorm(1280)  (LN math kept in f32).
    y = jnp.dot(pooled.astype(hw_ref.dtype), hw_ref[...],
                preferred_element_type=jnp.float32) + hb_ref[...]
    mu = jnp.mean(y, axis=-1, keepdims=True)
    var = jnp.mean((y - mu) ** 2, axis=-1, keepdims=True)
    feats = (y - mu) * jax.lax.rsqrt(var + 1e-5) * g_ref[...] + be_ref[...]

    # Merged fwd/bwd RNN input projection, padded to 128 lanes so the only HBM
    # store of this kernel is lane-dense.
    o_ref[...] = jnp.dot(feats.astype(pw_ref.dtype), pw_ref[...],
                         preferred_element_type=jnp.float32) + pb_ref[...]


def rnn_heads_kernel(proj_ref, mask_ref, whh_ref, aw1_ref, ab1_ref, aw2_ref,
                     ab2_ref, cw_ref, cb_ref, lw_ref, lb_ref,
                     cls_ref, loc_ref, rnn_scr):
    """Merged bidirectional RNN + attention + pooling + heads (one batch chunk).

    proj_ref: (T, Bt, 128) f32   merged fwd/bwd input projections
    mask_ref: (T, Bt, 1)   f32   validity mask
    whh_ref : (2H, 2H)     f32   block-diagonal hidden->hidden weight
    rnn_scr : (T, Bt, 2H)  f32   fwd hidden in lanes [0:H), bwd in [H:2H)
    """
    t = proj_ref.shape[0]
    bsz = proj_ref.shape[1]
    hid2 = whh_ref.shape[0]
    hid = hid2 // 2
    whh = whh_ref[...]

    def step(i, hcar):
        j = t - 1 - i
        row_f = proj_ref[i]                                    # (Bt, 128)
        row_b = proj_ref[j]
        m_f = mask_ref[i]                                      # (Bt, 1)
        m_b = mask_ref[j]
        # One dot + one tanh per step: block-diagonal hidden weight merges the
        # forward (lanes 0:H) and backward (lanes H:2H) recurrences.
        x_in = jnp.concatenate([row_f[:, 0:hid], row_b[:, hid:hid2]], axis=-1)
        nh = jnp.tanh(x_in + jnp.dot(hcar, whh,
                                     preferred_element_type=jnp.float32))
        h_f = m_f * nh[:, 0:hid] + (1.0 - m_f) * hcar[:, 0:hid]
        h_b = m_b * nh[:, hid:hid2] + (1.0 - m_b) * hcar[:, hid:hid2]
        # TODO(synk): exact pack_padded_sequence semantics of the opaque `rnn`
        # submodule are unknown; padded outputs are zeroed (pad_packed style).
        rnn_scr[i, :, 0:hid] = m_f * h_f
        rnn_scr[j, :, hid:hid2] = m_b * h_b
        return jnp.concatenate([h_f, h_b], axis=-1)

    h0 = jnp.zeros((bsz, hid2), jnp.float32)
    jax.lax.fori_loop(0, t, step, h0, unroll=True if t <= 32 else 8)

    r = rnn_scr[...]                                           # (T, Bt, 2H)

    # Attention MLP (Linear -> ReLU -> Linear -> Softmax over time).
    a1 = jnp.einsum("tbd,dk->tbk", r, aw1_ref[...],
                    preferred_element_type=jnp.float32) + ab1_ref[...]
    a1 = jnp.maximum(a1, 0.0)
    logits = jnp.sum(a1 * aw2_ref[...], axis=-1, keepdims=True) + ab2_ref[...]

    def softmax_time(z):                                       # softmax over time axis
        z = z - jnp.max(z, axis=0, keepdims=True)
        e = jnp.exp(z)
        return e / jnp.sum(e, axis=0, keepdims=True)

    attn = softmax_time(logits)                  # nn.Softmax(dim=1) in Sequential
    attn = jnp.where(mask_ref[...] > 0.0, attn, -1e9)   # masked_fill(~mask, -1e9)
    attn = softmax_time(attn)                    # F.softmax(dim=1)

    pooled = jnp.sum(r * attn, axis=0)                         # (Bt, 2H)
    cls_ref[...] = jnp.dot(pooled, cw_ref[...],
                           preferred_element_type=jnp.float32) + cb_ref[...]

    # Locator emitted lane-dense as (Bt, T) (T on lanes) instead of (T, Bt, 1).
    loc_tb = jnp.sum(r * lw_ref[...], axis=-1)                 # (T, Bt)
    loc_ref[...] = jnp.transpose(loc_tb) + lb_ref[...]         # (Bt, T)


# ----------------------------------------------------------------- glue (JAX)

def video_classifier_forward(x, lengths, p, *, frame_tile=128, batch_tile=8):
    b, t, c, h, w = x.shape
    hid = p["whh_f"].shape[0]
    c2 = p["head_w"].shape[0]
    feat = p["head_w"].shape[1]
    nc = p["cls_w"].shape[1]
    ah = p["attn_w1"].shape[1]

    pdim = _round_up(2 * hid, 128)          # padded projection width (lane dense)
    ncp = _round_up(nc, 128)                # padded classifier width

    # -------- frame pipeline: time-major so the RNN indexes time on axis 0.
    # TODO(synk): at production H*W this transpose+pad HBM copy should be removed
    # by reading x natively via the index_map and doing the halo/relayout in-kernel.
    frames = jnp.transpose(x, (1, 0, 3, 4, 2)).reshape(t * b, h, w, c)
    xpad = jnp.pad(frames, ((0, 0), (1, 1), (1, 1), (0, 0)))
    x3 = xpad.reshape(t * b, h + 2, (w + 2) * c).astype(jnp.bfloat16)

    tb = t * b
    # Fill the MXU M dimension (tiles up to `frame_tile` frames) while keeping
    # at least two grid steps so v7x's two TensorCores both get work.
    tile = max(8, min(frame_tile, _round_up(max(tb // 2, 8), 8)))
    tb_pad = _round_up(tb, tile)
    if tb_pad != tb:
        x3 = jnp.pad(x3, ((0, tb_pad - tb), (0, 0), (0, 0)))

    # 3x3 conv weights -> one fused banded (Toeplitz over width) matrix so the
    # im2col gather happens entirely inside the kernel / VMEM.
    w9 = p["conv_w"].reshape(3, 3, c, c2)                      # (di, dj, c, k)
    band = jnp.stack([jnp.eye(w, w + 2, k=dj, dtype=p["conv_w"].dtype)
                      for dj in range(3)])                     # (dj, w, wj)
    tw = jnp.einsum("dwj,idck->ijcwk", band, w9)               # (di, wj, c, w, k)
    tw = tw.reshape(3 * (w + 2) * c, w * c2).astype(jnp.bfloat16)
    cb_tiled = jnp.tile(p["conv_b"], (1, w))                   # (1, W*C2)
    gap = jnp.tile(jnp.eye(c2, dtype=jnp.float32),
                   (w, 1)).astype(jnp.bfloat16)                # (W*C2, C2)

    # Merged forward/backward input projections, zero-padded to 128 lanes.
    wxh = jnp.concatenate(
        [p["wxh_f"], p["wxh_b"],
         jnp.zeros((feat, pdim - 2 * hid), p["wxh_f"].dtype)], axis=1)
    bxh = jnp.concatenate(
        [p["bxh_f"], p["bxh_b"],
         jnp.zeros((1, pdim - 2 * hid), p["bxh_f"].dtype)], axis=1)

    est_frame = (
        2 * (tile * (h + 2) * (w + 2) * c * 2 + tile * pdim * 4)   # dbl-buffered io
        + tile * h * 3 * (w + 2) * c * 2                           # xcat (bf16)
        + 2 * tile * h * w * c2 * 4                                # conv activation
        + 2 * (tw.size * 2 + gap.size * 2 + c2 * feat * 2 + feat * pdim * 2
               + 6 * feat * 4)                                     # weights
        + (8 << 20))                                               # headroom

    proj = pl.pallas_call(
        functools.partial(frame_kernel, img_h=h, img_w=w),
        out_shape=jax.ShapeDtypeStruct((tb_pad, pdim), jnp.float32),
        grid_spec=pltpu.PrefetchScalarGridSpec(
            num_scalar_prefetch=0,
            grid=(tb_pad // tile,),
            in_specs=[
                pl.BlockSpec((tile, h + 2, (w + 2) * c), lambda i: (i, 0, 0)),
                pl.BlockSpec((3 * (w + 2) * c, w * c2), lambda i: (0, 0)),
                pl.BlockSpec((1, w * c2), lambda i: (0, 0)),
                pl.BlockSpec((w * c2, c2), lambda i: (0, 0)),
                pl.BlockSpec((c2, feat), lambda i: (0, 0)),
                pl.BlockSpec((1, feat), lambda i: (0, 0)),
                pl.BlockSpec((1, feat), lambda i: (0, 0)),
                pl.BlockSpec((1, feat), lambda i: (0, 0)),
                pl.BlockSpec((feat, pdim), lambda i: (0, 0)),
                pl.BlockSpec((1, pdim), lambda i: (0, 0)),
            ],
            out_specs=pl.BlockSpec((tile, pdim), lambda i: (i, 0))),
        compiler_params=pltpu.CompilerParams(
            dimension_semantics=("parallel",),
            vmem_limit_bytes=_vmem_limit(est_frame)),
    )(x3, tw, cb_tiled, gap,
      p["head_w"].astype(jnp.bfloat16), p["head_b"],
      p["ln_g"], p["ln_b"],
      wxh.astype(jnp.bfloat16), bxh)

    # -------- fused bidirectional RNN + attention + heads, gridded over batch
    # chunks ('parallel' so v7x's two TensorCores split independent batches and
    # VMEM stays bounded at production T*B).
    b_tile = min(batch_tile, _round_up(b, 8))
    b_pad = _round_up(b, b_tile)

    proj_tbd = proj[:tb].reshape(t, b, pdim)                   # (T, B, 128)
    if b_pad != b:
        proj_tbd = jnp.pad(proj_tbd, ((0, 0), (0, b_pad - b), (0, 0)))

    lengths_i = lengths.astype(jnp.int32)
    if b_pad != b:
        lengths_i = jnp.pad(lengths_i, (0, b_pad - b))
    mask = (jnp.arange(t)[None, :] < lengths_i[:, None]).astype(jnp.float32)
    mask_tb1 = jnp.transpose(mask)[:, :, None]                 # (T, Bp, 1)

    whh_bd = jnp.zeros((2 * hid, 2 * hid), jnp.float32)
    whh_bd = whh_bd.at[:hid, :hid].set(p["whh_f"])
    whh_bd = whh_bd.at[hid:, hid:].set(p["whh_b"])

    cls_w = jnp.concatenate(
        [p["cls_w"], jnp.zeros((2 * hid, ncp - nc), p["cls_w"].dtype)], axis=1)
    cls_b = jnp.concatenate(
        [p["cls_b"], jnp.zeros((1, ncp - nc), p["cls_b"].dtype)], axis=1)

    est_rnn = (
        2 * (t * b_tile * pdim * 4 + t * b_tile * 4
             + b_tile * ncp * 4 + b_tile * t * 4)
        + 6 * t * b_tile * 2 * hid * 4
        + 2 * (4 * hid * hid + 2 * hid * ah + 2 * hid * ncp + 4 * hid) * 4
        + (8 << 20))

    cls_pad, loc_bt = pl.pallas_call(
        rnn_heads_kernel,
        out_shape=(jax.ShapeDtypeStruct((b_pad, ncp), jnp.float32),
                   jax.ShapeDtypeStruct((b_pad, t), jnp.float32)),
        grid_spec=pltpu.PrefetchScalarGridSpec(
            num_scalar_prefetch=0,
            grid=(b_pad // b_tile,),
            in_specs=[
                pl.BlockSpec((t, b_tile, pdim), lambda i: (0, i, 0)),
                pl.BlockSpec((t, b_tile, 1), lambda i: (0, i, 0)),
                pl.BlockSpec((2 * hid, 2 * hid), lambda i: (0, 0)),
                pl.BlockSpec((2 * hid, ah), lambda i: (0, 0)),
                pl.BlockSpec((1, ah), lambda i: (0, 0)),
                pl.BlockSpec((1, ah), lambda i: (0, 0)),
                pl.BlockSpec((1, 1), lambda i: (0, 0)),
                pl.BlockSpec((2 * hid, ncp), lambda i: (0, 0)),
                pl.BlockSpec((1, ncp), lambda i: (0, 0)),
                pl.BlockSpec((1, 2 * hid), lambda i: (0, 0)),
                pl.BlockSpec((1, 1), lambda i: (0, 0)),
            ],
            out_specs=(pl.BlockSpec((b_tile, ncp), lambda i: (i, 0)),
                       pl.BlockSpec((b_tile, t), lambda i: (i, 0))),
            scratch_shapes=[pltpu.VMEM((t, b_tile, 2 * hid), jnp.float32)]),
        compiler_params=pltpu.CompilerParams(
            dimension_semantics=("parallel",),
            vmem_limit_bytes=_vmem_limit(est_rnn)),
    )(proj_tbd, mask_tb1,
      whh_bd,
      p["attn_w1"], p["attn_b1"], p["attn_w2"].T, p["attn_b2"],
      cls_w, cls_b,
      p["loc_w"].T, p["loc_b"])

    classification = cls_pad[:b, :nc]                          # (B, num_classes)
    localization = loc_bt[:b][:, :, None]                      # (B, T, 1)
    return classification, localization


# ------------------------------------------------------------------- params

def init_params(key, c, c2=32, feat=1280, hidden=32, num_classes=2):
    ks = jax.random.split(key, 16)

    def nrm(k, shape, scale=0.05):
        return (scale * jax.random.normal(k, shape)).astype(jnp.float32)

    return {
        "conv_w": nrm(ks[0], (9 * c, c2)),
        "conv_b": nrm(ks[1], (1, c2)),
        "head_w": nrm(ks[2], (c2, feat)),
        "head_b": nrm(ks[3], (1, feat)),
        "ln_g": jnp.ones((1, feat), jnp.float32),
        "ln_b": jnp.zeros((1, feat), jnp.float32),
        "wxh_f": nrm(ks[4], (feat, hidden), 0.02),
        "bxh_f": nrm(ks[5], (1, hidden)),
        "whh_f": nrm(ks[6], (hidden, hidden)),
        "wxh_b": nrm(ks[7], (feat, hidden), 0.02),
        "bxh_b": nrm(ks[8], (1, hidden)),
        "whh_b": nrm(ks[9], (hidden, hidden)),
        "attn_w1": nrm(ks[10], (2 * hidden, 128)),
        "attn_b1": nrm(ks[11], (1, 128)),
        "attn_w2": nrm(ks[12], (128, 1)),
        "attn_b2": nrm(ks[13], (1, 1)),
        "cls_w": nrm(ks[14], (2 * hidden, num_classes)),
        "cls_b": jnp.zeros((1, num_classes), jnp.float32),
        "loc_w": nrm(ks[15], (2 * hidden, 1)),
        "loc_b": jnp.zeros((1, 1), jnp.float32),
    }


if __name__ == "__main__":
    key = jax.random.PRNGKey(0)
    kx, kp = jax.random.split(key)

    B, T, C, H, W = 2, 8, 4, 16, 16
    x = jax.random.normal(kx, (B, T, C, H, W), dtype=jnp.float32)
    lengths = jnp.array([8, 5], dtype=jnp.int32)
    params = init_params(kp, c=C)

    fwd = jax.jit(video_classifier_forward)
    cls_out, loc_out = fwd(x, lengths, params)
    jax.block_until_ready((cls_out, loc_out))

    assert cls_out.shape == (B, 2), cls_out.shape
    assert loc_out.shape == (B, T, 1), loc_out.shape
    assert bool(jnp.all(jnp.isfinite(cls_out))) and bool(jnp.all(jnp.isfinite(loc_out)))
    print("KERNEL_OK")
</pallas_src>

<mosaic_0001>
module attributes {stable_mosaic.version = 11 : i64} {
  func.func @frame_kernel(%arg0: i32, %arg1: memref<8x18x72xbf16, #tpu.memory_space<vmem>>, %arg2: memref<216x512xbf16, #tpu.memory_space<vmem>>, %arg3: memref<1x512xf32, #tpu.memory_space<vmem>>, %arg4: memref<512x32xbf16, #tpu.memory_space<vmem>>, %arg5: memref<32x1280xbf16, #tpu.memory_space<vmem>>, %arg6: memref<1x1280xf32, #tpu.memory_space<vmem>>, %arg7: memref<1x1280xf32, #tpu.memory_space<vmem>>, %arg8: memref<1x1280xf32, #tpu.memory_space<vmem>>, %arg9: memref<1280x128xbf16, #tpu.memory_space<vmem>>, %arg10: memref<1x128xf32, #tpu.memory_space<vmem>>, %arg11: memref<8x128xf32, #tpu.memory_space<vmem>>) attributes {dimension_semantics = [#tpu.dimension_semantics<parallel>], iteration_bounds = array<i64: 2>, scalar_prefetch = 0 : i64, scratch_operands = 0 : i64, tpu.core_type = #tpu.core_type<tc>, window_params = [{transform_indices = @transform_0, window_bounds = array<i64: 8, 18, 72>}, {pipeline_mode = #tpu.pipeline_mode<synchronous>, transform_indices = @transform_1, window_bounds = array<i64: 216, 512>}, {pipeline_mode = #tpu.pipeline_mode<synchronous>, transform_indices = @transform_2, window_bounds = array<i64: 1, 512>}, {pipeline_mode = #tpu.pipeline_mode<synchronous>, transform_indices = @transform_3, window_bounds = array<i64: 512, 32>}, {pipeline_mode = #tpu.pipeline_mode<synchronous>, transform_indices = @transform_4, window_bounds = array<i64: 32, 1280>}, {pipeline_mode = #tpu.pipeline_mode<synchronous>, transform_indices = @transform_5, window_bounds = array<i64: 1, 1280>}, {pipeline_mode = #tpu.pipeline_mode<synchronous>, transform_indices = @transform_6, window_bounds = array<i64: 1, 1280>}, {pipeline_mode = #tpu.pipeline_mode<synchronous>, transform_indices = @transform_7, window_bounds = array<i64: 1, 1280>}, {pipeline_mode = #tpu.pipeline_mode<synchronous>, transform_indices = @transform_8, window_bounds = array<i64: 1280, 128>}, {pipeline_mode = #tpu.pipeline_mode<synchronous>, transform_indices = @transform_9, window_bounds = array<i64: 1, 128>}, {transform_indices = @transform_10, window_bounds = array<i64: 8, 128>}]} {
    %c0 = arith.constant 0 : index
    %c0_0 = arith.constant 0 : index
    %c0_1 = arith.constant 0 : index
    %0 = vector.load %arg1[%c0, %c0_0, %c0_1] : memref<8x18x72xbf16, #tpu.memory_space<vmem>>, vector<8x16x72xbf16>
    %c0_2 = arith.constant 0 : index
    %c1 = arith.constant 1 : index
    %c0_3 = arith.constant 0 : index
    %1 = vector.load %arg1[%c0_2, %c1, %c0_3] : memref<8x18x72xbf16, #tpu.memory_space<vmem>>, vector<8x16x72xbf16>
    %c0_4 = arith.constant 0 : index
    %c2 = arith.constant 2 : index
    %c0_5 = arith.constant 0 : index
    %2 = vector.load %arg1[%c0_4, %c2, %c0_5] : memref<8x18x72xbf16, #tpu.memory_space<vmem>>, vector<8x16x72xbf16>
    %3 = tpu.concatenate %0, %1, %2 in 2 : vector<8x16x72xbf16>, vector<8x16x72xbf16>, vector<8x16x72xbf16> -> vector<8x16x216xbf16>
    %c0_6 = arith.constant 0 : index
    %c0_7 = arith.constant 0 : index
    %4 = vector.load %arg2[%c0_6, %c0_7] : memref<216x512xbf16, #tpu.memory_space<vmem>>, vector<216x512xbf16>
    "tpu.trace_start"() <{level = 10 : i32, message = "nhx,xo->nho"}> : () -> ()
    %cst = arith.constant dense<0.000000e+00> : vector<8x16x512xf32>
    %5 = tpu.matmul %3, %4, %cst {dimension_numbers = #tpu.dot_dimension_numbers<[2], [0], [0, 1], [1], [0, 0, 0, 1, 1, 1], [], []>} : vector<8x16x216xbf16>, vector<216x512xbf16>, vector<8x16x512xf32> -> vector<8x16x512xf32>
    "tpu.trace_stop"() : () -> ()
    %c0_8 = arith.constant 0 : index
    %c0_9 = arith.constant 0 : index
    %6 = vector.load %arg3[%c0_8, %c0_9] : memref<1x512xf32, #tpu.memory_space<vmem>>, vector<1x512xf32>
    %7 = vector.shape_cast %6 : vector<1x512xf32> to vector<1x1x512xf32>
    %8 = vector.broadcast %7 : vector<1x1x512xf32> to vector<8x16x512xf32>
    %9 = arith.addf %5, %8 : vector<8x16x512xf32>
    %cst_10 = arith.constant 0.000000e+00 : f32
    %10 = vector.broadcast %cst_10 : f32 to vector<8x16x512xf32>
    %11 = arith.maximumf %9, %10 : vector<8x16x512xf32>
    %cst_11 = arith.constant dense<0.000000e+00> : vector<8x512xf32>
    %12 = vector.multi_reduction <add>, %11, %cst_11 [1] : vector<8x16x512xf32> to vector<8x512xf32>
    %cst_12 = arith.constant 1.600000e+01 : f32
    %13 = vector.broadcast %cst_12 : f32 to vector<8x512xf32>
    %14 = arith.divf %12, %13 : vector<8x512xf32>
    %15 = arith.truncf %14 : vector<8x512xf32> to vector<8x512xbf16>
    %c0_13 = arith.constant 0 : index
    %c0_14 = arith.constant 0 : index
    %16 = vector.load %arg4[%c0_13, %c0_14] : memref<512x32xbf16, #tpu.memory_space<vmem>>, vector<512x32xbf16>
    %cst_15 = arith.constant dense<0.000000e+00> : vector<8x32xf32>
    %17 = tpu.matmul %15, %16, %cst_15 {dimension_numbers = #tpu.dot_dimension_numbers<[1], [0], [0], [1], [0, 0, 1, 1], [], []>} : vector<8x512xbf16>, vector<512x32xbf16>, vector<8x32xf32> -> vector<8x32xf32>
    %cst_16 = arith.constant 6.250000e-02 : f32
    %18 = vector.broadcast %cst_16 : f32 to vector<8x32xf32>
    %19 = arith.mulf %17, %18 : vector<8x32xf32>
    %20 = arith.truncf %19 : vector<8x32xf32> to vector<8x32xbf16>
    %c0_17 = arith.constant 0 : index
    %c0_18 = arith.constant 0 : index
    %21 = vector.load %arg5[%c0_17, %c0_18] : memref<32x1280xbf16, #tpu.memory_space<vmem>>, vector<32x1280xbf16>
    %cst_19 = arith.constant dense<0.000000e+00> : vector<8x1280xf32>
    %22 = tpu.matmul %20, %21, %cst_19 {dimension_numbers = #tpu.dot_dimension_numbers<[1], [0], [0], [1], [0, 0, 1, 1], [], []>} : vector<8x32xbf16>, vector<32x1280xbf16>, vector<8x1280xf32> -> vector<8x1280xf32>
    %c0_20 = arith.constant 0 : index
    %c0_21 = arith.constant 0 : index
    %23 = vector.load %arg6[%c0_20, %c0_21] : memref<1x1280xf32, #tpu.memory_space<vmem>>, vector<1x1280xf32>
    %24 = vector.broadcast %23 : vector<1x1280xf32> to vector<8x1280xf32>
    %25 = arith.addf %22, %24 : vector<8x1280xf32>
    %cst_22 = arith.constant dense<0.000000e+00> : vector<8xf32>
    %26 = vector.multi_reduction <add>, %25, %cst_22 [1] : vector<8x1280xf32> to vector<8xf32>
    %27 = vector.shape_cast %26 : vector<8xf32> to vector<8x1xf32>
    %cst_23 = arith.constant 1.280000e+03 : f32
    %28 = vector.broadcast %cst_23 : f32 to vector<8x1xf32>
    %29 = arith.divf %27, %28 : vector<8x1xf32>
    %30 = vector.broadcast %29 : vector<8x1xf32> to vector<8x1280xf32>
    %31 = arith.subf %25, %30 : vector<8x1280xf32>
    %32 = arith.mulf %31, %31 : vector<8x1280xf32>
    %cst_24 = arith.constant dense<0.000000e+00> : vector<8xf32>
    %33 = vector.multi_reduction <add>, %32, %cst_24 [1] : vector<8x1280xf32> to vector<8xf32>
    %34 = vector.shape_cast %33 : vector<8xf32> to vector<8x1xf32>
    %cst_25 = arith.constant 1.280000e+03 : f32
    %35 = vector.broadcast %cst_25 : f32 to vector<8x1xf32>
    %36 = arith.divf %34, %35 : vector<8x1xf32>
    %37 = vector.broadcast %29 : vector<8x1xf32> to vector<8x1280xf32>
    %38 = arith.subf %25, %37 : vector<8x1280xf32>
    %cst_26 = arith.constant 9.99999974E-6 : f32
    %39 = vector.broadcast %cst_26 : f32 to vector<8x1xf32>
    %40 = arith.addf %36, %39 : vector<8x1xf32>
    %41 = math.rsqrt %40 : vector<8x1xf32>
    %42 = vector.broadcast %41 : vector<8x1xf32> to vector<8x1280xf32>
    %43 = arith.mulf %38, %42 : vector<8x1280xf32>
    %c0_27 = arith.constant 0 : index
    %c0_28 = arith.constant 0 : index
    %44 = vector.load %arg7[%c0_27, %c0_28] : memref<1x1280xf32, #tpu.memory_space<vmem>>, vector<1x1280xf32>
    %45 = vector.broadcast %44 : vector<1x1280xf32> to vector<8x1280xf32>
    %46 = arith.mulf %43, %45 : vector<8x1280xf32>
    %c0_29 = arith.constant 0 : index
    %c0_30 = arith.constant 0 : index
    %47 = vector.load %arg8[%c0_29, %c0_30] : memref<1x1280xf32, #tpu.memory_space<vmem>>, vector<1x1280xf32>
    %48 = vector.broadcast %47 : vector<1x1280xf32> to vector<8x1280xf32>
    %49 = arith.addf %46, %48 : vector<8x1280xf32>
    %50 = arith.truncf %49 : vector<8x1280xf32> to vector<8x1280xbf16>
    %c0_31 = arith.constant 0 : index
    %c0_32 = arith.constant 0 : index
    %51 = vector.load %arg9[%c0_31, %c0_32] : memref<1280x128xbf16, #tpu.memory_space<vmem>>, vector<1280x128xbf16>
    %cst_33 = arith.constant dense<0.000000e+00> : vector<8x128xf32>
    %52 = tpu.matmul %50, %51, %cst_33 {dimension_numbers = #tpu.dot_dimension_numbers<[1], [0], [0], [1], [0, 0, 1, 1], [], []>} : vector<8x1280xbf16>, vector<1280x128xbf16>, vector<8x128xf32> -> vector<8x128xf32>
    %c0_34 = arith.constant 0 : index
    %c0_35 = arith.constant 0 : index
    %53 = vector.load %arg10[%c0_34, %c0_35] : memref<1x128xf32, #tpu.memory_space<vmem>>, vector<1x128xf32>
    %54 = vector.broadcast %53 : vector<1x128xf32> to vector<8x128xf32>
    %55 = arith.addf %52, %54 : vector<8x128xf32>
    %c0_36 = arith.constant 0 : index
    %c0_37 = arith.constant 0 : index
    %56 = vector.load %arg11[%c0_36, %c0_37] : memref<8x128xf32, #tpu.memory_space<vmem>>, vector<8x128xf32>
    tpu.vector_store %arg11[%c0_36, %c0_37], %55 {strides = array<i32>} : memref<8x128xf32, #tpu.memory_space<vmem>>, vector<8x128xf32>,
    return
  }
  func.func @transform_0(%arg0: i32) -> (i32, i32, i32) {
    %c0_i32 = arith.constant 0 : i32
    %c0_i32_0 = arith.constant 0 : i32
    %c0_i32_1 = arith.constant 0 : i32
    return %arg0, %c0_i32, %c0_i32_0 : i32, i32, i32
  }
  func.func @transform_1(%arg0: i32) -> (i32, i32) {
    %c0_i32 = arith.constant 0 : i32
    %c0_i32_0 = arith.constant 0 : i32
    %c0_i32_1 = arith.constant 0 : i32
    return %c0_i32, %c0_i32_0 : i32, i32
  }
  func.func @transform_2(%arg0: i32) -> (i32, i32) {
    %c0_i32 = arith.constant 0 : i32
    %c0_i32_0 = arith.constant 0 : i32
    %c0_i32_1 = arith.constant 0 : i32
    return %c0_i32, %c0_i32_0 : i32, i32
  }
  func.func @transform_3(%arg0: i32) -> (i32, i32) {
    %c0_i32 = arith.constant 0 : i32
    %c0_i32_0 = arith.constant 0 : i32
    %c0_i32_1 = arith.constant 0 : i32
    return %c0_i32, %c0_i32_0 : i32, i32
  }
  func.func @transform_4(%arg0: i32) -> (i32, i32) {
    %c0_i32 = arith.constant 0 : i32
    %c0_i32_0 = arith.constant 0 : i32
    %c0_i32_1 = arith.constant 0 : i32
    return %c0_i32, %c0_i32_0 : i32, i32
  }
  func.func @transform_5(%arg0: i32) -> (i32, i32) {
    %c0_i32 = arith.constant 0 : i32
    %c0_i32_0 = arith.constant 0 : i32
    %c0_i32_1 = arith.constant 0 : i32
    return %c0_i32, %c0_i32_0 : i32, i32
  }
  func.func @transform_6(%arg0: i32) -> (i32, i32) {
    %c0_i32 = arith.constant 0 : i32
    %c0_i32_0 = arith.constant 0 : i32
    %c0_i32_1 = arith.constant 0 : i32
    return %c0_i32, %c0_i32_0 : i32, i32
  }
  func.func @transform_7(%arg0: i32) -> (i32, i32) {
    %c0_i32 = arith.constant 0 : i32
    %c0_i32_0 = arith.constant 0 : i32
    %c0_i32_1 = arith.constant 0 : i32
    return %c0_i32, %c0_i32_0 : i32, i32
  }
  func.func @transform_8(%arg0: i32) -> (i32, i32) {
    %c0_i32 = arith.constant 0 : i32
    %c0_i32_0 = arith.constant 0 : i32
    %c0_i32_1 = arith.constant 0 : i32
    return %c0_i32, %c0_i32_0 : i32, i32
  }
  func.func @transform_9(%arg0: i32) -> (i32, i32) {
    %c0_i32 = arith.constant 0 : i32
    %c0_i32_0 = arith.constant 0 : i32
    %c0_i32_1 = arith.constant 0 : i32
    return %c0_i32, %c0_i32_0 : i32, i32
  }
  func.func @transform_10(%arg0: i32) -> (i32, i32) {
    %c0_i32 = arith.constant 0 : i32
    %c0_i32_0 = arith.constant 0 : i32
    return %arg0, %c0_i32 : i32, i32
  }
}

module attributes {stable_mosaic.version = 11 : i64} {
  func.func @rnn_heads_kernel(%arg0: i32, %arg1: memref<8x8x128xf32, #tpu.memory_space<vmem>>, %arg2: memref<8x8x1xf32, #tpu.memory_space<vmem>>, %arg3: memref<64x64xf32, #tpu.memory_space<vmem>>, %arg4: memref<64x128xf32, #tpu.memory_space<vmem>>, %arg5: memref<1x128xf32, #tpu.memory_space<vmem>>, %arg6: memref<1x128xf32, #tpu.memory_space<vmem>>, %arg7: memref<1x1xf32, #tpu.memory_space<vmem>>, %arg8: memref<64x128xf32, #tpu.memory_space<vmem>>, %arg9: memref<1x128xf32, #tpu.memory_space<vmem>>, %arg10: memref<1x64xf32, #tpu.memory_space<vmem>>, %arg11: memref<1x1xf32, #tpu.memory_space<vmem>>, %arg12: memref<8x128xf32, #tpu.memory_space<vmem>>, %arg13: memref<8x8xf32, #tpu.memory_space<vmem>>, %arg14: memref<8x8x64xf32, #tpu.memory_space<vmem>>) attributes {dimension_semantics = [#tpu.dimension_semantics<parallel>], iteration_bounds = array<i64: 1>, scalar_prefetch = 0 : i64, scratch_operands = 1 : i64, tpu.core_type = #tpu.core_type<tc>, window_params = [{transform_indices = @transform_0, window_bounds = array<i64: 8, 8, 128>}, {transform_indices = @transform_1, window_bounds = array<i64: 8, 8, 1>}, {pipeline_mode = #tpu.pipeline_mode<synchronous>, transform_indices = @transform_2, window_bounds = array<i64: 64, 64>}, {pipeline_mode = #tpu.pipeline_mode<synchronous>, transform_indices = @transform_3, window_bounds = array<i64: 64, 128>}, {pipeline_mode = #tpu.pipeline_mode<synchronous>, transform_indices = @transform_4, window_bounds = array<i64: 1, 128>}, {pipeline_mode = #tpu.pipeline_mode<synchronous>, transform_indices = @transform_5, window_bounds = array<i64: 1, 128>}, {pipeline_mode = #tpu.pipeline_mode<synchronous>, transform_indices = @transform_6, window_bounds = array<i64: 1, 1>}, {pipeline_mode = #tpu.pipeline_mode<synchronous>, transform_indices = @transform_7, window_bounds = array<i64: 64, 128>}, {pipeline_mode = #tpu.pipeline_mode<synchronous>, transform_indices = @transform_8, window_bounds = array<i64: 1, 128>}, {pipeline_mode = #tpu.pipeline_mode<synchronous>, transform_indices = @transform_9, window_bounds = array<i64: 1, 64>}, {pipeline_mode = #tpu.pipeline_mode<synchronous>, transform_indices = @transform_10, window_bounds = array<i64: 1, 1>}, {transform_indices = @transform_11, window_bounds = array<i64: 8, 128>}, {transform_indices = @transform_12, window_bounds = array<i64: 8, 8>}]} {
    %c0 = arith.constant 0 : index
    %c0_0 = arith.constant 0 : index
    %0 = vector.load %arg3[%c0, %c0_0] : memref<64x64xf32, #tpu.memory_space<vmem>>, vector<64x64xf32>
    %cst = arith.constant 0.000000e+00 : f32
    %1 = vector.broadcast %cst : f32 to vector<8x64xf32>
    %c0_i32 = arith.constant 0 : i32
    %c7_i32 = arith.constant 7 : i32
    %2 = arith.subi %c7_i32, %c0_i32 : i32
    %3 = arith.index_cast %c0_i32 : i32 to index
    %c0_1 = arith.constant 0 : index
    %c0_2 = arith.constant 0 : index
    %4 = vector.load %arg1[%3, %c0_1, %c0_2] : memref<8x8x128xf32, #tpu.memory_space<vmem>>, vector<1x8x128xf32>
    %5 = vector.shape_cast %4 : vector<1x8x128xf32> to vector<8x128xf32>
    %6 = arith.index_cast %2 : i32 to index
    %c0_3 = arith.constant 0 : index
    %c0_4 = arith.constant 0 : index
    %7 = vector.load %arg1[%6, %c0_3, %c0_4] : memref<8x8x128xf32, #tpu.memory_space<vmem>>, vector<1x8x128xf32>
    %8 = vector.shape_cast %7 : vector<1x8x128xf32> to vector<8x128xf32>
    %9 = arith.index_cast %c0_i32 : i32 to index
    %c0_5 = arith.constant 0 : index
    %c0_6 = arith.constant 0 : index
    %10 = vector.load %arg2[%9, %c0_5, %c0_6] : memref<8x8x1xf32, #tpu.memory_space<vmem>>, vector<1x8x1xf32>
    %11 = vector.shape_cast %10 : vector<1x8x1xf32> to vector<8x1xf32>
    %12 = arith.index_cast %2 : i32 to index
    %c0_7 = arith.constant 0 : index
    %c0_8 = arith.constant 0 : index
    %13 = vector.load %arg2[%12, %c0_7, %c0_8] : memref<8x8x1xf32, #tpu.memory_space<vmem>>, vector<1x8x1xf32>
    %14 = vector.shape_cast %13 : vector<1x8x1xf32> to vector<8x1xf32>
    %15 = vector.extract_strided_slice %5 {offsets = [0, 0], sizes = [8, 32], strides = [1, 1]} : vector<8x128xf32> to vector<8x32xf32>
    %16 = vector.extract_strided_slice %8 {offsets = [0, 32], sizes = [8, 32], strides = [1, 1]} : vector<8x128xf32> to vector<8x32xf32>
    %17 = tpu.concatenate %15, %16 in 1 : vector<8x32xf32>, vector<8x32xf32> -> vector<8x64xf32>
    %cst_9 = arith.constant dense<0.000000e+00> : vector<8x64xf32>
    %18 = tpu.matmul %1, %0, %cst_9 {dimension_numbers = #tpu.dot_dimension_numbers<[1], [0], [0], [1], [0, 0, 1, 1], [], []>} : vector<8x64xf32>, vector<64x64xf32>, vector<8x64xf32> -> vector<8x64xf32>
    %19 = arith.addf %17, %18 : vector<8x64xf32>
    %20 = math.tanh %19 : vector<8x64xf32>
    %21 = vector.extract_strided_slice %20 {offsets = [0, 0], sizes = [8, 32], strides = [1, 1]} : vector<8x64xf32> to vector<8x32xf32>
    %22 = vector.broadcast %11 : vector<8x1xf32> to vector<8x32xf32>
    %23 = arith.mulf %22, %21 : vector<8x32xf32>
    %cst_10 = arith.constant 1.000000e+00 : f32
    %24 = vector.broadcast %cst_10 : f32 to vector<8x1xf32>
    %25 = arith.subf %24, %11 : vector<8x1xf32>
    %26 = vector.extract_strided_slice %1 {offsets = [0, 0], sizes = [8, 32], strides = [1, 1]} : vector<8x64xf32> to vector<8x32xf32>
    %27 = vector.broadcast %25 : vector<8x1xf32> to vector<8x32xf32>
    %28 = arith.mulf %27, %26 : vector<8x32xf32>
    %29 = arith.addf %23, %28 : vector<8x32xf32>
    %30 = vector.extract_strided_slice %20 {offsets = [0, 32], sizes = [8, 32], strides = [1, 1]} : vector<8x64xf32> to vector<8x32xf32>
    %31 = vector.broadcast %14 : vector<8x1xf32> to vector<8x32xf32>
    %32 = arith.mulf %31, %30 : vector<8x32xf32>
    %cst_11 = arith.constant 1.000000e+00 : f32
    %33 = vector.broadcast %cst_11 : f32 to vector<8x1xf32>
    %34 = arith.subf %33, %14 : vector<8x1xf32>
    %35 = vector.extract_strided_slice %1 {offsets = [0, 32], sizes = [8, 32], strides = [1, 1]} : vector<8x64xf32> to vector<8x32xf32>
    %36 = vector.broadcast %34 : vector<8x1xf32> to vector<8x32xf32>
    %37 = arith.mulf %36, %35 : vector<8x32xf32>
    %38 = arith.addf %32, %37 : vector<8x32xf32>
    %39 = vector.broadcast %11 : vector<8x1xf32> to vector<8x32xf32>
    %40 = arith.mulf %39, %29 : vector<8x32xf32>
    %41 = arith.index_cast %c0_i32 : i32 to index
    %c0_12 = arith.constant 0 : index
    %c0_13 = arith.constant 0 : index
    %42 = vector.load %arg14[%41, %c0_12, %c0_13] : memref<8x8x64xf32, #tpu.memory_space<vmem>>, vector<1x8x32xf32>
    %43 = vector.shape_cast %42 : vector<1x8x32xf32> to vector<8x32xf32>
    %44 = vector.shape_cast %40 : vector<8x32xf32> to vector<1x8x32xf32>
    tpu.vector_store %arg14[%41, %c0_12, %c0_13], %44 {strides = array<i32>} : memref<8x8x64xf32, #tpu.memory_space<vmem>>, vector<1x8x32xf32>,
    %45 = vector.broadcast %14 : vector<8x1xf32> to vector<8x32xf32>
    %46 = arith.mulf %45, %38 : vector<8x32xf32>
    %47 = arith.index_cast %2 : i32 to index
    %c0_14 = arith.constant 0 : index
    %c32 = arith.constant 32 : index
    %48 = vector.load %arg14[%47, %c0_14, %c32] : memref<8x8x64xf32, #tpu.memory_space<vmem>>, vector<1x8x32xf32>
    %49 = vector.shape_cast %48 : vector<1x8x32xf32> to vector<8x32xf32>
    %50 = vector.shape_cast %46 : vector<8x32xf32> to vector<1x8x32xf32>
    tpu.vector_store %arg14[%47, %c0_14, %c32], %50 {strides = array<i32>} : memref<8x8x64xf32, #tpu.memory_space<vmem>>, vector<1x8x32xf32>,
    %51 = tpu.concatenate %29, %38 in 1 : vector<8x32xf32>, vector<8x32xf32> -> vector<8x64xf32>
    %c1_i32 = arith.constant 1 : i32
    %c7_i32_15 = arith.constant 7 : i32
    %52 = arith.subi %c7_i32_15, %c1_i32 : i32
    %53 = arith.index_cast %c1_i32 : i32 to index
    %c0_16 = arith.constant 0 : index
    %c0_17 = arith.constant 0 : index
    %54 = vector.load %arg1[%53, %c0_16, %c0_17] : memref<8x8x128xf32, #tpu.memory_space<vmem>>, vector<1x8x128xf32>
    %55 = vector.shape_cast %54 : vector<1x8x128xf32> to vector<8x128xf32>
    %56 = arith.index_cast %52 : i32 to index
    %c0_18 = arith.constant 0 : index
    %c0_19 = arith.constant 0 : index
    %57 = vector.load %arg1[%56, %c0_18, %c0_19] : memref<8x8x128xf32, #tpu.memory_space<vmem>>, vector<1x8x128xf32>
    %58 = vector.shape_cast %57 : vector<1x8x128xf32> to vector<8x128xf32>
    %59 = arith.index_cast %c1_i32 : i32 to index
    %c0_20 = arith.constant 0 : index
    %c0_21 = arith.constant 0 : index
    %60 = vector.load %arg2[%59, %c0_20, %c0_21] : memref<8x8x1xf32, #tpu.memory_space<vmem>>, vector<1x8x1xf32>
    %61 = vector.shape_cast %60 : vector<1x8x1xf32> to vector<8x1xf32>
    %62 = arith.index_cast %52 : i32 to index
    %c0_22 = arith.constant 0 : index
    %c0_23 = arith.constant 0 : index
    %63 = vector.load %arg2[%62, %c0_22, %c0_23] : memref<8x8x1xf32, #tpu.memory_space<vmem>>, vector<1x8x1xf32>
    %64 = vector.shape_cast %63 : vector<1x8x1xf32> to vector<8x1xf32>
    %65 = vector.extract_strided_slice %55 {offsets = [0, 0], sizes = [8, 32], strides = [1, 1]} : vector<8x128xf32> to vector<8x32xf32>
    %66 = vector.extract_strided_slice %58 {offsets = [0, 32], sizes = [8, 32], strides = [1, 1]} : vector<8x128xf32> to vector<8x32xf32>
    %67 = tpu.concatenate %65, %66 in 1 : vector<8x32xf32>, vector<8x32xf32> -> vector<8x64xf32>
    %cst_24 = arith.constant dense<0.000000e+00> : vector<8x64xf32>
    %68 = tpu.matmul %51, %0, %cst_24 {dimension_numbers = #tpu.dot_dimension_numbers<[1], [0], [0], [1], [0, 0, 1, 1], [], []>} : vector<8x64xf32>, vector<64x64xf32>, vector<8x64xf32> -> vector<8x64xf32>
    %69 = arith.addf %67, %68 : vector<8x64xf32>
    %70 = math.tanh %69 : vector<8x64xf32>
    %71 = vector.extract_strided_slice %70 {offsets = [0, 0], sizes = [8, 32], strides = [1, 1]} : vector<8x64xf32> to vector<8x32xf32>
    %72 = vector.broadcast %61 : vector<8x1xf32> to vector<8x32xf32>
    %73 = arith.mulf %72, %71 : vector<8x32xf32>
    %cst_25 = arith.constant 1.000000e+00 : f32
    %74 = vector.broadcast %cst_25 : f32 to vector<8x1xf32>
    %75 = arith.subf %74, %61 : vector<8x1xf32>
    %76 = vector.extract_strided_slice %51 {offsets = [0, 0], sizes = [8, 32], strides = [1, 1]} : vector<8x64xf32> to vector<8x32xf32>
    %77 = vector.broadcast %75 : vector<8x1xf32> to vector<8x32xf32>
    %78 = arith.mulf %77, %76 : vector<8x32xf32>
    %79 = arith.addf %73, %78 : vector<8x32xf32>
    %80 = vector.extract_strided_slice %70 {offsets = [0, 32], sizes = [8, 32], strides = [1, 1]} : vector<8x64xf32> to vector<8x32xf32>
    %81 = vector.broadcast %64 : vector<8x1xf32> to vector<8x32xf32>
    %82 = arith.mulf %81, %80 : vector<8x32xf32>
    %cst_26 = arith.constant 1.000000e+00 : f32
    %83 = vector.broadcast %cst_26 : f32 to vector<8x1xf32>
    %84 = arith.subf %83, %64 : vector<8x1xf32>
    %85 = vector.extract_strided_slice %51 {offsets = [0, 32], sizes = [8, 32], strides = [1, 1]} : vector<8x64xf32> to vector<8x32xf32>
    %86 = vector.broadcast %84 : vector<8x1xf32> to vector<8x32xf32>
    %87 = arith.mulf %86, %85 : vector<8x32xf32>
    %88 = arith.addf %82, %87 : vector<8x32xf32>
    %89 = vector.broadcast %61 : vector<8x1xf32> to vector<8x32xf32>
    %90 = arith.mulf %89, %79 : vector<8x32xf32>
    %91 = arith.index_cast %c1_i32 : i32 to index
    %c0_27 = arith.constant 0 : index
    %c0_28 = arith.constant 0 : index
    %92 = vector.load %arg14[%91, %c0_27, %c0_28] : memref<8x8x64xf32, #tpu.memory_space<vmem>>, vector<1x8x32xf32>
    %93 = vector.shape_cast %92 : vector<1x8x32xf32> to vector<8x32xf32>
    %94 = vector.shape_cast %90 : vector<8x32xf32> to vector<1x8x32xf32>
    tpu.vector_store %arg14[%91, %c0_27, %c0_28], %94 {strides = array<i32>} : memref<8x8x64xf32, #tpu.memory_space<vmem>>, vector<1x8x32xf32>,
    %95 = vector.broadcast %64 : vector<8x1xf32> to vector<8x32xf32>
    %96 = arith.mulf %95, %88 : vector<8x32xf32>
    %97 = arith.index_cast %52 : i32 to index
    %c0_29 = arith.constant 0 : index
    %c32_30 = arith.constant 32 : index
    %98 = vector.load %arg14[%97, %c0_29, %c32_30] : memref<8x8x64xf32, #tpu.memory_space<vmem>>, vector<1x8x32xf32>
    %99 = vector.shape_cast %98 : vector<1x8x32xf32> to vector<8x32xf32>
    %100 = vector.shape_cast %96 : vector<8x32xf32> to vector<1x8x32xf32>
    tpu.vector_store %arg14[%97, %c0_29, %c32_30], %100 {strides = array<i32>} : memref<8x8x64xf32, #tpu.memory_space<vmem>>, vector<1x8x32xf32>,
    %101 = tpu.concatenate %79, %88 in 1 : vector<8x32xf32>, vector<8x32xf32> -> vector<8x64xf32>
    %c2_i32 = arith.constant 2 : i32
    %c7_i32_31 = arith.constant 7 : i32
    %102 = arith.subi %c7_i32_31, %c2_i32 : i32
    %103 = arith.index_cast %c2_i32 : i32 to index
    %c0_32 = arith.constant 0 : index
    %c0_33 = arith.constant 0 : index
    %104 = vector.load %arg1[%103, %c0_32, %c0_33] : memref<8x8x128xf32, #tpu.memory_space<vmem>>, vector<1x8x128xf32>
    %105 = vector.shape_cast %104 : vector<1x8x128xf32> to vector<8x128xf32>
    %106 = arith.index_cast %102 : i32 to index
    %c0_34 = arith.constant 0 : index
    %c0_35 = arith.constant 0 : index
    %107 = vector.load %arg1[%106, %c0_34, %c0_35] : memref<8x8x128xf32, #tpu.memory_space<vmem>>, vector<1x8x128xf32>
    %108 = vector.shape_cast %107 : vector<1x8x128xf32> to vector<8x128xf32>
    %109 = arith.index_cast %c2_i32 : i32 to index
    %c0_36 = arith.constant 0 : index
    %c0_37 = arith.constant 0 : index
    %110 = vector.load %arg2[%109, %c0_36, %c0_37] : memref<8x8x1xf32, #tpu.memory_space<vmem>>, vector<1x8x1xf32>
    %111 = vector.shape_cast %110 : vector<1x8x1xf32> to vector<8x1xf32>
    %112 = arith.index_cast %102 : i32 to index
    %c0_38 = arith.constant 0 : index
    %c0_39 = arith.constant 0 : index
    %113 = vector.load %arg2[%112, %c0_38, %c0_39] : memref<8x8x1xf32, #tpu.memory_space<vmem>>, vector<1x8x1xf32>
    %114 = vector.shape_cast %113 : vector<1x8x1xf32> to vector<8x1xf32>
    %115 = vector.extract_strided_slice %105 {offsets = [0, 0], sizes = [8, 32], strides = [1, 1]} : vector<8x128xf32> to vector<8x32xf32>
    %116 = vector.extract_strided_slice %108 {offsets = [0, 32], sizes = [8, 32], strides = [1, 1]} : vector<8x128xf32> to vector<8x32xf32>
    %117 = tpu.concatenate %115, %116 in 1 : vector<8x32xf32>, vector<8x32xf32> -> vector<8x64xf32>
    %cst_40 = arith.constant dense<0.000000e+00> : vector<8x64xf32>
    %118 = tpu.matmul %101, %0, %cst_40 {dimension_numbers = #tpu.dot_dimension_numbers<[1], [0], [0], [1], [0, 0, 1, 1], [], []>} : vector<8x64xf32>, vector<64x64xf32>, vector<8x64xf32> -> vector<8x64xf32>
    %119 = arith.addf %117, %118 : vector<8x64xf32>
    %120 = math.tanh %119 : vector<8x64xf32>
    %121 = vector.extract_strided_slice %120 {offsets = [0, 0], sizes = [8, 32], strides = [1, 1]} : vector<8x64xf32> to vector<8x32xf32>
    %122 = vector.broadcast %111 : vector<8x1xf32> to vector<8x32xf32>
    %123 = arith.mulf %122, %121 : vector<8x32xf32>
    %cst_41 = arith.constant 1.000000e+00 : f32
    %124 = vector.broadcast %cst_41 : f32 to vector<8x1xf32>
    %125 = arith.subf %124, %111 : vector<8x1xf32>
    %126 = vector.extract_strided_slice %101 {offsets = [0, 0], sizes = [8, 32], strides = [1, 1]} : vector<8x64xf32> to vector<8x32xf32>
    %127 = vector.broadcast %125 : vector<8x1xf32> to vector<8x32xf32>
    %128 = arith.mulf %127, %126 : vector<8x32xf32>
    %129 = arith.addf %123, %128 : vector<8x32xf32>
    %130 = vector.extract_strided_slice %120 {offsets = [0, 32], sizes = [8, 32], strides = [1, 1]} : vector<8x64xf32> to vector<8x32xf32>
    %131 = vector.broadcast %114 : vector<8x1xf32> to vector<8x32xf32>
    %132 = arith.mulf %131, %130 : vector<8x32xf32>
    %cst_42 = arith.constant 1.000000e+00 : f32
    %133 = vector.broadcast %cst_42 : f32 to vector<8x1xf32>
    %134 = arith.subf %133, %114 : vector<8x1xf32>
    %135 = vector.extract_strided_slice %101 {offsets = [0, 32], sizes = [8, 32], strides = [1, 1]} : vector<8x64xf32> to vector<8x32xf32>
    %136 = vector.broadcast %134 : vector<8x1xf32> to vector<8x32xf32>
    %137 = arith.mulf %136, %135 : vector<8x32xf32>
    %138 = arith.addf %132, %137 : vector<8x32xf32>
    %139 = vector.broadcast %111 : vector<8x1xf32> to vector<8x32xf32>
    %140 = arith.mulf %139, %129 : vector<8x32xf32>
    %141 = arith.index_cast %c2_i32 : i32 to index
    %c0_43 = arith.constant 0 : index
    %c0_44 = arith.constant 0 : index
    %142 = vector.load %arg14[%141, %c0_43, %c0_44] : memref<8x8x64xf32, #tpu.memory_space<vmem>>, vector<1x8x32xf32>
    %143 = vector.shape_cast %142 : vector<1x8x32xf32> to vector<8x32xf32>
    %144 = vector.shape_cast %140 : vector<8x32xf32> to vector<1x8x32xf32>
    tpu.vector_store %arg14[%141, %c0_43, %c0_44], %144 {strides = array<i32>} : memref<8x8x64xf32, #tpu.memory_space<vmem>>, vector<1x8x32xf32>,
    %145 = vector.broadcast %114 : vector<8x1xf32> to vector<8x32xf32>
    %146 = arith.mulf %145, %138 : vector<8x32xf32>
    %147 = arith.index_cast %102 : i32 to index
    %c0_45 = arith.constant 0 : index
    %c32_46 = arith.constant 32 : index
    %148 = vector.load %arg14[%147, %c0_45, %c32_46] : memref<8x8x64xf32, #tpu.memory_space<vmem>>, vector<1x8x32xf32>
    %149 = vector.shape_cast %148 : vector<1x8x32xf32> to vector<8x32xf32>
    %150 = vector.shape_cast %146 : vector<8x32xf32> to vector<1x8x32xf32>
    tpu.vector_store %arg14[%147, %c0_45, %c32_46], %150 {strides = array<i32>} : memref<8x8x64xf32, #tpu.memory_space<vmem>>, vector<1x8x32xf32>,
    %151 = tpu.concatenate %129, %138 in 1 : vector<8x32xf32>, vector<8x32xf32> -> vector<8x64xf32>
    %c3_i32 = arith.constant 3 : i32
    %c7_i32_47 = arith.constant 7 : i32
    %152 = arith.subi %c7_i32_47, %c3_i32 : i32
    %153 = arith.index_cast %c3_i32 : i32 to index
    %c0_48 = arith.constant 0 : index
    %c0_49 = arith.constant 0 : index
    %154 = vector.load %arg1[%153, %c0_48, %c0_49] : memref<8x8x128xf32, #tpu.memory_space<vmem>>, vector<1x8x128xf32>
    %155 = vector.shape_cast %154 : vector<1x8x128xf32> to vector<8x128xf32>
    %156 = arith.index_cast %152 : i32 to index
    %c0_50 = arith.constant 0 : index
    %c0_51 = arith.constant 0 : index
    %157 = vector.load %arg1[%156, %c0_50, %c0_51] : memref<8x8x128xf32, #tpu.memory_space<vmem>>, vector<1x8x128xf32>
    %158 = vector.shape_cast %157 : vector<1x8x128xf32> to vector<8x128xf32>
    %159 = arith.index_cast %c3_i32 : i32 to index
    %c0_52 = arith.constant 0 : index
    %c0_53 = arith.constant 0 : index
    %160 = vector.load %arg2[%159, %c0_52, %c0_53] : memref<8x8x1xf32, #tpu.memory_space<vmem>>, vector<1x8x1xf32>
    %161 = vector.shape_cast %160 : vector<1x8x1xf32> to vector<8x1xf32>
    %162 = arith.index_cast %152 : i32 to index
    %c0_54 = arith.constant 0 : index
    %c0_55 = arith.constant 0 : index
    %163 = vector.load %arg2[%162, %c0_54, %c0_55] : memref<8x8x1xf32, #tpu.memory_space<vmem>>, vector<1x8x1xf32>
    %164 = vector.shape_cast %163 : vector<1x8x1xf32> to vector<8x1xf32>
    %165 = vector.extract_strided_slice %155 {offsets = [0, 0], sizes = [8, 32], strides = [1, 1]} : vector<8x128xf32> to vector<8x32xf32>
    %166 = vector.extract_strided_slice %158 {offsets = [0, 32], sizes = [8, 32], strides = [1, 1]} : vector<8x128xf32> to vector<8x32xf32>
    %167 = tpu.concatenate %165, %166 in 1 : vector<8x32xf32>, vector<8x32xf32> -> vector<8x64xf32>
    %cst_56 = arith.constant dense<0.000000e+00> : vector<8x64xf32>
    %168 = tpu.matmul %151, %0, %cst_56 {dimension_numbers = #tpu.dot_dimension_numbers<[1], [0], [0], [1], [0, 0, 1, 1], [], []>} : vector<8x64xf32>, vector<64x64xf32>, vector<8x64xf32> -> vector<8x64xf32>
    %169 = arith.addf %167, %168 : vector<8x64xf32>
    %170 = math.tanh %169 : vector<8x64xf32>
    %171 = vector.extract_strided_slice %170 {offsets = [0, 0], sizes = [8, 32], strides = [1, 1]} : vector<8x64xf32> to vector<8x32xf32>
    %172 = vector.broadcast %161 : vector<8x1xf32> to vector<8x32xf32>
    %173 = arith.mulf %172, %171 : vector<8x32xf32>
    %cst_57 = arith.constant 1.000000e+00 : f32
    %174 = vector.broadcast %cst_57 : f32 to vector<8x1xf32>
    %175 = arith.subf %174, %161 : vector<8x1xf32>
    %176 = vector.extract_strided_slice %151 {offsets = [0, 0], sizes = [8, 32], strides = [1, 1]} : vector<8x64xf32> to vector<8x32xf32>
    %177 = vector.broadcast %175 : vector<8x1xf32> to vector<8x32xf32>
    %178 = arith.mulf %177, %176 : vector<8x32xf32>
    %179 = arith.addf %173, %178 : vector<8x32xf32>
    %180 = vector.extract_strided_slice %170 {offsets = [0, 32], sizes = [8, 32], strides = [1, 1]} : vector<8x64xf32> to vector<8x32xf32>
    %181 = vector.broadcast %164 : vector<8x1xf32> to vector<8x32xf32>
    %182 = arith.mulf %181, %180 : vector<8x32xf32>
    %cst_58 = arith.constant 1.000000e+00 : f32
    %183 = vector.broadcast %cst_58 : f32 to vector<8x1xf32>
    %184 = arith.subf %183, %164 : vector<8x1xf32>
    %185 = vector.extract_strided_slice %151 {offsets = [0, 32], sizes = [8, 32], strides = [1, 1]} : vector<8x64xf32> to vector<8x32xf32>
    %186 = vector.broadcast %184 : vector<8x1xf32> to vector<8x32xf32>
    %187 = arith.mulf %186, %185 : vector<8x32xf32>
    %188 = arith.addf %182, %187 : vector<8x32xf32>
    %189 = vector.broadcast %161 : vector<8x1xf32> to vector<8x32xf32>
    %190 = arith.mulf %189, %179 : vector<8x32xf32>
    %191 = arith.index_cast %c3_i32 : i32 to index
    %c0_59 = arith.constant 0 : index
    %c0_60 = arith.constant 0 : index
    %192 = vector.load %arg14[%191, %c0_59, %c0_60] : memref<8x8x64xf32, #tpu.memory_space<vmem>>, vector<1x8x32xf32>
    %193 = vector.shape_cast %192 : vector<1x8x32xf32> to vector<8x32xf32>
    %194 = vector.shape_cast %190 : vector<8x32xf32> to vector<1x8x32xf32>
    tpu.vector_store %arg14[%191, %c0_59, %c0_60], %194 {strides = array<i32>} : memref<8x8x64xf32, #tpu.memory_space<vmem>>, vector<1x8x32xf32>,
    %195 = vector.broadcast %164 : vector<8x1xf32> to vector<8x32xf32>
    %196 = arith.mulf %195, %188 : vector<8x32xf32>
    %197 = arith.index_cast %152 : i32 to index
    %c0_61 = arith.constant 0 : index
    %c32_62 = arith.constant 32 : index
    %198 = vector.load %arg14[%197, %c0_61, %c32_62] : memref<8x8x64xf32, #tpu.memory_space<vmem>>, vector<1x8x32xf32>
    %199 = vector.shape_cast %198 : vector<1x8x32xf32> to vector<8x32xf32>
    %200 = vector.shape_cast %196 : vector<8x32xf32> to vector<1x8x32xf32>
    tpu.vector_store %arg14[%197, %c0_61, %c32_62], %200 {strides = array<i32>} : memref<8x8x64xf32, #tpu.memory_space<vmem>>, vector<1x8x32xf32>,
    %201 = tpu.concatenate %179, %188 in 1 : vector<8x32xf32>, vector<8x32xf32> -> vector<8x64xf32>
    %c4_i32 = arith.constant 4 : i32
    %c7_i32_63 = arith.constant 7 : i32
    %202 = arith.subi %c7_i32_63, %c4_i32 : i32
    %203 = arith.index_cast %c4_i32 : i32 to index
    %c0_64 = arith.constant 0 : index
    %c0_65 = arith.constant 0 : index
    %204 = vector.load %arg1[%203, %c0_64, %c0_65] : memref<8x8x128xf32, #tpu.memory_space<vmem>>, vector<1x8x128xf32>
    %205 = vector.shape_cast %204 : vector<1x8x128xf32> to vector<8x128xf32>
    %206 = arith.index_cast %202 : i32 to index
    %c0_66 = arith.constant 0 : index
    %c0_67 = arith.constant 0 : index
    %207 = vector.load %arg1[%206, %c0_66, %c0_67] : memref<8x8x128xf32, #tpu.memory_space<vmem>>, vector<1x8x128xf32>
    %208 = vector.shape_cast %207 : vector<1x8x128xf32> to vector<8x128xf32>
    %209 = arith.index_cast %c4_i32 : i32 to index
    %c0_68 = arith.constant 0 : index
    %c0_69 = arith.constant 0 : index
    %210 = vector.load %arg2[%209, %c0_68, %c0_69] : memref<8x8x1xf32, #tpu.memory_space<vmem>>, vector<1x8x1xf32>
    %211 = vector.shape_cast %210 : vector<1x8x1xf32> to vector<8x1xf32>
    %212 = arith.index_cast %202 : i32 to index
    %c0_70 = arith.constant 0 : index
    %c0_71 = arith.constant 0 : index
    %213 = vector.load %arg2[%212, %c0_70, %c0_71] : memref<8x8x1xf32, #tpu.memory_space<vmem>>, vector<1x8x1xf32>
    %214 = vector.shape_cast %213 : vector<1x8x1xf32> to vector<8x1xf32>
    %215 = vector.extract_strided_slice %205 {offsets = [0, 0], sizes = [8, 32], strides = [1, 1]} : vector<8x128xf32> to vector<8x32xf32>
    %216 = vector.extract_strided_slice %208 {offsets = [0, 32], sizes = [8, 32], strides = [1, 1]} : vector<8x128xf32> to vector<8x32xf32>
    %217 = tpu.concatenate %215, %216 in 1 : vector<8x32xf32>, vector<8x32xf32> -> vector<8x64xf32>
    %cst_72 = arith.constant dense<0.000000e+00> : vector<8x64xf32>
    %218 = tpu.matmul %201, %0, %cst_72 {dimension_numbers = #tpu.dot_dimension_numbers<[1], [0], [0], [1], [0, 0, 1, 1], [], []>} : vector<8x64xf32>, vector<64x64xf32>, vector<8x64xf32> -> vector<8x64xf32>
    %219 = arith.addf %217, %218 : vector<8x64xf32>
    %220 = math.tanh %219 : vector<8x64xf32>
    %221 = vector.extract_strided_slice %220 {offsets = [0, 0], sizes = [8, 32], strides = [1, 1]} : vector<8x64xf32> to vector<8x32xf32>
    %222 = vector.broadcast %211 : vector<8x1xf32> to vector<8x32xf32>
    %223 = arith.mulf %222, %221 : vector<8x32xf32>
    %cst_73 = arith.constant 1.000000e+00 : f32
    %224 = vector.broadcast %cst_73 : f32 to vector<8x1xf32>
    %225 = arith.subf %224, %211 : vector<8x1xf32>
    %226 = vector.extract_strided_slice %201 {offsets = [0, 0], sizes = [8, 32], strides = [1, 1]} : vector<8x64xf32> to vector<8x32xf32>
    %227 = vector.broadcast %225 : vector<8x1xf32> to vector<8x32xf32>
    %228 = arith.mulf %227, %226 : vector<8x32xf32>
    %229 = arith.addf %223, %228 : vector<8x32xf32>
    %230 = vector.extract_strided_slice %220 {offsets = [0, 32], sizes = [8, 32], strides = [1, 1]} : vector<8x64xf32> to vector<8x32xf32>
    %231 = vector.broadcast %214 : vector<8x1xf32> to vector<8x32xf32>
    %232 = arith.mulf %231, %230 : vector<8x32xf32>
    %cst_74 = arith.constant 1.000000e+00 : f32
    %233 = vector.broadcast %cst_74 : f32 to vector<8x1xf32>
    %234 = arith.subf %233, %214 : vector<8x1xf32>
    %235 = vector.extract_strided_slice %201 {offsets = [0, 32], sizes = [8, 32], strides = [1, 1]} : vector<8x64xf32> to vector<8x32xf32>
    %236 = vector.broadcast %234 : vector<8x1xf32> to vector<8x32xf32>
    %237 = arith.mulf %236, %235 : vector<8x32xf32>
    %238 = arith.addf %232, %237 : vector<8x32xf32>
    %239 = vector.broadcast %211 : vector<8x1xf32> to vector<8x32xf32>
    %240 = arith.mulf %239, %229 : vector<8x32xf32>
    %241 = arith.index_cast %c4_i32 : i32 to index
    %c0_75 = arith.constant 0 : index
    %c0_76 = arith.constant 0 : index
    %242 = vector.load %arg14[%241, %c0_75, %c0_76] : memref<8x8x64xf32, #tpu.memory_space<vmem>>, vector<1x8x32xf32>
    %243 = vector.shape_cast %242 : vector<1x8x32xf32> to vector<8x32xf32>
    %244 = vector.shape_cast %240 : vector<8x32xf32> to vector<1x8x32xf32>
    tpu.vector_store %arg14[%241, %c0_75, %c0_76], %244 {strides = array<i32>} : memref<8x8x64xf32, #tpu.memory_space<vmem>>, vector<1x8x32xf32>,
    %245 = vector.broadcast %214 : vector<8x1xf32> to vector<8x32xf32>
    %246 = arith.mulf %245, %238 : vector<8x32xf32>
    %247 = arith.index_cast %202 : i32 to index
    %c0_77 = arith.constant 0 : index
    %c32_78 = arith.constant 32 : index
    %248 = vector.load %arg14[%247, %c0_77, %c32_78] : memref<8x8x64xf32, #tpu.memory_space<vmem>>, vector<1x8x32xf32>
    %249 = vector.shape_cast %248 : vector<1x8x32xf32> to vector<8x32xf32>
    %250 = vector.shape_cast %246 : vector<8x32xf32> to vector<1x8x32xf32>
    tpu.vector_store %arg14[%247, %c0_77, %c32_78], %250 {strides = array<i32>} : memref<8x8x64xf32, #tpu.memory_space<vmem>>, vector<1x8x32xf32>,
    %251 = tpu.concatenate %229, %238 in 1 : vector<8x32xf32>, vector<8x32xf32> -> vector<8x64xf32>
    %c5_i32 = arith.constant 5 : i32
    %c7_i32_79 = arith.constant 7 : i32
    %252 = arith.subi %c7_i32_79, %c5_i32 : i32
    %253 = arith.index_cast %c5_i32 : i32 to index
    %c0_80 = arith.constant 0 : index
    %c0_81 = arith.constant 0 : index
    %254 = vector.load %arg1[%253, %c0_80, %c0_81] : memref<8x8x128xf32, #tpu.memory_space<vmem>>, vector<1x8x128xf32>
    %255 = vector.shape_cast %254 : vector<1x8x128xf32> to vector<8x128xf32>
    %256 = arith.index_cast %252 : i32 to index
    %c0_82 = arith.constant 0 : index
    %c0_83 = arith.constant 0 : index
    %257 = vector.load %arg1[%256, %c0_82, %c0_83] : memref<8x8x128xf32, #tpu.memory_space<vmem>>, vector<1x8x128xf32>
    %258 = vector.shape_cast %257 : vector<1x8x128xf32> to vector<8x128xf32>
    %259 = arith.index_cast %c5_i32 : i32 to index
    %c0_84 = arith.constant 0 : index
    %c0_85 = arith.constant 0 : index
    %260 = vector.load %arg2[%259, %c0_84, %c0_85] : memref<8x8x1xf32, #tpu.memory_space<vmem>>, vector<1x8x1xf32>
    %261 = vector.shape_cast %260 : vector<1x8x1xf32> to vector<8x1xf32>
    %262 = arith.index_cast %252 : i32 to index
    %c0_86 = arith.constant 0 : index
    %c0_87 = arith.constant 0 : index
    %263 = vector.load %arg2[%262, %c0_86, %c0_87] : memref<8x8x1xf32, #tpu.memory_space<vmem>>, vector<1x8x1xf32>
    %264 = vector.shape_cast %263 : vector<1x8x1xf32> to vector<8x1xf32>
    %265 = vector.extract_strided_slice %255 {offsets = [0, 0], sizes = [8, 32], strides = [1, 1]} : vector<8x128xf32> to vector<8x32xf32>
    %266 = vector.extract_strided_slice %258 {offsets = [0, 32], sizes = [8, 32], strides = [1, 1]} : vector<8x128xf32> to vector<8x32xf32>
    %267 = tpu.concatenate %265, %266 in 1 : vector<8x32xf32>, vector<8x32xf32> -> vector<8x64xf32>
    %cst_88 = arith.constant dense<0.000000e+00> : vector<8x64xf32>
    %268 = tpu.matmul %251, %0, %cst_88 {dimension_numbers = #tpu.dot_dimension_numbers<[1], [0], [0], [1], [0, 0, 1, 1], [], []>} : vector<8x64xf32>, vector<64x64xf32>, vector<8x64xf32> -> vector<8x64xf32>
    %269 = arith.addf %267, %268 : vector<8x64xf32>
    %270 = math.tanh %269 : vector<8x64xf32>
    %271 = vector.extract_strided_slice %270 {offsets = [0, 0], sizes = [8, 32], strides = [1, 1]} : vector<8x64xf32> to vector<8x32xf32>
    %272 = vector.broadcast %261 : vector<8x1xf32> to vector<8x32xf32>
    %273 = arith.mulf %272, %271 : vector<8x32xf32>
    %cst_89 = arith.constant 1.000000e+00 : f32
    %274 = vector.broadcast %cst_89 : f32 to vector<8x1xf32>
    %275 = arith.subf %274, %261 : vector<8x1xf32>
    %276 = vector.extract_strided_slice %251 {offsets = [0, 0], sizes = [8, 32], strides = [1, 1]} : vector<8x64xf32> to vector<8x32xf32>
    %277 = vector.broadcast %275 : vector<8x1xf32> to vector<8x32xf32>
    %278 = arith.mulf %277, %276 : vector<8x32xf32>
    %279 = arith.addf %273, %278 : vector<8x32xf32>
    %280 = vector.extract_strided_slice %270 {offsets = [0, 32], sizes = [8, 32], strides = [1, 1]} : vector<8x64xf32> to vector<8x32xf32>
    %281 = vector.broadcast %264 : vector<8x1xf32> to vector<8x32xf32>
    %282 = arith.mulf %281, %280 : vector<8x32xf32>
    %cst_90 = arith.constant 1.000000e+00 : f32
    %283 = vector.broadcast %cst_90 : f32 to vector<8x1xf32>
    %284 = arith.subf %283, %264 : vector<8x1xf32>
    %285 = vector.extract_strided_slice %251 {offsets = [0, 32], sizes = [8, 32], strides = [1, 1]} : vector<8x64xf32> to vector<8x32xf32>
    %286 = vector.broadcast %284 : vector<8x1xf32> to vector<8x32xf32>
    %287 = arith.mulf %286, %285 : vector<8x32xf32>
    %288 = arith.addf %282, %287 : vector<8x32xf32>
    %289 = vector.broadcast %261 : vector<8x1xf32> to vector<8x32xf32>
    %290 = arith.mulf %289, %279 : vector<8x32xf32>
    %291 = arith.index_cast %c5_i32 : i32 to index
    %c0_91 = arith.constant 0 : index
    %c0_92 = arith.constant 0 : index
    %292 = vector.load %arg14[%291, %c0_91, %c0_92] : memref<8x8x64xf32, #tpu.memory_space<vmem>>, vector<1x8x32xf32>
    %293 = vector.shape_cast %292 : vector<1x8x32xf32> to vector<8x32xf32>
    %294 = vector.shape_cast %290 : vector<8x32xf32> to vector<1x8x32xf32>
    tpu.vector_store %arg14[%291, %c0_91, %c0_92], %294 {strides = array<i32>} : memref<8x8x64xf32, #tpu.memory_space<vmem>>, vector<1x8x32xf32>,
    %295 = vector.broadcast %264 : vector<8x1xf32> to vector<8x32xf32>
    %296 = arith.mulf %295, %288 : vector<8x32xf32>
    %297 = arith.index_cast %252 : i32 to index
    %c0_93 = arith.constant 0 : index
    %c32_94 = arith.constant 32 : index
    %298 = vector.load %arg14[%297, %c0_93, %c32_94] : memref<8x8x64xf32, #tpu.memory_space<vmem>>, vector<1x8x32xf32>
    %299 = vector.shape_cast %298 : vector<1x8x32xf32> to vector<8x32xf32>
    %300 = vector.shape_cast %296 : vector<8x32xf32> to vector<1x8x32xf32>
    tpu.vector_store %arg14[%297, %c0_93, %c32_94], %300 {strides = array<i32>} : memref<8x8x64xf32, #tpu.memory_space<vmem>>, vector<1x8x32xf32>,
    %301 = tpu.concatenate %279, %288 in 1 : vector<8x32xf32>, vector<8x32xf32> -> vector<8x64xf32>
    %c6_i32 = arith.constant 6 : i32
    %c7_i32_95 = arith.constant 7 : i32
    %302 = arith.subi %c7_i32_95, %c6_i32 : i32
    %303 = arith.index_cast %c6_i32 : i32 to index
    %c0_96 = arith.constant 0 : index
    %c0_97 = arith.constant 0 : index
    %304 = vector.load %arg1[%303, %c0_96, %c0_97] : memref<8x8x128xf32, #tpu.memory_space<vmem>>, vector<1x8x128xf32>
    %305 = vector.shape_cast %304 : vector<1x8x128xf32> to vector<8x128xf32>
    %306 = arith.index_cast %302 : i32 to index
    %c0_98 = arith.constant 0 : index
    %c0_99 = arith.constant 0 : index
    %307 = vector.load %arg1[%306, %c0_98, %c0_99] : memref<8x8x128xf32, #tpu.memory_space<vmem>>, vector<1x8x128xf32>
    %308 = vector.shape_cast %307 : vector<1x8x128xf32> to vector<8x128xf32>
    %309 = arith.index_cast %c6_i32 : i32 to index
    %c0_100 = arith.constant 0 : index
    %c0_101 = arith.constant 0 : index
    %310 = vector.load %arg2[%309, %c0_100, %c0_101] : memref<8x8x1xf32, #tpu.memory_space<vmem>>, vector<1x8x1xf32>
    %311 = vector.shape_cast %310 : vector<1x8x1xf32> to vector<8x1xf32>
    %312 = arith.index_cast %302 : i32 to index
    %c0_102 = arith.constant 0 : index
    %c0_103 = arith.constant 0 : index
    %313 = vector.load %arg2[%312, %c0_102, %c0_103] : memref<8x8x1xf32, #tpu.memory_space<vmem>>, vector<1x8x1xf32>
    %314 = vector.shape_cast %313 : vector<1x8x1xf32> to vector<8x1xf32>
    %315 = vector.extract_strided_slice %305 {offsets = [0, 0], sizes = [8, 32], strides = [1, 1]} : vector<8x128xf32> to vector<8x32xf32>
    %316 = vector.extract_strided_slice %308 {offsets = [0, 32], sizes = [8, 32], strides = [1, 1]} : vector<8x128xf32> to vector<8x32xf32>
    %317 = tpu.concatenate %315, %316 in 1 : vector<8x32xf32>, vector<8x32xf32> -> vector<8x64xf32>
    %cst_104 = arith.constant dense<0.000000e+00> : vector<8x64xf32>
    %318 = tpu.matmul %301, %0, %cst_104 {dimension_numbers = #tpu.dot_dimension_numbers<[1], [0], [0], [1], [0, 0, 1, 1], [], []>} : vector<8x64xf32>, vector<64x64xf32>, vector<8x64xf32> -> vector<8x64xf32>
    %319 = arith.addf %317, %318 : vector<8x64xf32>
    %320 = math.tanh %319 : vector<8x64xf32>
    %321 = vector.extract_strided_slice %320 {offsets = [0, 0], sizes = [8, 32], strides = [1, 1]} : vector<8x64xf32> to vector<8x32xf32>
    %322 = vector.broadcast %311 : vector<8x1xf32> to vector<8x32xf32>
    %323 = arith.mulf %322, %321 : vector<8x32xf32>
    %cst_105 = arith.constant 1.000000e+00 : f32
    %324 = vector.broadcast %cst_105 : f32 to vector<8x1xf32>
    %325 = arith.subf %324, %311 : vector<8x1xf32>
    %326 = vector.extract_strided_slice %301 {offsets = [0, 0], sizes = [8, 32], strides = [1, 1]} : vector<8x64xf32> to vector<8x32xf32>
    %327 = vector.broadcast %325 : vector<8x1xf32> to vector<8x32xf32>
    %328 = arith.mulf %327, %326 : vector<8x32xf32>
    %329 = arith.addf %323, %328 : vector<8x32xf32>
    %330 = vector.extract_strided_slice %320 {offsets = [0, 32], sizes = [8, 32], strides = [1, 1]} : vector<8x64xf32> to vector<8x32xf32>
    %331 = vector.broadcast %314 : vector<8x1xf32> to vector<8x32xf32>
    %332 = arith.mulf %331, %330 : vector<8x32xf32>
    %cst_106 = arith.constant 1.000000e+00 : f32
    %333 = vector.broadcast %cst_106 : f32 to vector<8x1xf32>
    %334 = arith.subf %333, %314 : vector<8x1xf32>
    %335 = vector.extract_strided_slice %301 {offsets = [0, 32], sizes = [8, 32], strides = [1, 1]} : vector<8x64xf32> to vector<8x32xf32>
    %336 = vector.broadcast %334 : vector<8x1xf32> to vector<8x32xf32>
    %337 = arith.mulf %336, %335 : vector<8x32xf32>
    %338 = arith.addf %332, %337 : vector<8x32xf32>
    %339 = vector.broadcast %311 : vector<8x1xf32> to vector<8x32xf32>
    %340 = arith.mulf %339, %329 : vector<8x32xf32>
    %341 = arith.index_cast %c6_i32 : i32 to index
    %c0_107 = arith.constant 0 : index
    %c0_108 = arith.constant 0 : index
    %342 = vector.load %arg14[%341, %c0_107, %c0_108] : memref<8x8x64xf32, #tpu.memory_space<vmem>>, vector<1x8x32xf32>
    %343 = vector.shape_cast %342 : vector<1x8x32xf32> to vector<8x32xf32>
    %344 = vector.shape_cast %340 : vector<8x32xf32> to vector<1x8x32xf32>
    tpu.vector_store %arg14[%341, %c0_107, %c0_108], %344 {strides = array<i32>} : memref<8x8x64xf32, #tpu.memory_space<vmem>>, vector<1x8x32xf32>,
    %345 = vector.broadcast %314 : vector<8x1xf32> to vector<8x32xf32>
    %346 = arith.mulf %345, %338 : vector<8x32xf32>
    %347 = arith.index_cast %302 : i32 to index
    %c0_109 = arith.constant 0 : index
    %c32_110 = arith.constant 32 : index
    %348 = vector.load %arg14[%347, %c0_109, %c32_110] : memref<8x8x64xf32, #tpu.memory_space<vmem>>, vector<1x8x32xf32>
    %349 = vector.shape_cast %348 : vector<1x8x32xf32> to vector<8x32xf32>
    %350 = vector.shape_cast %346 : vector<8x32xf32> to vector<1x8x32xf32>
    tpu.vector_store %arg14[%347, %c0_109, %c32_110], %350 {strides = array<i32>} : memref<8x8x64xf32, #tpu.memory_space<vmem>>, vector<1x8x32xf32>,
    %351 = tpu.concatenate %329, %338 in 1 : vector<8x32xf32>, vector<8x32xf32> -> vector<8x64xf32>
    %c7_i32_111 = arith.constant 7 : i32
    %c7_i32_112 = arith.constant 7 : i32
    %352 = arith.subi %c7_i32_112, %c7_i32_111 : i32
    %353 = arith.index_cast %c7_i32_111 : i32 to index
    %c0_113 = arith.constant 0 : index
    %c0_114 = arith.constant 0 : index
    %354 = vector.load %arg1[%353, %c0_113, %c0_114] : memref<8x8x128xf32, #tpu.memory_space<vmem>>, vector<1x8x128xf32>
    %355 = vector.shape_cast %354 : vector<1x8x128xf32> to vector<8x128xf32>
    %356 = arith.index_cast %352 : i32 to index
    %c0_115 = arith.constant 0 : index
    %c0_116 = arith.constant 0 : index
    %357 = vector.load %arg1[%356, %c0_115, %c0_116] : memref<8x8x128xf32, #tpu.memory_space<vmem>>, vector<1x8x128xf32>
    %358 = vector.shape_cast %357 : vector<1x8x128xf32> to vector<8x128xf32>
    %359 = arith.index_cast %c7_i32_111 : i32 to index
    %c0_117 = arith.constant 0 : index
    %c0_118 = arith.constant 0 : index
    %360 = vector.load %arg2[%359, %c0_117, %c0_118] : memref<8x8x1xf32, #tpu.memory_space<vmem>>, vector<1x8x1xf32>
    %361 = vector.shape_cast %360 : vector<1x8x1xf32> to vector<8x1xf32>
    %362 = arith.index_cast %352 : i32 to index
    %c0_119 = arith.constant 0 : index
    %c0_120 = arith.constant 0 : index
    %363 = vector.load %arg2[%362, %c0_119, %c0_120] : memref<8x8x1xf32, #tpu.memory_space<vmem>>, vector<1x8x1xf32>
    %364 = vector.shape_cast %363 : vector<1x8x1xf32> to vector<8x1xf32>
    %365 = vector.extract_strided_slice %355 {offsets = [0, 0], sizes = [8, 32], strides = [1, 1]} : vector<8x128xf32> to vector<8x32xf32>
    %366 = vector.extract_strided_slice %358 {offsets = [0, 32], sizes = [8, 32], strides = [1, 1]} : vector<8x128xf32> to vector<8x32xf32>
    %367 = tpu.concatenate %365, %366 in 1 : vector<8x32xf32>, vector<8x32xf32> -> vector<8x64xf32>
    %cst_121 = arith.constant dense<0.000000e+00> : vector<8x64xf32>
    %368 = tpu.matmul %351, %0, %cst_121 {dimension_numbers = #tpu.dot_dimension_numbers<[1], [0], [0], [1], [0, 0, 1, 1], [], []>} : vector<8x64xf32>, vector<64x64xf32>, vector<8x64xf32> -> vector<8x64xf32>
    %369 = arith.addf %367, %368 : vector<8x64xf32>
    %370 = math.tanh %369 : vector<8x64xf32>
    %371 = vector.extract_strided_slice %370 {offsets = [0, 0], sizes = [8, 32], strides = [1, 1]} : vector<8x64xf32> to vector<8x32xf32>
    %372 = vector.broadcast %361 : vector<8x1xf32> to vector<8x32xf32>
    %373 = arith.mulf %372, %371 : vector<8x32xf32>
    %cst_122 = arith.constant 1.000000e+00 : f32
    %374 = vector.broadcast %cst_122 : f32 to vector<8x1xf32>
    %375 = arith.subf %374, %361 : vector<8x1xf32>
    %376 = vector.extract_strided_slice %351 {offsets = [0, 0], sizes = [8, 32], strides = [1, 1]} : vector<8x64xf32> to vector<8x32xf32>
    %377 = vector.broadcast %375 : vector<8x1xf32> to vector<8x32xf32>
    %378 = arith.mulf %377, %376 : vector<8x32xf32>
    %379 = arith.addf %373, %378 : vector<8x32xf32>
    %380 = vector.extract_strided_slice %370 {offsets = [0, 32], sizes = [8, 32], strides = [1, 1]} : vector<8x64xf32> to vector<8x32xf32>
    %381 = vector.broadcast %364 : vector<8x1xf32> to vector<8x32xf32>
    %382 = arith.mulf %381, %380 : vector<8x32xf32>
    %cst_123 = arith.constant 1.000000e+00 : f32
    %383 = vector.broadcast %cst_123 : f32 to vector<8x1xf32>
    %384 = arith.subf %383, %364 : vector<8x1xf32>
    %385 = vector.extract_strided_slice %351 {offsets = [0, 32], sizes = [8, 32], strides = [1, 1]} : vector<8x64xf32> to vector<8x32xf32>
    %386 = vector.broadcast %384 : vector<8x1xf32> to vector<8x32xf32>
    %387 = arith.mulf %386, %385 : vector<8x32xf32>
    %388 = arith.addf %382, %387 : vector<8x32xf32>
    %389 = vector.broadcast %361 : vector<8x1xf32> to vector<8x32xf32>
    %390 = arith.mulf %389, %379 : vector<8x32xf32>
    %391 = arith.index_cast %c7_i32_111 : i32 to index
    %c0_124 = arith.constant 0 : index
    %c0_125 = arith.constant 0 : index
    %392 = vector.load %arg14[%391, %c0_124, %c0_125] : memref<8x8x64xf32, #tpu.memory_space<vmem>>, vector<1x8x32xf32>
    %393 = vector.shape_cast %392 : vector<1x8x32xf32> to vector<8x32xf32>
    %394 = vector.shape_cast %390 : vector<8x32xf32> to vector<1x8x32xf32>
    tpu.vector_store %arg14[%391, %c0_124, %c0_125], %394 {strides = array<i32>} : memref<8x8x64xf32, #tpu.memory_space<vmem>>, vector<1x8x32xf32>,
    %395 = vector.broadcast %364 : vector<8x1xf32> to vector<8x32xf32>
    %396 = arith.mulf %395, %388 : vector<8x32xf32>
    %397 = arith.index_cast %352 : i32 to index
    %c0_126 = arith.constant 0 : index
    %c32_127 = arith.constant 32 : index
    %398 = vector.load %arg14[%397, %c0_126, %c32_127] : memref<8x8x64xf32, #tpu.memory_space<vmem>>, vector<1x8x32xf32>
    %399 = vector.shape_cast %398 : vector<1x8x32xf32> to vector<8x32xf32>
    %400 = vector.shape_cast %396 : vector<8x32xf32> to vector<1x8x32xf32>
    tpu.vector_store %arg14[%397, %c0_126, %c32_127], %400 {strides = array<i32>} : memref<8x8x64xf32, #tpu.memory_space<vmem>>, vector<1x8x32xf32>,
    %401 = tpu.concatenate %379, %388 in 1 : vector<8x32xf32>, vector<8x32xf32> -> vector<8x64xf32>
    %c8_i32 = arith.constant 8 : i32
    %c0_128 = arith.constant 0 : index
    %c0_129 = arith.constant 0 : index
    %c0_130 = arith.constant 0 : index
    %402 = vector.load %arg14[%c0_128, %c0_129, %c0_130] : memref<8x8x64xf32, #tpu.memory_space<vmem>>, vector<8x8x64xf32>
    %c0_131 = arith.constant 0 : index
    %c0_132 = arith.constant 0 : index
    %403 = vector.load %arg4[%c0_131, %c0_132] : memref<64x128xf32, #tpu.memory_space<vmem>>, vector<64x128xf32>
    "tpu.trace_start"() <{level = 10 : i32, message = "tbd,dk->tbk"}> : () -> ()
    %cst_133 = arith.constant dense<0.000000e+00> : vector<8x8x128xf32>
    %404 = tpu.matmul %402, %403, %cst_133 {dimension_numbers = #tpu.dot_dimension_numbers<[2], [0], [0, 1], [1], [0, 0, 0, 1, 1, 1], [], []>} : vector<8x8x64xf32>, vector<64x128xf32>, vector<8x8x128xf32> -> vector<8x8x128xf32>
    "tpu.trace_stop"() : () -> ()
    %c0_134 = arith.constant 0 : index
    %c0_135 = arith.constant 0 : index
    %405 = vector.load %arg5[%c0_134, %c0_135] : memref<1x128xf32, #tpu.memory_space<vmem>>, vector<1x128xf32>
    %406 = vector.shape_cast %405 : vector<1x128xf32> to vector<1x1x128xf32>
    %407 = vector.broadcast %406 : vector<1x1x128xf32> to vector<8x8x128xf32>
    %408 = arith.addf %404, %407 : vector<8x8x128xf32>
    %cst_136 = arith.constant 0.000000e+00 : f32
    %409 = vector.broadcast %cst_136 : f32 to vector<8x8x128xf32>
    %410 = arith.maximumf %408, %409 : vector<8x8x128xf32>
    %c0_137 = arith.constant 0 : index
    %c0_138 = arith.constant 0 : index
    %411 = vector.load %arg6[%c0_137, %c0_138] : memref<1x128xf32, #tpu.memory_space<vmem>>, vector<1x128xf32>
    %412 = vector.shape_cast %411 : vector<1x128xf32> to vector<1x1x128xf32>
    %413 = vector.broadcast %412 : vector<1x1x128xf32> to vector<8x8x128xf32>
    %414 = arith.mulf %410, %413 : vector<8x8x128xf32>
    %cst_139 = arith.constant dense<0.000000e+00> : vector<8x8xf32>
    %415 = vector.multi_reduction <add>, %414, %cst_139 [2] : vector<8x8x128xf32> to vector<8x8xf32>
    %416 = vector.shape_cast %415 : vector<8x8xf32> to vector<8x8x1xf32>
    %c0_140 = arith.constant 0 : index
    %c0_141 = arith.constant 0 : index
    %417 = vector.load %arg7[%c0_140, %c0_141] : memref<1x1xf32, #tpu.memory_space<vmem>>, vector<1x1xf32>
    %418 = vector.shape_cast %417 : vector<1x1xf32> to vector<1x1x1xf32>
    %419 = vector.broadcast %418 : vector<1x1x1xf32> to vector<8x8x1xf32>
    %420 = arith.addf %416, %419 : vector<8x8x1xf32>
    %cst_142 = arith.constant dense<0xFF800000> : vector<8x1xf32>
    %421 = vector.multi_reduction <maximumf>, %420, %cst_142 [0] : vector<8x8x1xf32> to vector<8x1xf32>
    %422 = vector.shape_cast %421 : vector<8x1xf32> to vector<1x8x1xf32>
    %423 = vector.broadcast %422 : vector<1x8x1xf32> to vector<8x8x1xf32>
    %424 = arith.subf %420, %423 : vector<8x8x1xf32>
    %425 = math.exp %424 : vector<8x8x1xf32>
    %cst_143 = arith.constant dense<0.000000e+00> : vector<8x1xf32>
    %426 = vector.multi_reduction <add>, %425, %cst_143 [0] : vector<8x8x1xf32> to vector<8x1xf32>
    %427 = vector.shape_cast %426 : vector<8x1xf32> to vector<1x8x1xf32>
    %428 = vector.broadcast %427 : vector<1x8x1xf32> to vector<8x8x1xf32>
    %429 = arith.divf %425, %428 : vector<8x8x1xf32>
    %c0_144 = arith.constant 0 : index
    %c0_145 = arith.constant 0 : index
    %c0_146 = arith.constant 0 : index
    %430 = vector.load %arg2[%c0_144, %c0_145, %c0_146] : memref<8x8x1xf32, #tpu.memory_space<vmem>>, vector<8x8x1xf32>
    %cst_147 = arith.constant 0.000000e+00 : f32
    %431 = vector.broadcast %cst_147 : f32 to vector<8x8x1xf32>
    %432 = arith.cmpf ogt, %430, %431 : vector<8x8x1xf32>
    %cst_148 = arith.constant -1.000000e+09 : f32
    %433 = vector.broadcast %cst_148 : f32 to vector<8x8x1xf32>
    %434 = arith.select %432, %429, %433 : vector<8x8x1xi1>, vector<8x8x1xf32>
    %cst_149 = arith.constant dense<0xFF800000> : vector<8x1xf32>
    %435 = vector.multi_reduction <maximumf>, %434, %cst_149 [0] : vector<8x8x1xf32> to vector<8x1xf32>
    %436 = vector.shape_cast %435 : vector<8x1xf32> to vector<1x8x1xf32>
    %437 = vector.broadcast %436 : vector<1x8x1xf32> to vector<8x8x1xf32>
    %438 = arith.subf %434, %437 : vector<8x8x1xf32>
    %439 = math.exp %438 : vector<8x8x1xf32>
    %cst_150 = arith.constant dense<0.000000e+00> : vector<8x1xf32>
    %440 = vector.multi_reduction <add>, %439, %cst_150 [0] : vector<8x8x1xf32> to vector<8x1xf32>
    %441 = vector.shape_cast %440 : vector<8x1xf32> to vector<1x8x1xf32>
    %442 = vector.broadcast %441 : vector<1x8x1xf32> to vector<8x8x1xf32>
    %443 = arith.divf %439, %442 : vector<8x8x1xf32>
    %444 = vector.broadcast %443 : vector<8x8x1xf32> to vector<8x8x64xf32>
    %445 = arith.mulf %402, %444 : vector<8x8x64xf32>
    %cst_151 = arith.constant dense<0.000000e+00> : vector<8x64xf32>
    %446 = vector.multi_reduction <add>, %445, %cst_151 [0] : vector<8x8x64xf32> to vector<8x64xf32>
    %c0_152 = arith.constant 0 : index
    %c0_153 = arith.constant 0 : index
    %447 = vector.load %arg8[%c0_152, %c0_153] : memref<64x128xf32, #tpu.memory_space<vmem>>, vector<64x128xf32>
    %cst_154 = arith.constant dense<0.000000e+00> : vector<8x128xf32>
    %448 = tpu.matmul %446, %447, %cst_154 {dimension_numbers = #tpu.dot_dimension_numbers<[1], [0], [0], [1], [0, 0, 1, 1], [], []>} : vector<8x64xf32>, vector<64x128xf32>, vector<8x128xf32> -> vector<8x128xf32>
    %c0_155 = arith.constant 0 : index
    %c0_156 = arith.constant 0 : index
    %449 = vector.load %arg9[%c0_155, %c0_156] : memref<1x128xf32, #tpu.memory_space<vmem>>, vector<1x128xf32>
    %450 = vector.broadcast %449 : vector<1x128xf32> to vector<8x128xf32>
    %451 = arith.addf %448, %450 : vector<8x128xf32>
    %c0_157 = arith.constant 0 : index
    %c0_158 = arith.constant 0 : index
    %452 = vector.load %arg12[%c0_157, %c0_158] : memref<8x128xf32, #tpu.memory_space<vmem>>, vector<8x128xf32>
    tpu.vector_store %arg12[%c0_157, %c0_158], %451 {strides = array<i32>} : memref<8x128xf32, #tpu.memory_space<vmem>>, vector<8x128xf32>,
    %c0_159 = arith.constant 0 : index
    %c0_160 = arith.constant 0 : index
    %453 = vector.load %arg10[%c0_159, %c0_160] : memref<1x64xf32, #tpu.memory_space<vmem>>, vector<1x64xf32>
    %454 = vector.shape_cast %453 : vector<1x64xf32> to vector<1x1x64xf32>
    %455 = vector.broadcast %454 : vector<1x1x64xf32> to vector<8x8x64xf32>
    %456 = arith.mulf %402, %455 : vector<8x8x64xf32>
    %cst_161 = arith.constant dense<0.000000e+00> : vector<8x8xf32>
    %457 = vector.multi_reduction <add>, %456, %cst_161 [2] : vector<8x8x64xf32> to vector<8x8xf32>
    %458 = tpu.transpose %457, [1, 0] : vector<8x8xf32> -> vector<8x8xf32>
    %c0_162 = arith.constant 0 : index
    %c0_163 = arith.constant 0 : index
    %459 = vector.load %arg11[%c0_162, %c0_163] : memref<1x1xf32, #tpu.memory_space<vmem>>, vector<1x1xf32>
    %460 = vector.broadcast %459 : vector<1x1xf32> to vector<8x8xf32>
    %461 = arith.addf %458, %460 : vector<8x8xf32>
    %c0_164 = arith.constant 0 : index
    %c0_165 = arith.constant 0 : index
    %462 = vector.load %arg13[%c0_164, %c0_165] : memref<8x8xf32, #tpu.memory_space<vmem>>, vector<8x8xf32>
    tpu.vector_store %arg13[%c0_164, %c0_165], %461 {strides = array<i32>} : memref<8x8xf32, #tpu.memory_space<vmem>>, vector<8x8xf32>,
    return
  }
  func.func @transform_0(%arg0: i32) -> (i32, i32, i32) {
    %c0_i32 = arith.constant 0 : i32
    %c0_i32_0 = arith.constant 0 : i32
    %c0_i32_1 = arith.constant 0 : i32
    return %c0_i32, %arg0, %c0_i32_0 : i32, i32, i32
  }
  func.func @transform_1(%arg0: i32) -> (i32, i32, i32) {
    %c0_i32 = arith.constant 0 : i32
    %c0_i32_0 = arith.constant 0 : i32
    %c0_i32_1 = arith.constant 0 : i32
    return %c0_i32, %arg0, %c0_i32_0 : i32, i32, i32
  }
  func.func @transform_2(%arg0: i32) -> (i32, i32) {
    %c0_i32 = arith.constant 0 : i32
    %c0_i32_0 = arith.constant 0 : i32
    %c0_i32_1 = arith.constant 0 : i32
    return %c0_i32, %c0_i32_0 : i32, i32
  }
  func.func @transform_3(%arg0: i32) -> (i32, i32) {
    %c0_i32 = arith.constant 0 : i32
    %c0_i32_0 = arith.constant 0 : i32
    %c0_i32_1 = arith.constant 0 : i32
    return %c0_i32, %c0_i32_0 : i32, i32
  }
  func.func @transform_4(%arg0: i32) -> (i32, i32) {
    %c0_i32 = arith.constant 0 : i32
    %c0_i32_0 = arith.constant 0 : i32
    %c0_i32_1 = arith.constant 0 : i32
    return %c0_i32, %c0_i32_0 : i32, i32
  }
  func.func @transform_5(%arg0: i32) -> (i32, i32) {
    %c0_i32 = arith.constant 0 : i32
    %c0_i32_0 = arith.constant 0 : i32
    %c0_i32_1 = arith.constant 0 : i32
    return %c0_i32, %c0_i32_0 : i32, i32
  }
  func.func @transform_6(%arg0: i32) -> (i32, i32) {
    %c0_i32 = arith.constant 0 : i32
    %c0_i32_0 = arith.constant 0 : i32
    %c0_i32_1 = arith.constant 0 : i32
    return %c0_i32, %c0_i32_0 : i32, i32
  }
  func.func @transform_7(%arg0: i32) -> (i32, i32) {
    %c0_i32 = arith.constant 0 : i32
    %c0_i32_0 = arith.constant 0 : i32
    %c0_i32_1 = arith.constant 0 : i32
    return %c0_i32, %c0_i32_0 : i32, i32
  }
  func.func @transform_8(%arg0: i32) -> (i32, i32) {
    %c0_i32 = arith.constant 0 : i32
    %c0_i32_0 = arith.constant 0 : i32
    %c0_i32_1 = arith.constant 0 : i32
    return %c0_i32, %c0_i32_0 : i32, i32
  }
  func.func @transform_9(%arg0: i32) -> (i32, i32) {
    %c0_i32 = arith.constant 0 : i32
    %c0_i32_0 = arith.constant 0 : i32
    %c0_i32_1 = arith.constant 0 : i32
    return %c0_i32, %c0_i32_0 : i32, i32
  }
  func.func @transform_10(%arg0: i32) -> (i32, i32) {
    %c0_i32 = arith.constant 0 : i32
    %c0_i32_0 = arith.constant 0 : i32
    %c0_i32_1 = arith.constant 0 : i32
    return %c0_i32, %c0_i32_0 : i32, i32
  }
  func.func @transform_11(%arg0: i32) -> (i32, i32) {
    %c0_i32 = arith.constant 0 : i32
    %c0_i32_0 = arith.constant 0 : i32
    return %arg0, %c0_i32 : i32, i32
  }
  func.func @transform_12(%arg0: i32) -> (i32, i32) {
    %c0_i32 = arith.constant 0 : i32
    %c0_i32_0 = arith.constant 0 : i32
    return %arg0, %c0_i32 : i32, i32
  }
}

</mosaic_0001>

<llo_original>
// kernel: video_classifier_forward.2
$region0: #{video_classifier_forward.2}
  #allocation0 [shape = 'u32[]', space=smem, size = 0x4, offset = 0x4, fixed_abs, tag = 'smem constant byte address 0x4 - core index']
  #allocation1 [shape = 'u32[144,128]{1,0:T(1,128)}', space=vmem, size = 0x12000, scoped, tag = 'internal scratch']
  %s0 = inlined_call_operand.vmem [shape: bf16[16,18,72], index: 0, kind: input, shape index: {}]
  %s1 = inlined_call_operand.vmem [shape: bf16[216,512], index: 1, kind: input, shape index: {}]
  %s2 = inlined_call_operand.vmem [shape: f32[1,512], index: 2, kind: input, shape index: {}]
  %s3 = inlined_call_operand.vmem [shape: bf16[512,32], index: 3, kind: input, shape index: {}]
  %s4 = inlined_call_operand.vmem [shape: bf16[32,1280], index: 4, kind: input, shape index: {}]
  %s5 = inlined_call_operand.vmem [shape: f32[1,1280], index: 5, kind: input, shape index: {}]
  %s6 = inlined_call_operand.vmem [shape: f32[1,1280], index: 6, kind: input, shape index: {}]
  %s7 = inlined_call_operand.vmem [shape: f32[1,1280], index: 7, kind: input, shape index: {}]
  %s8 = inlined_call_operand.vmem [shape: bf16[1280,128], index: 8, kind: input, shape index: {}]
  %s9 = inlined_call_operand.vmem [shape: f32[1,128], index: 9, kind: input, shape index: {}]
  %s10 = inlined_call_operand.vmem [shape: f32[16,128], index: 10, kind: output, shape index: {}]
  %s11 = sld [smem:[#allocation0]]
  $region73: #{video_classifier_forward.2} parent=0
    _
  %s13 = ssub.s32 1, %s11
  %s14 = scalar_select 0, %s13, %s11
  loop: start=0, step=1, limit=4
  $region2: #{video_classifier_forward.2} parent=0 // loop_pre_header
    _
  $region3: #{video_classifier_forward.2} parent=0 // loop_header
    %s16 = sphi 0, %s20
    %p17 = scmp.ge.s32.totalorder %s16, 4
    %s26 = sphi 0, %s28
    %s29 = sphi 0, %s26
    %s30 = sphi 0, %s29
    %s46 = sphi 0, %s30
    %s50 = sphi 0, %s50
    %s52 = sphi 0, %s50
    %s53 = sphi 0, %s52
    %s67 = sphi 0, %s53
    %s71 = sphi 0, %s71
    %s73 = sphi 0, %s71
    %s74 = sphi 0, %s73
    %s88 = sphi 0, %s74
    %s92 = sphi 0, %s92
    %s94 = sphi 0, %s92
    %s95 = sphi 0, %s94
    %s109 = sphi 0, %s95
    %s113 = sphi 0, %s113
    %s115 = sphi 0, %s113
    %s116 = sphi 0, %s115
    %s130 = sphi 0, %s116
    %s134 = sphi 0, %s134
    %s136 = sphi 0, %s134
    %s137 = sphi 0, %s136
    %s151 = sphi 0, %s137
    %s155 = sphi 0, %s155
    %s157 = sphi 0, %s155
    %s158 = sphi 0, %s157
    %s172 = sphi 0, %s158
    %s176 = sphi 0, %s176
    %s178 = sphi 0, %s176
    %s179 = sphi 0, %s178
    %s193 = sphi 0, %s179
    %s197 = sphi 0, %s197
    %s199 = sphi 0, %s197
    %s200 = sphi 0, %s199
    %s214 = sphi 0, %s200
    %s218 = sphi 0, %s218
    %s220 = sphi 0, %s218
    %s221 = sphi 0, %s220
    %s235 = sphi 0, %s221
    %s241 = sphi 0, %s243
    %s244 = sphi 0, %s241
    %s245 = sphi 0, %s244
    %s261 = sphi 0, %s245
  $region4: #{video_classifier_forward.2} parent=0 // loop_header_branch
    %19 = sbr.rel (%p17) target = $region8
  $region5: #{video_classifier_forward.2} parent=0 // loop_body
    %s21 = ssub.s32 %s16, 1
    %s22 = ssub.s32 %s16, 2
    %s23 = sadd.s32 %s16, 1
    %s24 = ssub.s32 %s16, %s23
    %p25 = scmp.eq.s32.totalorder %s24, 0
    %s27 = sadd.s32 %s26, 1
    %s28 = scalar_select %p25, %s26, %s27
    %p31 = pneg %p25
    %p32 = scmp.eq.s32.totalorder %s16, 1
    %p33 = por %p31, %p32
    %p34 = scmp.ne.s32.totalorder %s26, %s29
    %p35 = scmp.eq.s32.totalorder %s16, 0
    %p36 = por %p34, %p35
    %p37 = scmp.ne.s32.totalorder %s26, %s29
    %p38 = scmp.eq.s32.totalorder %s21, 1
    %p39 = por %p37, %p38
    %p40 = scmp.ne.s32.totalorder %s29, %s30
    %p41 = scmp.eq.s32.totalorder %s21, 0
    %p42 = por %p40, %p41
    %p43 = scmp.ne.s32.totalorder %s29, %s30
    %p44 = scmp.eq.s32.totalorder %s22, 1
    %p45 = por %p43, %p44
    %p47 = scmp.ne.s32.totalorder %s30, %s46
    %p48 = scmp.eq.s32.totalorder %s22, 0
    %p49 = por %p47, %p48
    %s51 = sadd.s32 %s50, 1
    %p54 = scmp.eq.s32.totalorder %s16, 1
    %p55 = scmp.ne.s32.totalorder %s50, %s52
    %p56 = scmp.eq.s32.totalorder %s16, 0
    %p57 = por %p55, %p56
    %p58 = scmp.ne.s32.totalorder %s50, %s52
    %p59 = scmp.eq.s32.totalorder %s21, 1
    %p60 = por %p58, %p59
    %p61 = scmp.ne.s32.totalorder %s52, %s53
    %p62 = scmp.eq.s32.totalorder %s21, 0
    %p63 = por %p61, %p62
    %p64 = scmp.ne.s32.totalorder %s52, %s53
    %p65 = scmp.eq.s32.totalorder %s22, 1
    %p66 = por %p64, %p65
    %p68 = scmp.ne.s32.totalorder %s53, %s67
    %p69 = scmp.eq.s32.totalorder %s22, 0
    %p70 = por %p68, %p69
    %s72 = sadd.s32 %s71, 1
    %p75 = scmp.eq.s32.totalorder %s16, 1
    %p76 = scmp.ne.s32.totalorder %s71, %s73
    %p77 = scmp.eq.s32.totalorder %s16, 0
    %p78 = por %p76, %p77
    %p79 = scmp.ne.s32.totalorder %s71, %s73
    %p80 = scmp.eq.s32.totalorder %s21, 1
    %p81 = por %p79, %p80
    %p82 = scmp.ne.s32.totalorder %s73, %s74
    %p83 = scmp.eq.s32.totalorder %s21, 0
    %p84 = por %p82, %p83
    %p85 = scmp.ne.s32.totalorder %s73, %s74
    %p86 = scmp.eq.s32.totalorder %s22, 1
    %p87 = por %p85, %p86
    %p89 = scmp.ne.s32.totalorder %s74, %s88
    %p90 = scmp.eq.s32.totalorder %s22, 0
    %p91 = por %p89, %p90
    %s93 = sadd.s32 %s92, 1
    %p96 = scmp.eq.s32.totalorder %s16, 1
    %p97 = scmp.ne.s32.totalorder %s92, %s94
    %p98 = scmp.eq.s32.totalorder %s16, 0
    %p99 = por %p97, %p98
    %p100 = scmp.ne.s32.totalorder %s92, %s94
    %p101 = scmp.eq.s32.totalorder %s21, 1
    %p102 = por %p100, %p101
    %p103 = scmp.ne.s32.totalorder %s94, %s95
    %p104 = scmp.eq.s32.totalorder %s21, 0
    %p105 = por %p103, %p104
    %p106 = scmp.ne.s32.totalorder %s94, %s95
    %p107 = scmp.eq.s32.totalorder %s22, 1
    %p108 = por %p106, %p107
    %p110 = scmp.ne.s32.totalorder %s95, %s109
    %p111 = scmp.eq.s32.totalorder %s22, 0
    %p112 = por %p110, %p111
    %s114 = sadd.s32 %s113, 1
    %p117 = scmp.eq.s32.totalorder %s16, 1
    %p118 = scmp.ne.s32.totalorder %s113, %s115
    %p119 = scmp.eq.s32.totalorder %s16, 0
    %p120 = por %p118, %p119
    %p121 = scmp.ne.s32.totalorder %s113, %s115
    %p122 = scmp.eq.s32.totalorder %s21, 1
    %p123 = por %p121, %p122
    %p124 = scmp.ne.s32.totalorder %s115, %s116
    %p125 = scmp.eq.s32.totalorder %s21, 0
    %p126 = por %p124, %p125
    %p127 = scmp.ne.s32.totalorder %s115, %s116
    %p128 = scmp.eq.s32.totalorder %s22, 1
    %p129 = por %p127, %p128
    %p131 = scmp.ne.s32.totalorder %s116, %s130
    %p132 = scmp.eq.s32.totalorder %s22, 0
    %p133 = por %p131, %p132
    %s135 = sadd.s32 %s134, 1
    %p138 = scmp.eq.s32.totalorder %s16, 1
    %p139 = scmp.ne.s32.totalorder %s134, %s136
    %p140 = scmp.eq.s32.totalorder %s16, 0
    %p141 = por %p139, %p140
    %p142 = scmp.ne.s32.totalorder %s134, %s136
    %p143 = scmp.eq.s32.totalorder %s21, 1
    %p144 = por %p142, %p143
    %p145 = scmp.ne.s32.totalorder %s136, %s137
    %p146 = scmp.eq.s32.totalorder %s21, 0
    %p147 = por %p145, %p146
    %p148 = scmp.ne.s32.totalorder %s136, %s137
    %p149 = scmp.eq.s32.totalorder %s22, 1
    %p150 = por %p148, %p149
    %p152 = scmp.ne.s32.totalorder %s137, %s151
    %p153 = scmp.eq.s32.totalorder %s22, 0
    %p154 = por %p152, %p153
    %s156 = sadd.s32 %s155, 1
    %p159 = scmp.eq.s32.totalorder %s16, 1
    %p160 = scmp.ne.s32.totalorder %s155, %s157
    %p161 = scmp.eq.s32.totalorder %s16, 0
    %p162 = por %p160, %p161
    %p163 = scmp.ne.s32.totalorder %s155, %s157
    %p164 = scmp.eq.s32.totalorder %s21, 1
    %p165 = por %p163, %p164
    %p166 = scmp.ne.s32.totalorder %s157, %s158
    %p167 = scmp.eq.s32.totalorder %s21, 0
    %p168 = por %p166, %p167
    %p169 = scmp.ne.s32.totalorder %s157, %s158
    %p170 = scmp.eq.s32.totalorder %s22, 1
    %p171 = por %p169, %p170
    %p173 = scmp.ne.s32.totalorder %s158, %s172
    %p174 = scmp.eq.s32.totalorder %s22, 0
    %p175 = por %p173, %p174
    %s177 = sadd.s32 %s176, 1
    %p180 = scmp.eq.s32.totalorder %s16, 1
    %p181 = scmp.ne.s32.totalorder %s176, %s178
    %p182 = scmp.eq.s32.totalorder %s16, 0
    %p183 = por %p181, %p182
    %p184 = scmp.ne.s32.totalorder %s176, %s178
    %p185 = scmp.eq.s32.totalorder %s21, 1
    %p186 = por %p184, %p185
    %p187 = scmp.ne.s32.totalorder %s178, %s179
    %p188 = scmp.eq.s32.totalorder %s21, 0
    %p189 = por %p187, %p188
    %p190 = scmp.ne.s32.totalorder %s178, %s179
    %p191 = scmp.eq.s32.totalorder %s22, 1
    %p192 = por %p190, %p191
    %p194 = scmp.ne.s32.totalorder %s179, %s193
    %p195 = scmp.eq.s32.totalorder %s22, 0
    %p196 = por %p194, %p195
    %s198 = sadd.s32 %s197, 1
    %p201 = scmp.eq.s32.totalorder %s16, 1
    %p202 = scmp.ne.s32.totalorder %s197, %s199
    %p203 = scmp.eq.s32.totalorder %s16, 0
    %p204 = por %p202, %p203
    %p205 = scmp.ne.s32.totalorder %s197, %s199
    %p206 = scmp.eq.s32.totalorder %s21, 1
    %p207 = por %p205, %p206
    %p208 = scmp.ne.s32.totalorder %s199, %s200
    %p209 = scmp.eq.s32.totalorder %s21, 0
    %p210 = por %p208, %p209
    %p211 = scmp.ne.s32.totalorder %s199, %s200
    %p212 = scmp.eq.s32.totalorder %s22, 1
    %p213 = por %p211, %p212
    %p215 = scmp.ne.s32.totalorder %s200, %s214
    %p216 = scmp.eq.s32.totalorder %s22, 0
    %p217 = por %p215, %p216
    %s219 = sadd.s32 %s218, 1
    %p222 = scmp.eq.s32.totalorder %s16, 1
    %p223 = scmp.ne.s32.totalorder %s218, %s220
    %p224 = scmp.eq.s32.totalorder %s16, 0
    %p225 = por %p223, %p224
    %p226 = scmp.ne.s32.totalorder %s218, %s220
    %p227 = scmp.eq.s32.totalorder %s21, 1
    %p228 = por %p226, %p227
    %p229 = scmp.ne.s32.totalorder %s220, %s221
    %p230 = scmp.eq.s32.totalorder %s21, 0
    %p231 = por %p229, %p230
    %p232 = scmp.ne.s32.totalorder %s220, %s221
    %p233 = scmp.eq.s32.totalorder %s22, 1
    %p234 = por %p232, %p233
    %p236 = scmp.ne.s32.totalorder %s221, %s235
    %p237 = scmp.eq.s32.totalorder %s22, 0
    %p238 = por %p236, %p237
    %s239 = ssub.s32 %s16, %s23
    %p240 = scmp.eq.s32.totalorder %s239, 0
    %s242 = sadd.s32 %s241, 1
    %s243 = scalar_select %p240, %s241, %s242
    %p246 = pneg %p240
    %p247 = scmp.eq.s32.totalorder %s16, 1
    %p248 = por %p246, %p247
    %p249 = scmp.ne.s32.totalorder %s241, %s244
    %p250 = scmp.eq.s32.totalorder %s16, 0
    %p251 = por %p249, %p250
    %p252 = scmp.ne.s32.totalorder %s241, %s244
    %p253 = scmp.eq.s32.totalorder %s21, 1
    %p254 = por %p252, %p253
    %p255 = scmp.ne.s32.totalorder %s244, %s245
    %p256 = scmp.eq.s32.totalorder %s21, 0
    %p257 = por %p255, %p256
    %p258 = scmp.ne.s32.totalorder %s244, %s245
    %p259 = scmp.eq.s32.totalorder %s22, 1
    %p260 = por %p258, %p259
    %p262 = scmp.ne.s32.totalorder %s245, %s261
    %p263 = scmp.eq.s32.totalorder %s22, 0
    %p264 = por %p262, %p263
    %p265 = scmp.le.s32.totalorder 1, %s16
    %p266 = scmp.lt.s32.totalorder %s16, 3
    %p267 = pnand %p265, %p266
    %p268 = pneg %p267
    // Predicated region
    $region9: #{video_classifier_forward.2} parent=5 // pred_check
      _
    $region10: #{video_classifier_forward.2} parent=5 // pred_check_branch
      %270 = sbr.rel (%p267) target = $region12
    $region11: #{video_classifier_forward.2} parent=5 // pred_region
      %s271 = ssub.s32 %s16, 1
      // Predicated region
      $region13: #{video_classifier_forward.2} parent=11 // pred_check
        %p272 = pneg %p63
      $region14: #{video_classifier_forward.2} parent=11 // pred_check_branch
        %274 = sbr.rel (%p272) target = $region16
      $region15: #{video_classifier_forward.2} parent=11 // pred_region
        _
      $region16: #{video_classifier_forward.2} parent=11 // pred_fallthru
        _
      // Predicated region
      $region17: #{video_classifier_forward.2} parent=11 // pred_check
        %p275 = pneg %p84
      $region18: #{video_classifier_forward.2} parent=11 // pred_check_branch
        %277 = sbr.rel (%p275) target = $region20
      $region19: #{video_classifier_forward.2} parent=11 // pred_region
        _
      $region20: #{video_classifier_forward.2} parent=11 // pred_fallthru
        _
      // Predicated region
      $region21: #{video_classifier_forward.2} parent=11 // pred_check
        %p278 = pneg %p105
      $region22: #{video_classifier_forward.2} parent=11 // pred_check_branch
        %280 = sbr.rel (%p278) target = $region24
      $region23: #{video_classifier_forward.2} parent=11 // pred_region
        _
      $region24: #{video_classifier_forward.2} parent=11 // pred_fallthru
        _
      // Predicated region
      $region25: #{video_classifier_forward.2} parent=11 // pred_check
        %p281 = pneg %p126
      $region26: #{video_classifier_forward.2} parent=11 // pred_check_branch
        %283 = sbr.rel (%p281) target = $region28
      $region27: #{video_classifier_forward.2} parent=11 // pred_region
        _
      $region28: #{video_classifier_forward.2} parent=11 // pred_fallthru
        _
      // Predicated region
      $region29: #{video_classifier_forward.2} parent=11 // pred_check
        %p284 = pneg %p147
      $region30: #{video_classifier_forward.2} parent=11 // pred_check_branch
        %286 = sbr.rel (%p284) target = $region32
      $region31: #{video_classifier_forward.2} parent=11 // pred_region
        _
      $region32: #{video_classifier_forward.2} parent=11 // pred_fallthru
        _
      // Predicated region
      $region33: #{video_classifier_forward.2} parent=11 // pred_check
        %p287 = pneg %p168
      $region34: #{video_classifier_forward.2} parent=11 // pred_check_branch
        %289 = sbr.rel (%p287) target = $region36
      $region35: #{video_classifier_forward.2} parent=11 // pred_region
        _
      $region36: #{video_classifier_forward.2} parent=11 // pred_fallthru
        _
      // Predicated region
      $region37: #{video_classifier_forward.2} parent=11 // pred_check
        %p290 = pneg %p189
      $region38: #{video_classifier_forward.2} parent=11 // pred_check_branch
        %292 = sbr.rel (%p290) target = $region40
      $region39: #{video_classifier_forward.2} parent=11 // pred_region
        _
      $region40: #{video_classifier_forward.2} parent=11 // pred_fallthru
        _
      // Predicated region
      $region41: #{video_classifier_forward.2} parent=11 // pred_check
        %p293 = pneg %p210
      $region42: #{video_classifier_forward.2} parent=11 // pred_check_branch
        %295 = sbr.rel (%p293) target = $region44
      $region43: #{video_classifier_forward.2} parent=11 // pred_region
        _
      $region44: #{video_classifier_forward.2} parent=11 // pred_fallthru
        _
      // Predicated region
      $region45: #{video_classifier_forward.2} parent=11 // pred_check
        %p296 = pneg %p231
      $region46: #{video_classifier_forward.2} parent=11 // pred_check_branch
        %298 = sbr.rel (%p296) target = $region48
      $region47: #{video_classifier_forward.2} parent=11 // pred_region
        _
      $region48: #{video_classifier_forward.2} parent=11 // pred_fallthru
        _
    $region12: #{video_classifier_forward.2} parent=5 // pred_fallthru
      _
    %p299 = scmp.lt.s32.totalorder %s16, 2
    // Predicated region
    $region49: #{video_classifier_forward.2} parent=5 // pred_check
      %p300 = pneg %p299
    $region50: #{video_classifier_forward.2} parent=5 // pred_check_branch
      %302 = sbr.rel (%p300) target = $region52
    $region51: #{video_classifier_forward.2} parent=5 // pred_region
      // Predicated region
      $region53: #{video_classifier_forward.2} parent=51 // pred_check
        %p303 = pneg %p36
      $region54: #{video_classifier_forward.2} parent=51 // pred_check_branch
        %305 = sbr.rel (%p303) target = $region56
      $region55: #{video_classifier_forward.2} parent=51 // pred_region
        %s306 = smul.u32 8, %s16
        %p307 = scmp.lt.s32.totalorder %s306, 15
        %s308 = scalar_select %p307, %s306, 15
        %s309 = smul.addr %s308, 3
        %s310 = smul.addr %s309, 4
        %s311 = scalar_lea.vmem %s0, %s310
        %s312 = smul.u32 8, %s16
      $region56: #{video_classifier_forward.2} parent=51 // pred_fallthru
        _
    $region52: #{video_classifier_forward.2} parent=5 // pred_fallthru
      _
    %p313 = scmp.le.s32.totalorder 1, %s16
    %p314 = scmp.lt.s32.totalorder %s16, 3
    %p315 = pnand %p313, %p314
    %p316 = pneg %p315
    // Predicated region
    $region57: #{video_classifier_forward.2} parent=5 // pred_check
      _
    $region58: #{video_classifier_forward.2} parent=5 // pred_check_branch
      %318 = sbr.rel (%p315) target = $region60
    $region59: #{video_classifier_forward.2} parent=5 // pred_region
      %s319 = ssub.s32 %s16, 1
      %s320 = smul.u32 8, %s21
      %p321 = scmp.lt.s32.totalorder %s320, 15
      %s322 = scalar_select %p321, %s320, 15
      %s323 = smul.addr %s322, 3
      %s324 = smul.addr %s323, 4
      %s325 = scalar_lea.vmem %s0, %s324
      %p326 = pneg %p42
      %p327 = pneg %p39
      %p328 = pneg %p63
      %p329 = pneg %p60
      %p330 = pneg %p84
      %p331 = pneg %p81
      %p332 = pneg %p105
      %p333 = pneg %p102
      %p334 = pneg %p126
      %p335 = pneg %p123
      %p336 = pneg %p147
      %p337 = pneg %p144
      %p338 = pneg %p168
      %p339 = pneg %p165
      %p340 = pneg %p189
      %p341 = pneg %p186
      %p342 = pneg %p210
      %p343 = pneg %p207
      %p344 = pneg %p231
      %p345 = pneg %p228
      %p346 = pneg %p257
      %p347 = pneg %p254
      %p348 = scmp.lt.s32.totalorder %s21, 1
      %s349 = scalar_select %p348, %s21, 1
      %s350 = smul.addr %s349, 8
      %s351 = scalar_lea.vmem %s10, %s350
      %s352 = smul.u32 8, %s21
      %p353 = scmp.lt.s32.totalorder %s352, 15
      %s354 = scalar_select %p353, %s352, 15
      %s355 = smul.addr %s354, 3
      %s356 = smul.addr %s355, 4
      %s357 = scalar_lea.vmem %s0, %s356
      %s358 = smul.u32 8, %s21
      %p359 = scmp.lt.s32.totalorder %s21, 1
      %s360 = scalar_select %p359, %s21, 1
      %s361 = smul.addr %s360, 8
      %s362 = scalar_lea.vmem %s10, %s361
      %v364 = vld [vmem:[%s357] sm:$0xf]
      %v365 = vld [vmem:[%s357 + $0x4] sm:$0xf]
      %v366 = vld [vmem:[%s357 + $0xc] sm:$0xf]
      %v367 = vld [vmem:[%s357 + $0x10] sm:$0xf]
      %v368 = vld [vmem:[%s357 + $0x18] sm:$0xf]
      %v369 = vld [vmem:[%s357 + $0x1c] sm:$0xf]
      %v370 = vld [vmem:[%s357 + $0x24] sm:$0xf]
      %v371 = vld [vmem:[%s357 + $0x28] sm:$0xf]
      %v372 = vld [vmem:[%s357 + $0x30] sm:$0xf]
      %v373 = vld [vmem:[%s357 + $0x34] sm:$0xf]
      %v374 = vld [vmem:[%s357 + $0x3c] sm:$0xf]
      %v375 = vld [vmem:[%s357 + $0x40] sm:$0xf]
      %v376 = vld [vmem:[%s357 + $0x48] sm:$0xf]
      %v377 = vld [vmem:[%s357 + $0x4c] sm:$0xf]
      %v378 = vld [vmem:[%s357 + $0x54] sm:$0xf]
      %v379 = vld [vmem:[%s357 + $0x58] sm:$0xf]
      %v380 = vld [vmem:[%s357 + $0x8] sm:$0x1]
      %v381 = vld [vmem:[%s357 + $0x14] sm:$0x1]
      %v382 = vld [vmem:[%s357 + $0x20] sm:$0x1]
      %v383 = vld [vmem:[%s357 + $0x2c] sm:$0x1]
      %v384 = vld [vmem:[%s357 + $0x38] sm:$0x1]
      %v385 = vld [vmem:[%s357 + $0x44] sm:$0x1]
      %v386 = vld [vmem:[%s357 + $0x50] sm:$0x1]
      %v387 = vld [vmem:[%s357 + $0x5c] sm:$0x1]
      %v388 = vld [vmem:[%s357] sm:$0xe]
      %v389 = vld [vmem:[%s357 + $0xc] sm:$0xe]
      %v390 = vld [vmem:[%s357 + $0x18] sm:$0xe]
      %v391 = vld [vmem:[%s357 + $0x24] sm:$0xe]
      %v392 = vld [vmem:[%s357 + $0x30] sm:$0xe]
      %v393 = vld [vmem:[%s357 + $0x3c] sm:$0xe]
      %v394 = vld [vmem:[%s357 + $0x48] sm:$0xe]
      %v395 = vld [vmem:[%s357 + $0x54] sm:$0xe]
      %v412 = vunpack.c.l.b16 %v364
      %v413 = vunpack.c.l.b16 %v365
      %v414 = vunpack.c.l.b16 %v366
      %v415 = vunpack.c.l.b16 %v367
      %v416 = vunpack.c.l.b16 %v368
      %v417 = vunpack.c.l.b16 %v369
      %v418 = vunpack.c.l.b16 %v370
      %v419 = vunpack.c.l.b16 %v371
      %v420 = vunpack.c.l.b16 %v372
      %v421 = vunpack.c.l.b16 %v373
      %v422 = vunpack.c.l.b16 %v374
      %v423 = vunpack.c.l.b16 %v375
      %v424 = vunpack.c.l.b16 %v376
      %v425 = vunpack.c.l.b16 %v377
      %v426 = vunpack.c.l.b16 %v378
      %v427 = vunpack.c.l.b16 %v379
      %v428 = vpack.c.b16 %v413, %v412
      %v429 = vpack.c.b16 %v415, %v414
      %v430 = vpack.c.b16 %v417, %v416
      %v431 = vpack.c.b16 %v419, %v418
      %v432 = vpack.c.b16 %v421, %v420
      %v433 = vpack.c.b16 %v423, %v422
      %v434 = vpack.c.b16 %v425, %v424
      %v435 = vpack.c.b16 %v427, %v426
      %v444 = vunpack.c.l.b16 %v380
      %v445 = vunpack.c.l.b16 %v381
      %v446 = vunpack.c.l.b16 %v382
      %v447 = vunpack.c.l.b16 %v383
      %v448 = vunpack.c.l.b16 %v384
      %v449 = vunpack.c.l.b16 %v385
      %v450 = vunpack.c.l.b16 %v386
      %v451 = vunpack.c.l.b16 %v387
      %v452 = vpack.c.b16 %v444, %v444
      %v453 = vpack.c.b16 %v445, %v445
      %v454 = vpack.c.b16 %v446, %v446
      %v455 = vpack.c.b16 %v447, %v447
      %v456 = vpack.c.b16 %v448, %v448
      %v457 = vpack.c.b16 %v449, %v449
      %v458 = vpack.c.b16 %v450, %v450
      %v459 = vpack.c.b16 %v451, %v451
      %vm460 = vsmask.f32 7424
      %v462 = vshrl.u32 %v428, 16
      %v464 = vshll.u32 %v428, 16
      %v466 = vrot.slane %v464, 1
      %v467 = vor.u32 %v462, %v466
      %v469 = vshll.u32 %v452, 16
      %v471 = vrot.slane %v469, 1
      %v472 = vsel %vm460, %v467, %v471
      %v474 = vshrl.u32 %v429, 16
      %v476 = vshll.u32 %v429, 16
      %v478 = vrot.slane %v476, 1
      %v479 = vor.u32 %v474, %v478
      %v481 = vshll.u32 %v453, 16
      %v483 = vrot.slane %v481, 1
      %v484 = vsel %vm460, %v479, %v483
      %v486 = vshrl.u32 %v430, 16
      %v488 = vshll.u32 %v430, 16
      %v490 = vrot.slane %v488, 1
      %v491 = vor.u32 %v486, %v490
      %v493 = vshll.u32 %v454, 16
      %v495 = vrot.slane %v493, 1
      %v496 = vsel %vm460, %v491, %v495
      %v498 = vshrl.u32 %v431, 16
      %v500 = vshll.u32 %v431, 16
      %v502 = vrot.slane %v500, 1
      %v503 = vor.u32 %v498, %v502
      %v505 = vshll.u32 %v455, 16
      %v507 = vrot.slane %v505, 1
      %v508 = vsel %vm460, %v503, %v507
      %v510 = vshrl.u32 %v432, 16
      %v512 = vshll.u32 %v432, 16
      %v514 = vrot.slane %v512, 1
      %v515 = vor.u32 %v510, %v514
      %v517 = vshll.u32 %v456, 16
      %v519 = vrot.slane %v517, 1
      %v520 = vsel %vm460, %v515, %v519
      %v522 = vshrl.u32 %v433, 16
      %v524 = vshll.u32 %v433, 16
      %v526 = vrot.slane %v524, 1
      %v527 = vor.u32 %v522, %v526
      %v529 = vshll.u32 %v457, 16
      %v531 = vrot.slane %v529, 1
      %v532 = vsel %vm460, %v527, %v531
      %v534 = vshrl.u32 %v434, 16
      %v536 = vshll.u32 %v434, 16
      %v538 = vrot.slane %v536, 1
      %v539 = vor.u32 %v534, %v538
      %v541 = vshll.u32 %v458, 16
      %v543 = vrot.slane %v541, 1
      %v544 = vsel %vm460, %v539, %v543
      %v546 = vshrl.u32 %v435, 16
      %v548 = vshll.u32 %v435, 16
      %v550 = vrot.slane %v548, 1
      %v551 = vor.u32 %v546, %v550
      %v553 = vshll.u32 %v459, 16
      %v555 = vrot.slane %v553, 1
      %v556 = vsel %vm460, %v551, %v555
      %557 = vrot.lane.b32.xlu0 %v472, 72
      %v558 = vpop.permute.xlu0 %557
      %559 = vrot.lane.b32.xlu0 %v484, 72
      %v560 = vpop.permute.xlu0 %559
      %561 = vrot.lane.b32.xlu0 %v496, 72
      %v562 = vpop.permute.xlu0 %561
      %563 = vrot.lane.b32.xlu0 %v508, 72
      %v564 = vpop.permute.xlu0 %563
      %565 = vrot.lane.b32.xlu0 %v520, 72
      %v566 = vpop.permute.xlu0 %565
      %567 = vrot.lane.b32.xlu0 %v532, 72
      %v568 = vpop.permute.xlu0 %567
      %569 = vrot.lane.b32.xlu0 %v544, 72
      %v570 = vpop.permute.xlu0 %569
      %571 = vrot.lane.b32.xlu0 %v556, 72
      %v572 = vpop.permute.xlu0 %571
      %v581 = vunpack.c.l.b16 %v388
      %v582 = vunpack.c.l.b16 %v389
      %v583 = vunpack.c.l.b16 %v390
      %v584 = vunpack.c.l.b16 %v391
      %v585 = vunpack.c.l.b16 %v392
      %v586 = vunpack.c.l.b16 %v393
      %v587 = vunpack.c.l.b16 %v394
      %v588 = vunpack.c.l.b16 %v395
      %v589 = vpack.c.b16 %v413, %v581
      %v590 = vpack.c.b16 %v415, %v582
      %v591 = vpack.c.b16 %v417, %v583
      %v592 = vpack.c.b16 %v419, %v584
      %v593 = vpack.c.b16 %v421, %v585
      %v594 = vpack.c.b16 %v423, %v586
      %v595 = vpack.c.b16 %v425, %v587
      %v596 = vpack.c.b16 %v427, %v588
      %vm597 = vcmask 1046528
      %v598 = vrot.slane %v589, 1
      %v599 = vrot.slane %v452, 1
      %v600 = vsel %vm597, %v598, %v599
      %v601 = vrot.slane %v590, 1
      %v602 = vrot.slane %v453, 1
      %v603 = vsel %vm597, %v601, %v602
      %v604 = vrot.slane %v591, 1
      %v605 = vrot.slane %v454, 1
      %v606 = vsel %vm597, %v604, %v605
      %v607 = vrot.slane %v592, 1
      %v608 = vrot.slane %v455, 1
      %v609 = vsel %vm597, %v607, %v608
      %v610 = vrot.slane %v593, 1
      %v611 = vrot.slane %v456, 1
      %v612 = vsel %vm597, %v610, %v611
      %v613 = vrot.slane %v594, 1
      %v614 = vrot.slane %v457, 1
      %v615 = vsel %vm597, %v613, %v614
      %v616 = vrot.slane %v595, 1
      %v617 = vrot.slane %v458, 1
      %v618 = vsel %vm597, %v616, %v617
      %v619 = vrot.slane %v596, 1
      %v620 = vrot.slane %v459, 1
      %v621 = vsel %vm597, %v619, %v620
      %622 = vrot.lane.b32.xlu0 %v600, 16
      %v623 = vpop.permute.xlu0 %622
      %624 = vrot.lane.b32.xlu0 %v603, 16
      %v625 = vpop.permute.xlu0 %624
      %626 = vrot.lane.b32.xlu0 %v606, 16
      %v627 = vpop.permute.xlu0 %626
      %628 = vrot.lane.b32.xlu0 %v609, 16
      %v629 = vpop.permute.xlu0 %628
      %630 = vrot.lane.b32.xlu0 %v612, 16
      %v631 = vpop.permute.xlu0 %630
      %632 = vrot.lane.b32.xlu0 %v615, 16
      %v633 = vpop.permute.xlu0 %632
      %634 = vrot.lane.b32.xlu0 %v618, 16
      %v635 = vpop.permute.xlu0 %634
      %636 = vrot.lane.b32.xlu0 %v621, 16
      %v637 = vpop.permute.xlu0 %636
      %vm638 = vcmask 588800
      %v640 = vsel %vm638, %v428, %v558
      %v643 = vsel %vm638, %v429, %v560
      %v646 = vsel %vm638, %v430, %v562
      %v649 = vsel %vm638, %v431, %v564
      %v652 = vsel %vm638, %v432, %v566
      %v655 = vsel %vm638, %v433, %v568
      %v658 = vsel %vm638, %v434, %v570
      %v661 = vsel %vm638, %v435, %v572
      %vm663 = vcmask 130048
      %v665 = vsel %vm663, %v558, %v623
      %v667 = vsel %vm663, %v560, %v625
      %v669 = vsel %vm663, %v562, %v627
      %v671 = vsel %vm663, %v564, %v629
      %v673 = vsel %vm663, %v566, %v631
      %v675 = vsel %vm663, %v568, %v633
      %v677 = vsel %vm663, %v570, %v635
      %v679 = vsel %vm663, %v572, %v637
      %v680 = vld [vmem:[%s1] sm:$0xff]
      %v681 = vld [vmem:[%s1 + $0x8] sm:$0xff]
      %v682 = vld [vmem:[%s1 + $0x10] sm:$0xff]
      %v683 = vld [vmem:[%s1 + $0x18] sm:$0xff]
      %v684 = vld [vmem:[%s1 + $0x20] sm:$0xff]
      %v685 = vld [vmem:[%s1 + $0x28] sm:$0xff]
      %v686 = vld [vmem:[%s1 + $0x30] sm:$0xff]
      %v687 = vld [vmem:[%s1 + $0x38] sm:$0xff]
      %v688 = vld [vmem:[%s1 + $0x40] sm:$0xff]
      %v689 = vld [vmem:[%s1 + $0x48] sm:$0xff]
      %v690 = vld [vmem:[%s1 + $0x50] sm:$0xff]
      %v691 = vld [vmem:[%s1 + $0x58] sm:$0xff]
      %v692 = vld [vmem:[%s1 + $0x60] sm:$0xff]
      %v693 = vld [vmem:[%s1 + $0x68] sm:$0xff]
      %v694 = vld [vmem:[%s1 + $0x70] sm:$0xff]
      %v695 = vld [vmem:[%s1 + $0x78] sm:$0xff]
      %v696 = vld [vmem:[%s1 + $0x80] sm:$0xff]
      %v697 = vld [vmem:[%s1 + $0x88] sm:$0xff]
      %v698 = vld [vmem:[%s1 + $0x90] sm:$0xff]
      %v699 = vld [vmem:[%s1 + $0x98] sm:$0xff]
      %v700 = vld [vmem:[%s1 + $0xa0] sm:$0xff]
      %v701 = vld [vmem:[%s1 + $0xa8] sm:$0xff]
      %v702 = vld [vmem:[%s1 + $0xb0] sm:$0xff]
      %v703 = vld [vmem:[%s1 + $0xb8] sm:$0xff]
      %v704 = vld [vmem:[%s1 + $0xc0] sm:$0xff]
      %v705 = vld [vmem:[%s1 + $0xc8] sm:$0xff]
      %v706 = vld [vmem:[%s1 + $0xd0] sm:$0xff]
      %v707 = vld [vmem:[%s1 + $0xd8] sm:$0xff]
      %v708 = vld [vmem:[%s1 + $0xe0] sm:$0xff]
      %v709 = vld [vmem:[%s1 + $0xe8] sm:$0xff]
      %v710 = vld [vmem:[%s1 + $0xf0] sm:$0xff]
      %v711 = vld [vmem:[%s1 + $0xf8] sm:$0xff]
      %v712 = vld [vmem:[%s1 + $0x100] sm:$0xff]
      %v713 = vld [vmem:[%s1 + $0x108] sm:$0xff]
      %v714 = vld [vmem:[%s1 + $0x110] sm:$0xff]
      %v715 = vld [vmem:[%s1 + $0x118] sm:$0xff]
      %v716 = vld [vmem:[%s1 + $0x120] sm:$0xff]
      %v717 = vld [vmem:[%s1 + $0x128] sm:$0xff]
      %v718 = vld [vmem:[%s1 + $0x130] sm:$0xff]
      %v719 = vld [vmem:[%s1 + $0x138] sm:$0xff]
      %v720 = vld [vmem:[%s1 + $0x140] sm:$0xff]
      %v721 = vld [vmem:[%s1 + $0x148] sm:$0xff]
      %v722 = vld [vmem:[%s1 + $0x150] sm:$0xff]
      %v723 = vld [vmem:[%s1 + $0x158] sm:$0xff]
      %v724 = vld [vmem:[%s1 + $0x160] sm:$0xff]
      %v725 = vld [vmem:[%s1 + $0x168] sm:$0xff]
      %v726 = vld [vmem:[%s1 + $0x170] sm:$0xff]
      %v727 = vld [vmem:[%s1 + $0x178] sm:$0xff]
      %v728 = vld [vmem:[%s1 + $0x180] sm:$0xff]
      %v729 = vld [vmem:[%s1 + $0x188] sm:$0xff]
      %v730 = vld [vmem:[%s1 + $0x190] sm:$0xff]
      %v731 = vld [vmem:[%s1 + $0x198] sm:$0xff]
      %v732 = vld [vmem:[%s1 + $0x1a0] sm:$0xff]
      %v733 = vld [vmem:[%s1 + $0x1a8] sm:$0xff]
      %v734 = vld [vmem:[%s2] sm:$0xf]
      %v736 = vlaneseq
      %v737 = vshrl.u32 %v736, 7
      %v738 = vsub.s32 0, %v737
      %v739 = vrot.slane %v734, %v738
      %v740 = vlaneseq
      %v741 = vshrl.u32 %v740, 7
      %v742 = vsub.s32 1, %v741
      %v743 = vrot.slane %v734, %v742
      %v744 = vlaneseq
      %v745 = vshrl.u32 %v744, 7
      %v746 = vsub.s32 2, %v745
      %v747 = vrot.slane %v734, %v746
      %v748 = vlaneseq
      %v749 = vshrl.u32 %v748, 7
      %v750 = vsub.s32 3, %v749
      %v751 = vrot.slane %v734, %v750
      %v810 = vunpack.c.l.b16 %v680
      %v811 = vunpack.c.h.b16 %v680
      %v812 = vunpack.c.l.b16 %v681
      %v813 = vunpack.c.h.b16 %v681
      %v814 = vunpack.c.l.b16 %v682
      %v815 = vunpack.c.h.b16 %v682
      %v816 = vunpack.c.l.b16 %v683
      %v817 = vunpack.c.h.b16 %v683
      %v818 = vunpack.c.l.b16 %v684
      %v819 = vunpack.c.h.b16 %v684
      %v820 = vunpack.c.l.b16 %v685
      %v821 = vunpack.c.h.b16 %v685
      %v822 = vunpack.c.l.b16 %v686
      %v823 = vunpack.c.h.b16 %v686
      %v824 = vunpack.c.l.b16 %v687
      %v825 = vunpack.c.h.b16 %v687
      %v826 = vunpack.c.l.b16 %v688
      %v827 = vunpack.c.h.b16 %v688
      %v828 = vunpack.c.l.b16 %v689
      %v829 = vunpack.c.h.b16 %v689
      %v830 = vunpack.c.l.b16 %v690
      %v831 = vunpack.c.h.b16 %v690
      %v832 = vunpack.c.l.b16 %v691
      %v833 = vunpack.c.h.b16 %v691
      %v834 = vunpack.c.l.b16 %v692
      %v835 = vunpack.c.h.b16 %v692
      %v836 = vunpack.c.l.b16 %v693
      %v837 = vunpack.c.h.b16 %v693
      %v838 = vunpack.c.l.b16 %v694
      %v839 = vunpack.c.h.b16 %v694
      %v840 = vunpack.c.l.b16 %v695
      %v841 = vunpack.c.h.b16 %v695
      %v842 = vunpack.c.l.b16 %v696
      %v843 = vunpack.c.h.b16 %v696
      %v844 = vunpack.c.l.b16 %v697
      %v845 = vunpack.c.h.b16 %v697
      %v846 = vunpack.c.l.b16 %v698
      %v847 = vunpack.c.h.b16 %v698
      %v848 = vunpack.c.l.b16 %v699
      %v849 = vunpack.c.h.b16 %v699
      %v850 = vunpack.c.l.b16 %v700
      %v851 = vunpack.c.h.b16 %v700
      %v852 = vunpack.c.l.b16 %v701
      %v853 = vunpack.c.h.b16 %v701
      %v854 = vunpack.c.l.b16 %v702
      %v855 = vunpack.c.h.b16 %v702
      %v856 = vunpack.c.l.b16 %v703
      %v857 = vunpack.c.h.b16 %v703
      %v858 = vunpack.c.l.b16 %v704
      %v859 = vunpack.c.h.b16 %v704
      %v860 = vunpack.c.l.b16 %v705
      %v861 = vunpack.c.h.b16 %v705
      %v862 = vunpack.c.l.b16 %v706
      %v863 = vunpack.c.h.b16 %v706
      %v864 = vunpack.c.l.b16 %v707
      %v865 = vunpack.c.h.b16 %v707
      %v866 = vunpack.c.l.b16 %v708
      %v867 = vunpack.c.h.b16 %v708
      %v868 = vunpack.c.l.b16 %v709
      %v869 = vunpack.c.h.b16 %v709
      %v870 = vunpack.c.l.b16 %v710
      %v871 = vunpack.c.h.b16 %v710
      %v872 = vunpack.c.l.b16 %v711
      %v873 = vunpack.c.h.b16 %v711
      %v874 = vunpack.c.l.b16 %v712
      %v875 = vunpack.c.h.b16 %v712
      %v876 = vunpack.c.l.b16 %v713
      %v877 = vunpack.c.h.b16 %v713
      %v878 = vunpack.c.l.b16 %v714
      %v879 = vunpack.c.h.b16 %v714
      %v880 = vunpack.c.l.b16 %v715
      %v881 = vunpack.c.h.b16 %v715
      %v882 = vunpack.c.l.b16 %v716
      %v883 = vunpack.c.h.b16 %v716
      %v884 = vunpack.c.l.b16 %v717
      %v885 = vunpack.c.h.b16 %v717
      %v886 = vunpack.c.l.b16 %v718
      %v887 = vunpack.c.h.b16 %v718
      %v888 = vunpack.c.l.b16 %v719
      %v889 = vunpack.c.h.b16 %v719
      %v890 = vunpack.c.l.b16 %v720
      %v891 = vunpack.c.h.b16 %v720
      %v892 = vunpack.c.l.b16 %v721
      %v893 = vunpack.c.h.b16 %v721
      %v894 = vunpack.c.l.b16 %v722
      %v895 = vunpack.c.h.b16 %v722
      %v896 = vunpack.c.l.b16 %v723
      %v897 = vunpack.c.h.b16 %v723
      %v898 = vunpack.c.l.b16 %v724
      %v899 = vunpack.c.h.b16 %v724
      %v900 = vunpack.c.l.b16 %v725
      %v901 = vunpack.c.h.b16 %v725
      %v902 = vunpack.c.l.b16 %v726
      %v903 = vunpack.c.h.b16 %v726
      %v904 = vunpack.c.l.b16 %v727
      %v905 = vunpack.c.h.b16 %v727
      %v906 = vunpack.c.l.b16 %v728
      %v907 = vunpack.c.h.b16 %v728
      %v908 = vunpack.c.l.b16 %v729
      %v909 = vunpack.c.h.b16 %v729
      %v910 = vunpack.c.l.b16 %v730
      %v911 = vunpack.c.h.b16 %v730
      %v912 = vunpack.c.l.b16 %v731
      %v913 = vunpack.c.h.b16 %v731
      %v914 = vunpack.c.l.b16 %v732
      %v915 = vunpack.c.h.b16 %v732
      %v916 = vunpack.c.l.b16 %v733
      %v917 = vunpack.c.h.b16 %v733
      %v918 = vpack.c.b16 %v814, %v810
      %v919 = vpack.c.b16 %v815, %v811
      %v920 = vpack.c.b16 %v816, %v812
      %v921 = vpack.c.b16 %v817, %v813
      %v922 = vpack.c.b16 %v822, %v818
      %v923 = vpack.c.b16 %v823, %v819
      %v924 = vpack.c.b16 %v824, %v820
      %v925 = vpack.c.b16 %v825, %v821
      %v926 = vpack.c.b16 %v830, %v826
      %v927 = vpack.c.b16 %v831, %v827
      %v928 = vpack.c.b16 %v832, %v828
      %v929 = vpack.c.b16 %v833, %v829
      %v930 = vpack.c.b16 %v838, %v834
      %v931 = vpack.c.b16 %v839, %v835
      %v932 = vpack.c.b16 %v840, %v836
      %v933 = vpack.c.b16 %v841, %v837
      %v934 = vpack.c.b16 %v846, %v842
      %v935 = vpack.c.b16 %v847, %v843
      %v936 = vpack.c.b16 %v848, %v844
      %v937 = vpack.c.b16 %v849, %v845
      %v938 = vpack.c.b16 %v854, %v850
      %v939 = vpack.c.b16 %v855, %v851
      %v940 = vpack.c.b16 %v856, %v852
      %v941 = vpack.c.b16 %v857, %v853
      %v942 = vpack.c.b16 %v862, %v858
      %v943 = vpack.c.b16 %v863, %v859
      %v944 = vpack.c.b16 %v864, %v860
      %v945 = vpack.c.b16 %v865, %v861
      %v946 = vpack.c.b16 %v870, %v866
      %v947 = vpack.c.b16 %v871, %v867
      %v948 = vpack.c.b16 %v872, %v868
      %v949 = vpack.c.b16 %v873, %v869
      %v950 = vpack.c.b16 %v878, %v874
      %v951 = vpack.c.b16 %v879, %v875
      %v952 = vpack.c.b16 %v880, %v876
      %v953 = vpack.c.b16 %v881, %v877
      %v954 = vpack.c.b16 %v886, %v882
      %v955 = vpack.c.b16 %v887, %v883
      %v956 = vpack.c.b16 %v888, %v884
      %v957 = vpack.c.b16 %v889, %v885
      %v958 = vpack.c.b16 %v894, %v890
      %v959 = vpack.c.b16 %v895, %v891
      %v960 = vpack.c.b16 %v896, %v892
      %v961 = vpack.c.b16 %v897, %v893
      %v962 = vpack.c.b16 %v902, %v898
      %v963 = vpack.c.b16 %v903, %v899
      %v964 = vpack.c.b16 %v904, %v900
      %v965 = vpack.c.b16 %v905, %v901
      %v966 = vpack.c.b16 %v910, %v906
      %v967 = vpack.c.b16 %v911, %v907
      %v968 = vpack.c.b16 %v912, %v908
      %v969 = vpack.c.b16 %v913, %v909
      %v970 = vpack.c.b16 %v914, %v914
      %v971 = vpack.c.b16 %v915, %v915
      %v972 = vpack.c.b16 %v916, %v916
      %v973 = vpack.c.b16 %v917, %v917
      %vm1026 = vcmask 719872
      %v1027 = vsel %vm1026, %v665, 0
      %v1029 = vsel %vm1026, %v667, 0
      %v1031 = vsel %vm1026, %v669, 0
      %v1033 = vsel %vm1026, %v671, 0
      %v1035 = vsel %vm1026, %v673, 0
      %v1037 = vsel %vm1026, %v675, 0
      %v1039 = vsel %vm1026, %v677, 0
      %v1041 = vsel %vm1026, %v679, 0
      %vm1043 = vcmask 1043456
      %v1045 = vsel %vm1043, %v970, 0
      %v1048 = vsel %vm1043, %v971, 0
      %v1051 = vsel %vm1043, %v972, 0
      %v1054 = vsel %vm1043, %v973, 0
      %1056 = vmatprep.subr.bf16.mxu0 %v919
      %1057 = vmatpush1.bf16.msra.mxu0 %v918
      %1058 = vmatprep.subr.bf16.mxu0 %v923
      %1059 = vmatpush1.bf16.msra.mxu0 %v922
      %1060 = vmatprep.subr.bf16.mxu0 %v927
      %1061 = vmatpush1.bf16.msra.mxu0 %v926
      %1062 = vmatprep.subr.bf16.mxu0 %v931
      %1063 = vmatpush1.bf16.msra.mxu0 %v930
      %1064 = vmatprep.subr.bf16.mxu0 %v935
      %1065 = vmatpush1.bf16.msra.mxu0 %v934
      %1066 = vmatprep.subr.bf16.mxu0 %v939
      %1067 = vmatpush1.bf16.msra.mxu0 %v938
      %1068 = vmatprep.subr.bf16.mxu0 %v943
      %1069 = vmatpush1.bf16.msra.mxu0 %v942
      %1070 = vmatprep.subr.bf16.mxu0 %v947
      %1071 = vmatpush1.bf16.msra.mxu0 %v946
      %1072 = vmatprep.subr.bf16.mxu0 %v951
      %1073 = vmatpush1.bf16.msra.mxu0 %v950
      %1074 = vmatprep.subr.bf16.mxu0 %v955
      %1075 = vmatpush1.bf16.msra.mxu0 %v954
      %1076 = vmatprep.subr.bf16.mxu0 %v959
      %1077 = vmatpush1.bf16.msra.mxu0 %v958
      %1078 = vmatprep.subr.bf16.mxu0 %v963
      %1079 = vmatpush1.bf16.msra.mxu0 %v962
      %1080 = vmatprep.subr.bf16.mxu0 %v967
      %1081 = vmatpush1.bf16.msra.mxu0 %v966
      %1082 = vmatprep.subr.bf16.mxu0 %v1048
      %1083 = vmatpush1.bf16.msra.mxu0 %v1045
      %1084 = vmatprep.subr.bf16.mxu0 0
      %1085 = vmatpush1.bf16.msra.mxu0 0
      %1086 = vmatprep.subr.bf16.mxu0 0
      %1087 = vmatpush1.bf16.msra.mxu0 0
      %1088 = vmatprep.mubr.bf16.mxu0 %v1027
      %1089 = vmatmul.mubr.bf16.gmra.mrb[0].mxu0 %v640
      %v1090 = vpop.f32.mrb[0].mxu0
      %v1091 = vadd.f32 %v739, %v1090
      %v1092 = vpop.f32.mrb[0].mxu0
      %v1093 = vadd.f32 %v743, %v1092
      %v1094 = vpop.f32.mrb[0].mxu0
      %v1095 = vadd.f32 %v739, %v1094
      %v1096 = vpop.f32.mrb[0].mxu0
      %v1097 = vadd.f32 %v743, %v1096
      %1098 = vmatprep.mubr.bf16.mxu0 %v1029
      %1099 = vmatmul.mubr.bf16.gmra.mrb[0].mxu0 %v643
      %v1100 = vpop.f32.mrb[0].mxu0
      %v1101 = vadd.f32 %v739, %v1100
      %v1102 = vpop.f32.mrb[0].mxu0
      %v1103 = vadd.f32 %v743, %v1102
      %v1104 = vpop.f32.mrb[0].mxu0
      %v1105 = vadd.f32 %v739, %v1104
      %v1106 = vpop.f32.mrb[0].mxu0
      %v1107 = vadd.f32 %v743, %v1106
      %1108 = vmatprep.mubr.bf16.mxu0 %v1031
      %1109 = vmatmul.mubr.bf16.gmra.mrb[0].mxu0 %v646
      %v1110 = vpop.f32.mrb[0].mxu0
      %v1111 = vadd.f32 %v739, %v1110
      %v1112 = vpop.f32.mrb[0].mxu0
      %v1113 = vadd.f32 %v743, %v1112
      %v1114 = vpop.f32.mrb[0].mxu0
      %v1115 = vadd.f32 %v739, %v1114
      %v1116 = vpop.f32.mrb[0].mxu0
      %v1117 = vadd.f32 %v743, %v1116
      %1118 = vmatprep.mubr.bf16.mxu0 %v1033
      %1119 = vmatmul.mubr.bf16.gmra.mrb[0].mxu0 %v649
      %v1120 = vpop.f32.mrb[0].mxu0
      %v1121 = vadd.f32 %v739, %v1120
      %v1122 = vpop.f32.mrb[0].mxu0
      %v1123 = vadd.f32 %v743, %v1122
      %v1124 = vpop.f32.mrb[0].mxu0
      %v1125 = vadd.f32 %v739, %v1124
      %v1126 = vpop.f32.mrb[0].mxu0
      %v1127 = vadd.f32 %v743, %v1126
      %1128 = vmatprep.mubr.bf16.mxu0 %v1035
      %1129 = vmatmul.mubr.bf16.gmra.mrb[0].mxu0 %v652
      %v1130 = vpop.f32.mrb[0].mxu0
      %v1131 = vadd.f32 %v739, %v1130
      %v1132 = vpop.f32.mrb[0].mxu0
      %v1133 = vadd.f32 %v743, %v1132
      %v1134 = vpop.f32.mrb[0].mxu0
      %v1135 = vadd.f32 %v739, %v1134
      %v1136 = vpop.f32.mrb[0].mxu0
      %v1137 = vadd.f32 %v743, %v1136
      %1138 = vmatprep.mubr.bf16.mxu0 %v1037
      %1139 = vmatmul.mubr.bf16.gmra.mrb[0].mxu0 %v655
      %v1140 = vpop.f32.mrb[0].mxu0
      %v1141 = vadd.f32 %v739, %v1140
      %v1142 = vpop.f32.mrb[0].mxu0
      %v1143 = vadd.f32 %v743, %v1142
      %v1144 = vpop.f32.mrb[0].mxu0
      %v1145 = vadd.f32 %v739, %v1144
      %v1146 = vpop.f32.mrb[0].mxu0
      %v1147 = vadd.f32 %v743, %v1146
      %1148 = vmatprep.mubr.bf16.mxu0 %v1039
      %1149 = vmatmul.mubr.bf16.gmra.mrb[0].mxu0 %v658
      %v1150 = vpop.f32.mrb[0].mxu0
      %v1151 = vadd.f32 %v739, %v1150
      %v1152 = vpop.f32.mrb[0].mxu0
      %v1153 = vadd.f32 %v743, %v1152
      %v1154 = vpop.f32.mrb[0].mxu0
      %v1155 = vadd.f32 %v739, %v1154
      %v1156 = vpop.f32.mrb[0].mxu0
      %v1157 = vadd.f32 %v743, %v1156
      %1158 = vmatprep.mubr.bf16.mxu0 %v1041
      %1159 = vmatmul.mubr.bf16.gmra.mrb[0].mxu0 %v661
      %v1160 = vpop.f32.mrb[0].mxu0
      %v1161 = vadd.f32 %v739, %v1160
      %v1162 = vpop.f32.mrb[0].mxu0
      %v1163 = vadd.f32 %v743, %v1162
      %v1164 = vpop.f32.mrb[0].mxu0
      %v1165 = vadd.f32 %v739, %v1164
      %v1166 = vpop.f32.mrb[0].mxu0
      %v1167 = vadd.f32 %v743, %v1166
      %1168 = vdwg.mxu0
      %1169 = vmatprep.subr.bf16.mxu0 %v921
      %1170 = vmatpush1.bf16.msra.mxu0 %v920
      %1171 = vmatprep.subr.bf16.mxu0 %v925
      %1172 = vmatpush1.bf16.msra.mxu0 %v924
      %1173 = vmatprep.subr.bf16.mxu0 %v929
      %1174 = vmatpush1.bf16.msra.mxu0 %v928
      %1175 = vmatprep.subr.bf16.mxu0 %v933
      %1176 = vmatpush1.bf16.msra.mxu0 %v932
      %1177 = vmatprep.subr.bf16.mxu0 %v937
      %1178 = vmatpush1.bf16.msra.mxu0 %v936
      %1179 = vmatprep.subr.bf16.mxu0 %v941
      %1180 = vmatpush1.bf16.msra.mxu0 %v940
      %1181 = vmatprep.subr.bf16.mxu0 %v945
      %1182 = vmatpush1.bf16.msra.mxu0 %v944
      %1183 = vmatprep.subr.bf16.mxu0 %v949
      %1184 = vmatpush1.bf16.msra.mxu0 %v948
      %1185 = vmatprep.subr.bf16.mxu0 %v953
      %1186 = vmatpush1.bf16.msra.mxu0 %v952
      %1187 = vmatprep.subr.bf16.mxu0 %v957
      %1188 = vmatpush1.bf16.msra.mxu0 %v956
      %1189 = vmatprep.subr.bf16.mxu0 %v961
      %1190 = vmatpush1.bf16.msra.mxu0 %v960
      %1191 = vmatprep.subr.bf16.mxu0 %v965
      %1192 = vmatpush1.bf16.msra.mxu0 %v964
      %1193 = vmatprep.subr.bf16.mxu0 %v969
      %1194 = vmatpush1.bf16.msra.mxu0 %v968
      %1195 = vmatprep.subr.bf16.mxu0 %v1054
      %1196 = vmatpush1.bf16.msra.mxu0 %v1051
      %1197 = vmatprep.subr.bf16.mxu0 0
      %1198 = vmatpush1.bf16.msra.mxu0 0
      %1199 = vmatprep.subr.bf16.mxu0 0
      %1200 = vmatpush1.bf16.msra.mxu0 0
      %1201 = vmatprep.mubr.bf16.mxu0 %v1027
      %1202 = vmatmul.mubr.bf16.gmra.mrb[0].mxu0 %v640
      %v1203 = vpop.f32.mrb[0].mxu0
      %v1204 = vadd.f32 %v747, %v1203
      %v1205 = vpop.f32.mrb[0].mxu0
      %v1206 = vadd.f32 %v751, %v1205
      %v1207 = vpop.f32.mrb[0].mxu0
      %v1208 = vadd.f32 %v747, %v1207
      %v1209 = vpop.f32.mrb[0].mxu0
      %v1210 = vadd.f32 %v751, %v1209
      %1211 = vmatprep.mubr.bf16.mxu0 %v1029
      %1212 = vmatmul.mubr.bf16.gmra.mrb[0].mxu0 %v643
      %v1213 = vpop.f32.mrb[0].mxu0
      %v1214 = vadd.f32 %v747, %v1213
      %v1215 = vpop.f32.mrb[0].mxu0
      %v1216 = vadd.f32 %v751, %v1215
      %v1217 = vpop.f32.mrb[0].mxu0
      %v1218 = vadd.f32 %v747, %v1217
      %v1219 = vpop.f32.mrb[0].mxu0
      %v1220 = vadd.f32 %v751, %v1219
      %1221 = vmatprep.mubr.bf16.mxu0 %v1031
      %1222 = vmatmul.mubr.bf16.gmra.mrb[0].mxu0 %v646
      %v1223 = vpop.f32.mrb[0].mxu0
      %v1224 = vadd.f32 %v747, %v1223
      %v1225 = vpop.f32.mrb[0].mxu0
      %v1226 = vadd.f32 %v751, %v1225
      %v1227 = vpop.f32.mrb[0].mxu0
      %v1228 = vadd.f32 %v747, %v1227
      %v1229 = vpop.f32.mrb[0].mxu0
      %v1230 = vadd.f32 %v751, %v1229
      %1231 = vmatprep.mubr.bf16.mxu0 %v1033
      %1232 = vmatmul.mubr.bf16.gmra.mrb[0].mxu0 %v649
      %v1233 = vpop.f32.mrb[0].mxu0
      %v1234 = vadd.f32 %v747, %v1233
      %v1235 = vpop.f32.mrb[0].mxu0
      %v1236 = vadd.f32 %v751, %v1235
      %v1237 = vpop.f32.mrb[0].mxu0
      %v1238 = vadd.f32 %v747, %v1237
      %v1239 = vpop.f32.mrb[0].mxu0
      %v1240 = vadd.f32 %v751, %v1239
      %1241 = vmatprep.mubr.bf16.mxu0 %v1035
      %1242 = vmatmul.mubr.bf16.gmra.mrb[0].mxu0 %v652
      %v1243 = vpop.f32.mrb[0].mxu0
      %v1244 = vadd.f32 %v747, %v1243
      %v1245 = vpop.f32.mrb[0].mxu0
      %v1246 = vadd.f32 %v751, %v1245
      %v1247 = vpop.f32.mrb[0].mxu0
      %v1248 = vadd.f32 %v747, %v1247
      %v1249 = vpop.f32.mrb[0].mxu0
      %v1250 = vadd.f32 %v751, %v1249
      %1251 = vmatprep.mubr.bf16.mxu0 %v1037
      %1252 = vmatmul.mubr.bf16.gmra.mrb[0].mxu0 %v655
      %v1253 = vpop.f32.mrb[0].mxu0
      %v1254 = vadd.f32 %v747, %v1253
      %v1255 = vpop.f32.mrb[0].mxu0
      %v1256 = vadd.f32 %v751, %v1255
      %v1257 = vpop.f32.mrb[0].mxu0
      %v1258 = vadd.f32 %v747, %v1257
      %v1259 = vpop.f32.mrb[0].mxu0
      %v1260 = vadd.f32 %v751, %v1259
      %1261 = vmatprep.mubr.bf16.mxu0 %v1039
      %1262 = vmatmul.mubr.bf16.gmra.mrb[0].mxu0 %v658
      %v1263 = vpop.f32.mrb[0].mxu0
      %v1264 = vadd.f32 %v747, %v1263
      %v1265 = vpop.f32.mrb[0].mxu0
      %v1266 = vadd.f32 %v751, %v1265
      %v1267 = vpop.f32.mrb[0].mxu0
      %v1268 = vadd.f32 %v747, %v1267
      %v1269 = vpop.f32.mrb[0].mxu0
      %v1270 = vadd.f32 %v751, %v1269
      %1271 = vmatprep.mubr.bf16.mxu0 %v1041
      %1272 = vmatmul.mubr.bf16.gmra.mrb[0].mxu0 %v661
      %v1273 = vpop.f32.mrb[0].mxu0
      %v1274 = vadd.f32 %v747, %v1273
      %v1275 = vpop.f32.mrb[0].mxu0
      %v1276 = vadd.f32 %v751, %v1275
      %v1277 = vpop.f32.mrb[0].mxu0
      %v1278 = vadd.f32 %v747, %v1277
      %v1279 = vpop.f32.mrb[0].mxu0
      %v1280 = vadd.f32 %v751, %v1279
      %1281 = vdwg.mxu0
      %v1282 = vmax.f32 %v1091, 0.0
      %v1283 = vmax.f32 %v1093, 0.0
      %v1284 = vmax.f32 %v1204, 0.0
      %v1285 = vmax.f32 %v1206, 0.0
      %v1286 = vmax.f32 %v1095, 0.0
      %v1287 = vmax.f32 %v1097, 0.0
      %v1288 = vmax.f32 %v1208, 0.0
      %v1289 = vmax.f32 %v1210, 0.0
      %v1290 = vmax.f32 %v1101, 0.0
      %v1291 = vmax.f32 %v1103, 0.0
      %v1292 = vmax.f32 %v1214, 0.0
      %v1293 = vmax.f32 %v1216, 0.0
      %v1294 = vmax.f32 %v1105, 0.0
      %v1295 = vmax.f32 %v1107, 0.0
      %v1296 = vmax.f32 %v1218, 0.0
      %v1297 = vmax.f32 %v1220, 0.0
      %v1298 = vmax.f32 %v1111, 0.0
      %v1299 = vmax.f32 %v1113, 0.0
      %v1300 = vmax.f32 %v1224, 0.0
      %v1301 = vmax.f32 %v1226, 0.0
      %v1302 = vmax.f32 %v1115, 0.0
      %v1303 = vmax.f32 %v1117, 0.0
      %v1304 = vmax.f32 %v1228, 0.0
      %v1305 = vmax.f32 %v1230, 0.0
      %v1306 = vmax.f32 %v1121, 0.0
      %v1307 = vmax.f32 %v1123, 0.0
      %v1308 = vmax.f32 %v1234, 0.0
      %v1309 = vmax.f32 %v1236, 0.0
      %v1310 = vmax.f32 %v1125, 0.0
      %v1311 = vmax.f32 %v1127, 0.0
      %v1312 = vmax.f32 %v1238, 0.0
      %v1313 = vmax.f32 %v1240, 0.0
      %v1314 = vmax.f32 %v1131, 0.0
      %v1315 = vmax.f32 %v1133, 0.0
      %v1316 = vmax.f32 %v1244, 0.0
      %v1317 = vmax.f32 %v1246, 0.0
      %v1318 = vmax.f32 %v1135, 0.0
      %v1319 = vmax.f32 %v1137, 0.0
      %v1320 = vmax.f32 %v1248, 0.0
      %v1321 = vmax.f32 %v1250, 0.0
      %v1322 = vmax.f32 %v1141, 0.0
      %v1323 = vmax.f32 %v1143, 0.0
      %v1324 = vmax.f32 %v1254, 0.0
      %v1325 = vmax.f32 %v1256, 0.0
      %v1326 = vmax.f32 %v1145, 0.0
      %v1327 = vmax.f32 %v1147, 0.0
      %v1328 = vmax.f32 %v1258, 0.0
      %v1329 = vmax.f32 %v1260, 0.0
      %v1330 = vmax.f32 %v1151, 0.0
      %v1331 = vmax.f32 %v1153, 0.0
      %v1332 = vmax.f32 %v1264, 0.0
      %v1333 = vmax.f32 %v1266, 0.0
      %v1334 = vmax.f32 %v1155, 0.0
      %v1335 = vmax.f32 %v1157, 0.0
      %v1336 = vmax.f32 %v1268, 0.0
      %v1337 = vmax.f32 %v1270, 0.0
      %v1338 = vmax.f32 %v1161, 0.0
      %v1339 = vmax.f32 %v1163, 0.0
      %v1340 = vmax.f32 %v1274, 0.0
      %v1341 = vmax.f32 %v1276, 0.0
      %v1342 = vmax.f32 %v1165, 0.0
      %v1343 = vmax.f32 %v1167, 0.0
      %v1344 = vmax.f32 %v1278, 0.0
      %v1345 = vmax.f32 %v1280, 0.0
      %v1346 = vadd.f32 %v1282, %v1286
      %v1347 = vrot.slane %v1346, 4
      %v1348 = vadd.f32 %v1346, %v1347
      %v1349 = vrot.slane %v1348, 2
      %v1350 = vadd.f32 %v1348, %v1349
      %v1351 = vrot.slane %v1350, 1
      %v1352 = vadd.f32 %v1350, %v1351
      %v1353 = vadd.f32 %v1283, %v1287
      %v1354 = vrot.slane %v1353, 4
      %v1355 = vadd.f32 %v1353, %v1354
      %v1356 = vrot.slane %v1355, 2
      %v1357 = vadd.f32 %v1355, %v1356
      %v1358 = vrot.slane %v1357, 1
      %v1359 = vadd.f32 %v1357, %v1358
      %v1360 = vadd.f32 %v1284, %v1288
      %v1361 = vrot.slane %v1360, 4
      %v1362 = vadd.f32 %v1360, %v1361
      %v1363 = vrot.slane %v1362, 2
      %v1364 = vadd.f32 %v1362, %v1363
      %v1365 = vrot.slane %v1364, 1
      %v1366 = vadd.f32 %v1364, %v1365
      %v1367 = vadd.f32 %v1285, %v1289
      %v1368 = vrot.slane %v1367, 4
      %v1369 = vadd.f32 %v1367, %v1368
      %v1370 = vrot.slane %v1369, 2
      %v1371 = vadd.f32 %v1369, %v1370
      %v1372 = vrot.slane %v1371, 1
      %v1373 = vadd.f32 %v1371, %v1372
      %v1374 = vadd.f32 %v1290, %v1294
      %v1375 = vrot.slane %v1374, 4
      %v1376 = vadd.f32 %v1374, %v1375
      %v1377 = vrot.slane %v1376, 2
      %v1378 = vadd.f32 %v1376, %v1377
      %v1379 = vrot.slane %v1378, 1
      %v1380 = vadd.f32 %v1378, %v1379
      %v1381 = vadd.f32 %v1291, %v1295
      %v1382 = vrot.slane %v1381, 4
      %v1383 = vadd.f32 %v1381, %v1382
      %v1384 = vrot.slane %v1383, 2
      %v1385 = vadd.f32 %v1383, %v1384
      %v1386 = vrot.slane %v1385, 1
      %v1387 = vadd.f32 %v1385, %v1386
      %v1388 = vadd.f32 %v1292, %v1296
      %v1389 = vrot.slane %v1388, 4
      %v1390 = vadd.f32 %v1388, %v1389
      %v1391 = vrot.slane %v1390, 2
      %v1392 = vadd.f32 %v1390, %v1391
      %v1393 = vrot.slane %v1392, 1
      %v1394 = vadd.f32 %v1392, %v1393
      %v1395 = vadd.f32 %v1293, %v1297
      %v1396 = vrot.slane %v1395, 4
      %v1397 = vadd.f32 %v1395, %v1396
      %v1398 = vrot.slane %v1397, 2
      %v1399 = vadd.f32 %v1397, %v1398
      %v1400 = vrot.slane %v1399, 1
      %v1401 = vadd.f32 %v1399, %v1400
      %v1402 = vadd.f32 %v1298, %v1302
      %v1403 = vrot.slane %v1402, 4
      %v1404 = vadd.f32 %v1402, %v1403
      %v1405 = vrot.slane %v1404, 2
      %v1406 = vadd.f32 %v1404, %v1405
      %v1407 = vrot.slane %v1406, 1
      %v1408 = vadd.f32 %v1406, %v1407
      %v1409 = vadd.f32 %v1299, %v1303
      %v1410 = vrot.slane %v1409, 4
      %v1411 = vadd.f32 %v1409, %v1410
      %v1412 = vrot.slane %v1411, 2
      %v1413 = vadd.f32 %v1411, %v1412
      %v1414 = vrot.slane %v1413, 1
      %v1415 = vadd.f32 %v1413, %v1414
      %v1416 = vadd.f32 %v1300, %v1304
      %v1417 = vrot.slane %v1416, 4
      %v1418 = vadd.f32 %v1416, %v1417
      %v1419 = vrot.slane %v1418, 2
      %v1420 = vadd.f32 %v1418, %v1419
      %v1421 = vrot.slane %v1420, 1
      %v1422 = vadd.f32 %v1420, %v1421
      %v1423 = vadd.f32 %v1301, %v1305
      %v1424 = vrot.slane %v1423, 4
      %v1425 = vadd.f32 %v1423, %v1424
      %v1426 = vrot.slane %v1425, 2
      %v1427 = vadd.f32 %v1425, %v1426
      %v1428 = vrot.slane %v1427, 1
      %v1429 = vadd.f32 %v1427, %v1428
      %v1430 = vadd.f32 %v1306, %v1310
      %v1431 = vrot.slane %v1430, 4
      %v1432 = vadd.f32 %v1430, %v1431
      %v1433 = vrot.slane %v1432, 2
      %v1434 = vadd.f32 %v1432, %v1433
      %v1435 = vrot.slane %v1434, 1
      %v1436 = vadd.f32 %v1434, %v1435
      %v1437 = vadd.f32 %v1307, %v1311
      %v1438 = vrot.slane %v1437, 4
      %v1439 = vadd.f32 %v1437, %v1438
      %v1440 = vrot.slane %v1439, 2
      %v1441 = vadd.f32 %v1439, %v1440
      %v1442 = vrot.slane %v1441, 1
      %v1443 = vadd.f32 %v1441, %v1442
      %v1444 = vadd.f32 %v1308, %v1312
      %v1445 = vrot.slane %v1444, 4
      %v1446 = vadd.f32 %v1444, %v1445
      %v1447 = vrot.slane %v1446, 2
      %v1448 = vadd.f32 %v1446, %v1447
      %v1449 = vrot.slane %v1448, 1
      %v1450 = vadd.f32 %v1448, %v1449
      %v1451 = vadd.f32 %v1309, %v1313
      %v1452 = vrot.slane %v1451, 4
      %v1453 = vadd.f32 %v1451, %v1452
      %v1454 = vrot.slane %v1453, 2
      %v1455 = vadd.f32 %v1453, %v1454
      %v1456 = vrot.slane %v1455, 1
      %v1457 = vadd.f32 %v1455, %v1456
      %v1458 = vadd.f32 %v1314, %v1318
      %v1459 = vrot.slane %v1458, 4
      %v1460 = vadd.f32 %v1458, %v1459
      %v1461 = vrot.slane %v1460, 2
      %v1462 = vadd.f32 %v1460, %v1461
      %v1463 = vrot.slane %v1462, 1
      %v1464 = vadd.f32 %v1462, %v1463
      %v1465 = vadd.f32 %v1315, %v1319
      %v1466 = vrot.slane %v1465, 4
      %v1467 = vadd.f32 %v1465, %v1466
      %v1468 = vrot.slane %v1467, 2
      %v1469 = vadd.f32 %v1467, %v1468
      %v1470 = vrot.slane %v1469, 1
      %v1471 = vadd.f32 %v1469, %v1470
      %v1472 = vadd.f32 %v1316, %v1320
      %v1473 = vrot.slane %v1472, 4
      %v1474 = vadd.f32 %v1472, %v1473
      %v1475 = vrot.slane %v1474, 2
      %v1476 = vadd.f32 %v1474, %v1475
      %v1477 = vrot.slane %v1476, 1
      %v1478 = vadd.f32 %v1476, %v1477
      %v1479 = vadd.f32 %v1317, %v1321
      %v1480 = vrot.slane %v1479, 4
      %v1481 = vadd.f32 %v1479, %v1480
      %v1482 = vrot.slane %v1481, 2
      %v1483 = vadd.f32 %v1481, %v1482
      %v1484 = vrot.slane %v1483, 1
      %v1485 = vadd.f32 %v1483, %v1484
      %v1486 = vadd.f32 %v1322, %v1326
      %v1487 = vrot.slane %v1486, 4
      %v1488 = vadd.f32 %v1486, %v1487
      %v1489 = vrot.slane %v1488, 2
      %v1490 = vadd.f32 %v1488, %v1489
      %v1491 = vrot.slane %v1490, 1
      %v1492 = vadd.f32 %v1490, %v1491
      %v1493 = vadd.f32 %v1323, %v1327
      %v1494 = vrot.slane %v1493, 4
      %v1495 = vadd.f32 %v1493, %v1494
      %v1496 = vrot.slane %v1495, 2
      %v1497 = vadd.f32 %v1495, %v1496
      %v1498 = vrot.slane %v1497, 1
      %v1499 = vadd.f32 %v1497, %v1498
      %v1500 = vadd.f32 %v1324, %v1328
      %v1501 = vrot.slane %v1500, 4
      %v1502 = vadd.f32 %v1500, %v1501
      %v1503 = vrot.slane %v1502, 2
      %v1504 = vadd.f32 %v1502, %v1503
      %v1505 = vrot.slane %v1504, 1
      %v1506 = vadd.f32 %v1504, %v1505
      %v1507 = vadd.f32 %v1325, %v1329
      %v1508 = vrot.slane %v1507, 4
      %v1509 = vadd.f32 %v1507, %v1508
      %v1510 = vrot.slane %v1509, 2
      %v1511 = vadd.f32 %v1509, %v1510
      %v1512 = vrot.slane %v1511, 1
      %v1513 = vadd.f32 %v1511, %v1512
      %v1514 = vadd.f32 %v1330, %v1334
      %v1515 = vrot.slane %v1514, 4
      %v1516 = vadd.f32 %v1514, %v1515
      %v1517 = vrot.slane %v1516, 2
      %v1518 = vadd.f32 %v1516, %v1517
      %v1519 = vrot.slane %v1518, 1
      %v1520 = vadd.f32 %v1518, %v1519
      %v1521 = vadd.f32 %v1331, %v1335
      %v1522 = vrot.slane %v1521, 4
      %v1523 = vadd.f32 %v1521, %v1522
      %v1524 = vrot.slane %v1523, 2
      %v1525 = vadd.f32 %v1523, %v1524
      %v1526 = vrot.slane %v1525, 1
      %v1527 = vadd.f32 %v1525, %v1526
      %v1528 = vadd.f32 %v1332, %v1336
      %v1529 = vrot.slane %v1528, 4
      %v1530 = vadd.f32 %v1528, %v1529
      %v1531 = vrot.slane %v1530, 2
      %v1532 = vadd.f32 %v1530, %v1531
      %v1533 = vrot.slane %v1532, 1
      %v1534 = vadd.f32 %v1532, %v1533
      %v1535 = vadd.f32 %v1333, %v1337
      %v1536 = vrot.slane %v1535, 4
      %v1537 = vadd.f32 %v1535, %v1536
      %v1538 = vrot.slane %v1537, 2
      %v1539 = vadd.f32 %v1537, %v1538
      %v1540 = vrot.slane %v1539, 1
      %v1541 = vadd.f32 %v1539, %v1540
      %v1542 = vadd.f32 %v1338, %v1342
      %v1543 = vrot.slane %v1542, 4
      %v1544 = vadd.f32 %v1542, %v1543
      %v1545 = vrot.slane %v1544, 2
      %v1546 = vadd.f32 %v1544, %v1545
      %v1547 = vrot.slane %v1546, 1
      %v1548 = vadd.f32 %v1546, %v1547
      %v1549 = vadd.f32 %v1339, %v1343
      %v1550 = vrot.slane %v1549, 4
      %v1551 = vadd.f32 %v1549, %v1550
      %v1552 = vrot.slane %v1551, 2
      %v1553 = vadd.f32 %v1551, %v1552
      %v1554 = vrot.slane %v1553, 1
      %v1555 = vadd.f32 %v1553, %v1554
      %v1556 = vadd.f32 %v1340, %v1344
      %v1557 = vrot.slane %v1556, 4
      %v1558 = vadd.f32 %v1556, %v1557
      %v1559 = vrot.slane %v1558, 2
      %v1560 = vadd.f32 %v1558, %v1559
      %v1561 = vrot.slane %v1560, 1
      %v1562 = vadd.f32 %v1560, %v1561
      %v1563 = vadd.f32 %v1341, %v1345
      %v1564 = vrot.slane %v1563, 4
      %v1565 = vadd.f32 %v1563, %v1564
      %v1566 = vrot.slane %v1565, 2
      %v1567 = vadd.f32 %v1565, %v1566
      %v1568 = vrot.slane %v1567, 1
      %v1569 = vadd.f32 %v1567, %v1568
      %v1570 = vrcp.pop 16.0
      %v1571 = vmul.f32 %v1352, %v1570
      %v1572 = vmul.f32 %v1359, %v1570
      %v1573 = vmul.f32 %v1366, %v1570
      %v1574 = vmul.f32 %v1373, %v1570
      %v1575 = vmul.f32 %v1380, %v1570
      %v1576 = vmul.f32 %v1387, %v1570
      %v1577 = vmul.f32 %v1394, %v1570
      %v1578 = vmul.f32 %v1401, %v1570
      %v1579 = vmul.f32 %v1408, %v1570
      %v1580 = vmul.f32 %v1415, %v1570
      %v1581 = vmul.f32 %v1422, %v1570
      %v1582 = vmul.f32 %v1429, %v1570
      %v1583 = vmul.f32 %v1436, %v1570
      %v1584 = vmul.f32 %v1443, %v1570
      %v1585 = vmul.f32 %v1450, %v1570
      %v1586 = vmul.f32 %v1457, %v1570
      %v1587 = vmul.f32 %v1464, %v1570
      %v1588 = vmul.f32 %v1471, %v1570
      %v1589 = vmul.f32 %v1478, %v1570
      %v1590 = vmul.f32 %v1485, %v1570
      %v1591 = vmul.f32 %v1492, %v1570
      %v1592 = vmul.f32 %v1499, %v1570
      %v1593 = vmul.f32 %v1506, %v1570
      %v1594 = vmul.f32 %v1513, %v1570
      %v1595 = vmul.f32 %v1520, %v1570
      %v1596 = vmul.f32 %v1527, %v1570
      %v1597 = vmul.f32 %v1534, %v1570
      %v1598 = vmul.f32 %v1541, %v1570
      %v1599 = vmul.f32 %v1548, %v1570
      %v1600 = vmul.f32 %v1555, %v1570
      %v1601 = vmul.f32 %v1562, %v1570
      %v1602 = vmul.f32 %v1569, %v1570
      %v1603 = vpack.c.bf16 %v1571, %v1571
      %v1604 = vpack.c.bf16 %v1572, %v1572
      %v1605 = vpack.c.bf16 %v1573, %v1573
      %v1606 = vpack.c.bf16 %v1574, %v1574
      %v1607 = vpack.c.bf16 %v1575, %v1575
      %v1608 = vpack.c.bf16 %v1576, %v1576
      %v1609 = vpack.c.bf16 %v1577, %v1577
      %v1610 = vpack.c.bf16 %v1578, %v1578
      %v1611 = vpack.c.bf16 %v1579, %v1579
      %v1612 = vpack.c.bf16 %v1580, %v1580
      %v1613 = vpack.c.bf16 %v1581, %v1581
      %v1614 = vpack.c.bf16 %v1582, %v1582
      %v1615 = vpack.c.bf16 %v1583, %v1583
      %v1616 = vpack.c.bf16 %v1584, %v1584
      %v1617 = vpack.c.bf16 %v1585, %v1585
      %v1618 = vpack.c.bf16 %v1586, %v1586
      %v1619 = vpack.c.bf16 %v1587, %v1587
      %v1620 = vpack.c.bf16 %v1588, %v1588
      %v1621 = vpack.c.bf16 %v1589, %v1589
      %v1622 = vpack.c.bf16 %v1590, %v1590
      %v1623 = vpack.c.bf16 %v1591, %v1591
      %v1624 = vpack.c.bf16 %v1592, %v1592
      %v1625 = vpack.c.bf16 %v1593, %v1593
      %v1626 = vpack.c.bf16 %v1594, %v1594
      %v1627 = vpack.c.bf16 %v1595, %v1595
      %v1628 = vpack.c.bf16 %v1596, %v1596
      %v1629 = vpack.c.bf16 %v1597, %v1597
      %v1630 = vpack.c.bf16 %v1598, %v1598
      %v1631 = vpack.c.bf16 %v1599, %v1599
      %v1632 = vpack.c.bf16 %v1600, %v1600
      %v1633 = vpack.c.bf16 %v1601, %v1601
      %v1634 = vpack.c.bf16 %v1602, %v1602
      %v1635 = vld [vmem:[%s3] sm:$0xf]
      %v1636 = vld [vmem:[%s3 + $0x4] sm:$0xf]
      %v1637 = vld [vmem:[%s3 + $0x8] sm:$0xf]
      %v1638 = vld [vmem:[%s3 + $0xc] sm:$0xf]
      %v1639 = vld [vmem:[%s3 + $0x10] sm:$0xf]
      %v1640 = vld [vmem:[%s3 + $0x14] sm:$0xf]
      %v1641 = vld [vmem:[%s3 + $0x18] sm:$0xf]
      %v1642 = vld [vmem:[%s3 + $0x1c] sm:$0xf]
      %v1643 = vld [vmem:[%s3 + $0x20] sm:$0xf]
      %v1644 = vld [vmem:[%s3 + $0x24] sm:$0xf]
      %v1645 = vld [vmem:[%s3 + $0x28] sm:$0xf]
      %v1646 = vld [vmem:[%s3 + $0x2c] sm:$0xf]
      %v1647 = vld [vmem:[%s3 + $0x30] sm:$0xf]
      %v1648 = vld [vmem:[%s3 + $0x34] sm:$0xf]
      %v1649 = vld [vmem:[%s3 + $0x38] sm:$0xf]
      %v1650 = vld [vmem:[%s3 + $0x3c] sm:$0xf]
      %v1651 = vld [vmem:[%s3 + $0x40] sm:$0xf]
      %v1652 = vld [vmem:[%s3 + $0x44] sm:$0xf]
      %v1653 = vld [vmem:[%s3 + $0x48] sm:$0xf]
      %v1654 = vld [vmem:[%s3 + $0x4c] sm:$0xf]
      %v1655 = vld [vmem:[%s3 + $0x50] sm:$0xf]
      %v1656 = vld [vmem:[%s3 + $0x54] sm:$0xf]
      %v1657 = vld [vmem:[%s3 + $0x58] sm:$0xf]
      %v1658 = vld [vmem:[%s3 + $0x5c] sm:$0xf]
      %v1659 = vld [vmem:[%s3 + $0x60] sm:$0xf]
      %v1660 = vld [vmem:[%s3 + $0x64] sm:$0xf]
      %v1661 = vld [vmem:[%s3 + $0x68] sm:$0xf]
      %v1662 = vld [vmem:[%s3 + $0x6c] sm:$0xf]
      %v1663 = vld [vmem:[%s3 + $0x70] sm:$0xf]
      %v1664 = vld [vmem:[%s3 + $0x74] sm:$0xf]
      %v1665 = vld [vmem:[%s3 + $0x78] sm:$0xf]
      %v1666 = vld [vmem:[%s3 + $0x7c] sm:$0xf]
      %v1667 = vld [vmem:[%s3 + $0x80] sm:$0xf]
      %v1668 = vld [vmem:[%s3 + $0x84] sm:$0xf]
      %v1669 = vld [vmem:[%s3 + $0x88] sm:$0xf]
      %v1670 = vld [vmem:[%s3 + $0x8c] sm:$0xf]
      %v1671 = vld [vmem:[%s3 + $0x90] sm:$0xf]
      %v1672 = vld [vmem:[%s3 + $0x94] sm:$0xf]
      %v1673 = vld [vmem:[%s3 + $0x98] sm:$0xf]
      %v1674 = vld [vmem:[%s3 + $0x9c] sm:$0xf]
      %v1675 = vld [vmem:[%s3 + $0xa0] sm:$0xf]
      %v1676 = vld [vmem:[%s3 + $0xa4] sm:$0xf]
      %v1677 = vld [vmem:[%s3 + $0xa8] sm:$0xf]
      %v1678 = vld [vmem:[%s3 + $0xac] sm:$0xf]
      %v1679 = vld [vmem:[%s3 + $0xb0] sm:$0xf]
      %v1680 = vld [vmem:[%s3 + $0xb4] sm:$0xf]
      %v1681 = vld [vmem:[%s3 + $0xb8] sm:$0xf]
      %v1682 = vld [vmem:[%s3 + $0xbc] sm:$0xf]
      %v1683 = vld [vmem:[%s3 + $0xc0] sm:$0xf]
      %v1684 = vld [vmem:[%s3 + $0xc4] sm:$0xf]
      %v1685 = vld [vmem:[%s3 + $0xc8] sm:$0xf]
      %v1686 = vld [vmem:[%s3 + $0xcc] sm:$0xf]
      %v1687 = vld [vmem:[%s3 + $0xd0] sm:$0xf]
      %v1688 = vld [vmem:[%s3 + $0xd4] sm:$0xf]
      %v1689 = vld [vmem:[%s3 + $0xd8] sm:$0xf]
      %v1690 = vld [vmem:[%s3 + $0xdc] sm:$0xf]
      %v1691 = vld [vmem:[%s3 + $0xe0] sm:$0xf]
      %v1692 = vld [vmem:[%s3 + $0xe4] sm:$0xf]
      %v1693 = vld [vmem:[%s3 + $0xe8] sm:$0xf]
      %v1694 = vld [vmem:[%s3 + $0xec] sm:$0xf]
      %v1695 = vld [vmem:[%s3 + $0xf0] sm:$0xf]
      %v1696 = vld [vmem:[%s3 + $0xf4] sm:$0xf]
      %v1697 = vld [vmem:[%s3 + $0xf8] sm:$0xf]
      %v1698 = vld [vmem:[%s3 + $0xfc] sm:$0xf]
      %v1731 = vunpack.c.l.b16 %v1603
      %v1732 = vunpack.c.l.b16 %v1604
      %v1733 = vunpack.c.l.b16 %v1605
      %v1734 = vunpack.c.l.b16 %v1606
      %v1735 = vunpack.c.l.b16 %v1607
      %v1736 = vunpack.c.l.b16 %v1608
      %v1737 = vunpack.c.l.b16 %v1609
      %v1738 = vunpack.c.l.b16 %v1610
      %v1739 = vunpack.c.l.b16 %v1611
      %v1740 = vunpack.c.l.b16 %v1612
      %v1741 = vunpack.c.l.b16 %v1613
      %v1742 = vunpack.c.l.b16 %v1614
      %v1743 = vunpack.c.l.b16 %v1615
      %v1744 = vunpack.c.l.b16 %v1616
      %v1745 = vunpack.c.l.b16 %v1617
      %v1746 = vunpack.c.l.b16 %v1618
      %v1747 = vunpack.c.l.b16 %v1619
      %v1748 = vunpack.c.l.b16 %v1620
      %v1749 = vunpack.c.l.b16 %v1621
      %v1750 = vunpack.c.l.b16 %v1622
      %v1751 = vunpack.c.l.b16 %v1623
      %v1752 = vunpack.c.l.b16 %v1624
      %v1753 = vunpack.c.l.b16 %v1625
      %v1754 = vunpack.c.l.b16 %v1626
      %v1755 = vunpack.c.l.b16 %v1627
      %v1756 = vunpack.c.l.b16 %v1628
      %v1757 = vunpack.c.l.b16 %v1629
      %v1758 = vunpack.c.l.b16 %v1630
      %v1759 = vunpack.c.l.b16 %v1631
      %v1760 = vunpack.c.l.b16 %v1632
      %v1761 = vunpack.c.l.b16 %v1633
      %v1762 = vunpack.c.l.b16 %v1634
      %vm1763 = vcmask 1041409
      %v1764 = vsel %vm1763, %v1735, %v1731
      %vm1765 = vcmask 1042434
      %v1766 = vsel %vm1765, %v1739, %v1764
      %vm1767 = vcmask 1043459
      %v1768 = vsel %vm1767, %v1743, %v1766
      %vm1769 = vcmask 1044484
      %v1770 = vsel %vm1769, %v1747, %v1768
      %vm1771 = vcmask 1045509
      %v1772 = vsel %vm1771, %v1751, %v1770
      %vm1773 = vcmask 1046534
      %v1774 = vsel %vm1773, %v1755, %v1772
      %vm1775 = vcmask 1047559
      %v1776 = vsel %vm1775, %v1759, %v1774
      %v1777 = vsel %vm1763, %v1736, %v1732
      %v1778 = vsel %vm1765, %v1740, %v1777
      %v1779 = vsel %vm1767, %v1744, %v1778
      %v1780 = vsel %vm1769, %v1748, %v1779
      %v1781 = vsel %vm1771, %v1752, %v1780
      %v1782 = vsel %vm1773, %v1756, %v1781
      %v1783 = vsel %vm1775, %v1760, %v1782
      %v1784 = vsel %vm1763, %v1737, %v1733
      %v1785 = vsel %vm1765, %v1741, %v1784
      %v1786 = vsel %vm1767, %v1745, %v1785
      %v1787 = vsel %vm1769, %v1749, %v1786
      %v1788 = vsel %vm1771, %v1753, %v1787
      %v1789 = vsel %vm1773, %v1757, %v1788
      %v1790 = vsel %vm1775, %v1761, %v1789
      %v1791 = vsel %vm1763, %v1738, %v1734
      %v1792 = vsel %vm1765, %v1742, %v1791
      %v1793 = vsel %vm1767, %v1746, %v1792
      %v1794 = vsel %vm1769, %v1750, %v1793
      %v1795 = vsel %vm1771, %v1754, %v1794
      %v1796 = vsel %vm1773, %v1758, %v1795
      %v1797 = vsel %vm1775, %v1762, %v1796
      %v1798 = vpack.c.b16 %v1776, %v1776
      %v1799 = vpack.c.b16 %v1783, %v1783
      %v1800 = vpack.c.b16 %v1790, %v1790
      %v1801 = vpack.c.b16 %v1797, %v1797
      %v1870 = vunpack.c.l.b16 %v1635
      %v1871 = vunpack.c.l.b16 %v1636
      %v1872 = vunpack.c.l.b16 %v1637
      %v1873 = vunpack.c.l.b16 %v1638
      %v1874 = vunpack.c.l.b16 %v1639
      %v1875 = vunpack.c.l.b16 %v1640
      %v1876 = vunpack.c.l.b16 %v1641
      %v1877 = vunpack.c.l.b16 %v1642
      %v1878 = vunpack.c.l.b16 %v1643
      %v1879 = vunpack.c.l.b16 %v1644
      %v1880 = vunpack.c.l.b16 %v1645
      %v1881 = vunpack.c.l.b16 %v1646
      %v1882 = vunpack.c.l.b16 %v1647
      %v1883 = vunpack.c.l.b16 %v1648
      %v1884 = vunpack.c.l.b16 %v1649
      %v1885 = vunpack.c.l.b16 %v1650
      %v1886 = vunpack.c.l.b16 %v1651
      %v1887 = vunpack.c.l.b16 %v1652
      %v1888 = vunpack.c.l.b16 %v1653
      %v1889 = vunpack.c.l.b16 %v1654
      %v1890 = vunpack.c.l.b16 %v1655
      %v1891 = vunpack.c.l.b16 %v1656
      %v1892 = vunpack.c.l.b16 %v1657
      %v1893 = vunpack.c.l.b16 %v1658
      %v1894 = vunpack.c.l.b16 %v1659
      %v1895 = vunpack.c.l.b16 %v1660
      %v1896 = vunpack.c.l.b16 %v1661
      %v1897 = vunpack.c.l.b16 %v1662
      %v1898 = vunpack.c.l.b16 %v1663
      %v1899 = vunpack.c.l.b16 %v1664
      %v1900 = vunpack.c.l.b16 %v1665
      %v1901 = vunpack.c.l.b16 %v1666
      %v1902 = vunpack.c.l.b16 %v1667
      %v1903 = vunpack.c.l.b16 %v1668
      %v1904 = vunpack.c.l.b16 %v1669
      %v1905 = vunpack.c.l.b16 %v1670
      %v1906 = vunpack.c.l.b16 %v1671
      %v1907 = vunpack.c.l.b16 %v1672
      %v1908 = vunpack.c.l.b16 %v1673
      %v1909 = vunpack.c.l.b16 %v1674
      %v1910 = vunpack.c.l.b16 %v1675
      %v1911 = vunpack.c.l.b16 %v1676
      %v1912 = vunpack.c.l.b16 %v1677
      %v1913 = vunpack.c.l.b16 %v1678
      %v1914 = vunpack.c.l.b16 %v1679
      %v1915 = vunpack.c.l.b16 %v1680
      %v1916 = vunpack.c.l.b16 %v1681
      %v1917 = vunpack.c.l.b16 %v1682
      %v1918 = vunpack.c.l.b16 %v1683
      %v1919 = vunpack.c.l.b16 %v1684
      %v1920 = vunpack.c.l.b16 %v1685
      %v1921 = vunpack.c.l.b16 %v1686
      %v1922 = vunpack.c.l.b16 %v1687
      %v1923 = vunpack.c.l.b16 %v1688
      %v1924 = vunpack.c.l.b16 %v1689
      %v1925 = vunpack.c.l.b16 %v1690
      %v1926 = vunpack.c.l.b16 %v1691
      %v1927 = vunpack.c.l.b16 %v1692
      %v1928 = vunpack.c.l.b16 %v1693
      %v1929 = vunpack.c.l.b16 %v1694
      %v1930 = vunpack.c.l.b16 %v1695
      %v1931 = vunpack.c.l.b16 %v1696
      %v1932 = vunpack.c.l.b16 %v1697
      %v1933 = vunpack.c.l.b16 %v1698
      %v1934 = vpack.c.b16 %v1871, %v1870
      %v1935 = vpack.c.b16 %v1873, %v1872
      %v1936 = vpack.c.b16 %v1875, %v1874
      %v1937 = vpack.c.b16 %v1877, %v1876
      %v1938 = vpack.c.b16 %v1879, %v1878
      %v1939 = vpack.c.b16 %v1881, %v1880
      %v1940 = vpack.c.b16 %v1883, %v1882
      %v1941 = vpack.c.b16 %v1885, %v1884
      %v1942 = vpack.c.b16 %v1887, %v1886
      %v1943 = vpack.c.b16 %v1889, %v1888
      %v1944 = vpack.c.b16 %v1891, %v1890
      %v1945 = vpack.c.b16 %v1893, %v1892
      %v1946 = vpack.c.b16 %v1895, %v1894
      %v1947 = vpack.c.b16 %v1897, %v1896
      %v1948 = vpack.c.b16 %v1899, %v1898
      %v1949 = vpack.c.b16 %v1901, %v1900
      %v1950 = vpack.c.b16 %v1903, %v1902
      %v1951 = vpack.c.b16 %v1905, %v1904
      %v1952 = vpack.c.b16 %v1907, %v1906
      %v1953 = vpack.c.b16 %v1909, %v1908
      %v1954 = vpack.c.b16 %v1911, %v1910
      %v1955 = vpack.c.b16 %v1913, %v1912
      %v1956 = vpack.c.b16 %v1915, %v1914
      %v1957 = vpack.c.b16 %v1917, %v1916
      %v1958 = vpack.c.b16 %v1919, %v1918
      %v1959 = vpack.c.b16 %v1921, %v1920
      %v1960 = vpack.c.b16 %v1923, %v1922
      %v1961 = vpack.c.b16 %v1925, %v1924
      %v1962 = vpack.c.b16 %v1927, %v1926
      %v1963 = vpack.c.b16 %v1929, %v1928
      %v1964 = vpack.c.b16 %v1931, %v1930
      %v1965 = vpack.c.b16 %v1933, %v1932
      %1998 = vmatprep.subr.bf16.mxu0 0
      %1999 = vmatpush1.bf16.msra.mxu0 %v1934
      %2000 = vmatprep.subr.bf16.mxu0 0
      %2001 = vmatpush1.bf16.msra.mxu0 %v1935
      %2002 = vmatprep.subr.bf16.mxu0 0
      %2003 = vmatpush1.bf16.msra.mxu0 %v1936
      %2004 = vmatprep.subr.bf16.mxu0 0
      %2005 = vmatpush1.bf16.msra.mxu0 %v1937
      %2006 = vmatprep.subr.bf16.mxu0 0
      %2007 = vmatpush1.bf16.msra.mxu0 %v1938
      %2008 = vmatprep.subr.bf16.mxu0 0
      %2009 = vmatpush1.bf16.msra.mxu0 %v1939
      %2010 = vmatprep.subr.bf16.mxu0 0
      %2011 = vmatpush1.bf16.msra.mxu0 %v1940
      %2012 = vmatprep.subr.bf16.mxu0 0
      %2013 = vmatpush1.bf16.msra.mxu0 %v1941
      %2014 = vmatprep.subr.bf16.mxu0 0
      %2015 = vmatpush1.bf16.msra.mxu0 %v1942
      %2016 = vmatprep.subr.bf16.mxu0 0
      %2017 = vmatpush1.bf16.msra.mxu0 %v1943
      %2018 = vmatprep.subr.bf16.mxu0 0
      %2019 = vmatpush1.bf16.msra.mxu0 %v1944
      %2020 = vmatprep.subr.bf16.mxu0 0
      %2021 = vmatpush1.bf16.msra.mxu0 %v1945
      %2022 = vmatprep.subr.bf16.mxu0 0
      %2023 = vmatpush1.bf16.msra.mxu0 %v1946
      %2024 = vmatprep.subr.bf16.mxu0 0
      %2025 = vmatpush1.bf16.msra.mxu0 %v1947
      %2026 = vmatprep.subr.bf16.mxu0 0
      %2027 = vmatpush1.bf16.msra.mxu0 %v1948
      %2028 = vmatprep.subr.bf16.mxu0 0
      %2029 = vmatpush1.bf16.msra.mxu0 %v1949
      %2030 = vmatprep.mubr.bf16.mxu0 %v1799
      %2031 = vmatmul.mubr.bf16.gmra.mrb[0].mxu0 %v1798
      %v2032 = vpop.f32.mrb[0].mxu0
      %v2033 = vadd.f32 0.0, %v2032
      %v2034 = vpop.f32.mrb[0].mxu0
      %v2035 = vpop.f32.mrb[0].mxu0
      %v2036 = vpop.f32.mrb[0].mxu0
      %2037 = vdwg.mxu0
      %2038 = vmatprep.subr.bf16.mxu0 0
      %2039 = vmatpush1.bf16.msra.mxu0 %v1950
      %2040 = vmatprep.subr.bf16.mxu0 0
      %2041 = vmatpush1.bf16.msra.mxu0 %v1951
      %2042 = vmatprep.subr.bf16.mxu0 0
      %2043 = vmatpush1.bf16.msra.mxu0 %v1952
      %2044 = vmatprep.subr.bf16.mxu0 0
      %2045 = vmatpush1.bf16.msra.mxu0 %v1953
      %2046 = vmatprep.subr.bf16.mxu0 0
      %2047 = vmatpush1.bf16.msra.mxu0 %v1954
      %2048 = vmatprep.subr.bf16.mxu0 0
      %2049 = vmatpush1.bf16.msra.mxu0 %v1955
      %2050 = vmatprep.subr.bf16.mxu0 0
      %2051 = vmatpush1.bf16.msra.mxu0 %v1956
      %2052 = vmatprep.subr.bf16.mxu0 0
      %2053 = vmatpush1.bf16.msra.mxu0 %v1957
      %2054 = vmatprep.subr.bf16.mxu0 0
      %2055 = vmatpush1.bf16.msra.mxu0 %v1958
      %2056 = vmatprep.subr.bf16.mxu0 0
      %2057 = vmatpush1.bf16.msra.mxu0 %v1959
      %2058 = vmatprep.subr.bf16.mxu0 0
      %2059 = vmatpush1.bf16.msra.mxu0 %v1960
      %2060 = vmatprep.subr.bf16.mxu0 0
      %2061 = vmatpush1.bf16.msra.mxu0 %v1961
      %2062 = vmatprep.subr.bf16.mxu0 0
      %2063 = vmatpush1.bf16.msra.mxu0 %v1962
      %2064 = vmatprep.subr.bf16.mxu0 0
      %2065 = vmatpush1.bf16.msra.mxu0 %v1963
      %2066 = vmatprep.subr.bf16.mxu0 0
      %2067 = vmatpush1.bf16.msra.mxu0 %v1964
      %2068 = vmatprep.subr.bf16.mxu0 0
      %2069 = vmatpush1.bf16.msra.mxu0 %v1965
      %2070 = vmatprep.mubr.bf16.mxu0 %v1801
      %2071 = vmatmul.mubr.bf16.gmra.mrb[0].mxu0 %v1800
      %v2072 = vpop.f32.mrb[0].mxu0
      %v2073 = vadd.f32 %v2033, %v2072
      %v2074 = vpop.f32.mrb[0].mxu0
      %v2075 = vpop.f32.mrb[0].mxu0
      %v2076 = vpop.f32.mrb[0].mxu0
      %2077 = vdwg.mxu0
      %v2078 = vmul.f32 %v2073, 0.0625
      %v2079 = vpack.c.bf16 %v2078, %v2078
      %v2080 = vld [vmem:[%s4] sm:$0xff]
      %v2081 = vld [vmem:[%s4 + $0x8] sm:$0xff]
      %v2082 = vld [vmem:[%s4 + $0x10] sm:$0xff]
      %v2083 = vld [vmem:[%s4 + $0x18] sm:$0xff]
      %v2084 = vld [vmem:[%s4 + $0x20] sm:$0xff]
      %v2085 = vld [vmem:[%s4 + $0x28] sm:$0xff]
      %v2086 = vld [vmem:[%s4 + $0x30] sm:$0xff]
      %v2087 = vld [vmem:[%s4 + $0x38] sm:$0xff]
      %v2088 = vld [vmem:[%s4 + $0x40] sm:$0xff]
      %v2089 = vld [vmem:[%s4 + $0x48] sm:$0xff]
      %v2090 = vld [vmem:[%s4 + $0x50] sm:$0xff]
      %v2091 = vld [vmem:[%s4 + $0x58] sm:$0xff]
      %v2092 = vld [vmem:[%s4 + $0x60] sm:$0xff]
      %v2093 = vld [vmem:[%s4 + $0x68] sm:$0xff]
      %v2094 = vld [vmem:[%s4 + $0x70] sm:$0xff]
      %v2095 = vld [vmem:[%s4 + $0x78] sm:$0xff]
      %v2096 = vld [vmem:[%s4 + $0x80] sm:$0xff]
      %v2097 = vld [vmem:[%s4 + $0x88] sm:$0xff]
      %v2098 = vld [vmem:[%s4 + $0x90] sm:$0xff]
      %v2099 = vld [vmem:[%s4 + $0x98] sm:$0xff]
      %v2100 = vld [vmem:[%s5] sm:$0xff]
      %v2101 = vld [vmem:[%s5 + $0x8] sm:$0x3]
      %v2104 = vlaneseq
      %v2105 = vshrl.u32 %v2104, 7
      %v2106 = vsub.s32 0, %v2105
      %v2107 = vrot.slane %v2100, %v2106
      %v2108 = vlaneseq
      %v2109 = vshrl.u32 %v2108, 7
      %v2110 = vsub.s32 1, %v2109
      %v2111 = vrot.slane %v2100, %v2110
      %v2112 = vlaneseq
      %v2113 = vshrl.u32 %v2112, 7
      %v2114 = vsub.s32 2, %v2113
      %v2115 = vrot.slane %v2100, %v2114
      %v2116 = vlaneseq
      %v2117 = vshrl.u32 %v2116, 7
      %v2118 = vsub.s32 3, %v2117
      %v2119 = vrot.slane %v2100, %v2118
      %v2120 = vlaneseq
      %v2121 = vshrl.u32 %v2120, 7
      %v2122 = vsub.s32 4, %v2121
      %v2123 = vrot.slane %v2100, %v2122
      %v2124 = vlaneseq
      %v2125 = vshrl.u32 %v2124, 7
      %v2126 = vsub.s32 5, %v2125
      %v2127 = vrot.slane %v2100, %v2126
      %v2128 = vlaneseq
      %v2129 = vshrl.u32 %v2128, 7
      %v2130 = vsub.s32 6, %v2129
      %v2131 = vrot.slane %v2100, %v2130
      %v2132 = vlaneseq
      %v2133 = vshrl.u32 %v2132, 7
      %v2134 = vsub.s32 7, %v2133
      %v2135 = vrot.slane %v2100, %v2134
      %v2136 = vlaneseq
      %v2137 = vshrl.u32 %v2136, 7
      %v2138 = vsub.s32 0, %v2137
      %v2139 = vrot.slane %v2101, %v2138
      %v2140 = vlaneseq
      %v2141 = vshrl.u32 %v2140, 7
      %v2142 = vsub.s32 1, %v2141
      %v2143 = vrot.slane %v2101, %v2142
      %v2174 = vunpack.c.l.b16 %v2080
      %v2175 = vunpack.c.h.b16 %v2080
      %v2176 = vunpack.c.l.b16 %v2081
      %v2177 = vunpack.c.h.b16 %v2081
      %v2178 = vunpack.c.l.b16 %v2082
      %v2179 = vunpack.c.h.b16 %v2082
      %v2180 = vunpack.c.l.b16 %v2083
      %v2181 = vunpack.c.h.b16 %v2083
      %v2182 = vunpack.c.l.b16 %v2084
      %v2183 = vunpack.c.h.b16 %v2084
      %v2184 = vunpack.c.l.b16 %v2085
      %v2185 = vunpack.c.h.b16 %v2085
      %v2186 = vunpack.c.l.b16 %v2086
      %v2187 = vunpack.c.h.b16 %v2086
      %v2188 = vunpack.c.l.b16 %v2087
      %v2189 = vunpack.c.h.b16 %v2087
      %v2190 = vunpack.c.l.b16 %v2088
      %v2191 = vunpack.c.h.b16 %v2088
      %v2192 = vunpack.c.l.b16 %v2089
      %v2193 = vunpack.c.h.b16 %v2089
      %v2194 = vunpack.c.l.b16 %v2090
      %v2195 = vunpack.c.h.b16 %v2090
      %v2196 = vunpack.c.l.b16 %v2091
      %v2197 = vunpack.c.h.b16 %v2091
      %v2198 = vunpack.c.l.b16 %v2092
      %v2199 = vunpack.c.h.b16 %v2092
      %v2200 = vunpack.c.l.b16 %v2093
      %v2201 = vunpack.c.h.b16 %v2093
      %v2202 = vunpack.c.l.b16 %v2094
      %v2203 = vunpack.c.h.b16 %v2094
      %v2204 = vunpack.c.l.b16 %v2095
      %v2205 = vunpack.c.h.b16 %v2095
      %v2206 = vunpack.c.l.b16 %v2096
      %v2207 = vunpack.c.h.b16 %v2096
      %v2208 = vunpack.c.l.b16 %v2097
      %v2209 = vunpack.c.h.b16 %v2097
      %v2210 = vunpack.c.l.b16 %v2098
      %v2211 = vunpack.c.h.b16 %v2098
      %v2212 = vunpack.c.l.b16 %v2099
      %v2213 = vunpack.c.h.b16 %v2099
      %v2214 = vpack.c.b16 %v2184, %v2174
      %v2215 = vpack.c.b16 %v2185, %v2175
      %v2216 = vpack.c.b16 %v2186, %v2176
      %v2217 = vpack.c.b16 %v2187, %v2177
      %v2218 = vpack.c.b16 %v2188, %v2178
      %v2219 = vpack.c.b16 %v2189, %v2179
      %v2220 = vpack.c.b16 %v2190, %v2180
      %v2221 = vpack.c.b16 %v2191, %v2181
      %v2222 = vpack.c.b16 %v2192, %v2182
      %v2223 = vpack.c.b16 %v2193, %v2183
      %v2224 = vpack.c.b16 %v2204, %v2194
      %v2225 = vpack.c.b16 %v2205, %v2195
      %v2226 = vpack.c.b16 %v2206, %v2196
      %v2227 = vpack.c.b16 %v2207, %v2197
      %v2228 = vpack.c.b16 %v2208, %v2198
      %v2229 = vpack.c.b16 %v2209, %v2199
      %v2230 = vpack.c.b16 %v2210, %v2200
      %v2231 = vpack.c.b16 %v2211, %v2201
      %v2232 = vpack.c.b16 %v2212, %v2202
      %v2233 = vpack.c.b16 %v2213, %v2203
      %vm2254 = vcmask 261120
      %v2256 = vsel %vm2254, %v2079, 0
      %2258 = vmatprep.subr.bf16.mxu0 %v2215
      %2259 = vmatpush1.bf16.msra.mxu0 %v2214
      %2260 = vmatprep.subr.bf16.mxu0 %v2225
      %2261 = vmatpush1.bf16.msra.mxu0 %v2224
      %2262 = vmatprep.subr.bf16.mxu0 0
      %2263 = vmatpush1.bf16.msra.mxu0 0
      %2264 = vmatprep.subr.bf16.mxu0 0
      %2265 = vmatpush1.bf16.msra.mxu0 0
      %2266 = vmatprep.subr.bf16.mxu0 0
      %2267 = vmatpush1.bf16.msra.mxu0 0
      %2268 = vmatprep.subr.bf16.mxu0 0
      %2269 = vmatpush1.bf16.msra.mxu0 0
      %2270 = vmatprep.subr.bf16.mxu0 0
      %2271 = vmatpush1.bf16.msra.mxu0 0
      %2272 = vmatprep.subr.bf16.mxu0 0
      %2273 = vmatpush1.bf16.msra.mxu0 0
      %2274 = vmatprep.subr.bf16.mxu0 0
      %2275 = vmatpush1.bf16.msra.mxu0 0
      %2276 = vmatprep.subr.bf16.mxu0 0
      %2277 = vmatpush1.bf16.msra.mxu0 0
      %2278 = vmatprep.subr.bf16.mxu0 0
      %2279 = vmatpush1.bf16.msra.mxu0 0
      %2280 = vmatprep.subr.bf16.mxu0 0
      %2281 = vmatpush1.bf16.msra.mxu0 0
      %2282 = vmatprep.subr.bf16.mxu0 0
      %2283 = vmatpush1.bf16.msra.mxu0 0
      %2284 = vmatprep.subr.bf16.mxu0 0
      %2285 = vmatpush1.bf16.msra.mxu0 0
      %2286 = vmatprep.subr.bf16.mxu0 0
      %2287 = vmatpush1.bf16.msra.mxu0 0
      %2288 = vmatprep.subr.bf16.mxu0 0
      %2289 = vmatpush1.bf16.msra.mxu0 0
      %2290 = vmatprep.mubr.bf16.mxu0 0
      %2291 = vmatmul.mubr.bf16.gmra.mrb[0].mxu0 %v2256
      %v2292 = vpop.f32.mrb[0].mxu0
      %v2293 = vadd.f32 %v2107, %v2292
      %v2294 = vpop.f32.mrb[0].mxu0
      %v2295 = vadd.f32 %v2111, %v2294
      %v2296 = vpop.f32.mrb[0].mxu0
      %v2297 = vpop.f32.mrb[0].mxu0
      %2298 = vdwg.mxu0
      %2299 = vmatprep.subr.bf16.mxu0 %v2217
      %2300 = vmatpush1.bf16.msra.mxu0 %v2216
      %2301 = vmatprep.subr.bf16.mxu0 %v2227
      %2302 = vmatpush1.bf16.msra.mxu0 %v2226
      %2303 = vmatprep.subr.bf16.mxu0 0
      %2304 = vmatpush1.bf16.msra.mxu0 0
      %2305 = vmatprep.subr.bf16.mxu0 0
      %2306 = vmatpush1.bf16.msra.mxu0 0
      %2307 = vmatprep.subr.bf16.mxu0 0
      %2308 = vmatpush1.bf16.msra.mxu0 0
      %2309 = vmatprep.subr.bf16.mxu0 0
      %2310 = vmatpush1.bf16.msra.mxu0 0
      %2311 = vmatprep.subr.bf16.mxu0 0
      %2312 = vmatpush1.bf16.msra.mxu0 0
      %2313 = vmatprep.subr.bf16.mxu0 0
      %2314 = vmatpush1.bf16.msra.mxu0 0
      %2315 = vmatprep.subr.bf16.mxu0 0
      %2316 = vmatpush1.bf16.msra.mxu0 0
      %2317 = vmatprep.subr.bf16.mxu0 0
      %2318 = vmatpush1.bf16.msra.mxu0 0
      %2319 = vmatprep.subr.bf16.mxu0 0
      %2320 = vmatpush1.bf16.msra.mxu0 0
      %2321 = vmatprep.subr.bf16.mxu0 0
      %2322 = vmatpush1.bf16.msra.mxu0 0
      %2323 = vmatprep.subr.bf16.mxu0 0
      %2324 = vmatpush1.bf16.msra.mxu0 0
      %2325 = vmatprep.subr.bf16.mxu0 0
      %2326 = vmatpush1.bf16.msra.mxu0 0
      %2327 = vmatprep.subr.bf16.mxu0 0
      %2328 = vmatpush1.bf16.msra.mxu0 0
      %2329 = vmatprep.subr.bf16.mxu0 0
      %2330 = vmatpush1.bf16.msra.mxu0 0
      %2331 = vmatprep.mubr.bf16.mxu0 0
      %2332 = vmatmul.mubr.bf16.gmra.mrb[0].mxu0 %v2256
      %v2333 = vpop.f32.mrb[0].mxu0
      %v2334 = vadd.f32 %v2115, %v2333
      %v2335 = vpop.f32.mrb[0].mxu0
      %v2336 = vadd.f32 %v2119, %v2335
      %v2337 = vpop.f32.mrb[0].mxu0
      %v2338 = vpop.f32.mrb[0].mxu0
      %2339 = vdwg.mxu0
      %2340 = vmatprep.subr.bf16.mxu0 %v2219
      %2341 = vmatpush1.bf16.msra.mxu0 %v2218
      %2342 = vmatprep.subr.bf16.mxu0 %v2229
      %2343 = vmatpush1.bf16.msra.mxu0 %v2228
      %2344 = vmatprep.subr.bf16.mxu0 0
      %2345 = vmatpush1.bf16.msra.mxu0 0
      %2346 = vmatprep.subr.bf16.mxu0 0
      %2347 = vmatpush1.bf16.msra.mxu0 0
      %2348 = vmatprep.subr.bf16.mxu0 0
      %2349 = vmatpush1.bf16.msra.mxu0 0
      %2350 = vmatprep.subr.bf16.mxu0 0
      %2351 = vmatpush1.bf16.msra.mxu0 0
      %2352 = vmatprep.subr.bf16.mxu0 0
      %2353 = vmatpush1.bf16.msra.mxu0 0
      %2354 = vmatprep.subr.bf16.mxu0 0
      %2355 = vmatpush1.bf16.msra.mxu0 0
      %2356 = vmatprep.subr.bf16.mxu0 0
      %2357 = vmatpush1.bf16.msra.mxu0 0
      %2358 = vmatprep.subr.bf16.mxu0 0
      %2359 = vmatpush1.bf16.msra.mxu0 0
      %2360 = vmatprep.subr.bf16.mxu0 0
      %2361 = vmatpush1.bf16.msra.mxu0 0
      %2362 = vmatprep.subr.bf16.mxu0 0
      %2363 = vmatpush1.bf16.msra.mxu0 0
      %2364 = vmatprep.subr.bf16.mxu0 0
      %2365 = vmatpush1.bf16.msra.mxu0 0
      %2366 = vmatprep.subr.bf16.mxu0 0
      %2367 = vmatpush1.bf16.msra.mxu0 0
      %2368 = vmatprep.subr.bf16.mxu0 0
      %2369 = vmatpush1.bf16.msra.mxu0 0
      %2370 = vmatprep.subr.bf16.mxu0 0
      %2371 = vmatpush1.bf16.msra.mxu0 0
      %2372 = vmatprep.mubr.bf16.mxu0 0
      %2373 = vmatmul.mubr.bf16.gmra.mrb[0].mxu0 %v2256
      %v2374 = vpop.f32.mrb[0].mxu0
      %v2375 = vadd.f32 %v2123, %v2374
      %v2376 = vpop.f32.mrb[0].mxu0
      %v2377 = vadd.f32 %v2127, %v2376
      %v2378 = vpop.f32.mrb[0].mxu0
      %v2379 = vpop.f32.mrb[0].mxu0
      %2380 = vdwg.mxu0
      %2381 = vmatprep.subr.bf16.mxu0 %v2221
      %2382 = vmatpush1.bf16.msra.mxu0 %v2220
      %2383 = vmatprep.subr.bf16.mxu0 %v2231
      %2384 = vmatpush1.bf16.msra.mxu0 %v2230
      %2385 = vmatprep.subr.bf16.mxu0 0
      %2386 = vmatpush1.bf16.msra.mxu0 0
      %2387 = vmatprep.subr.bf16.mxu0 0
      %2388 = vmatpush1.bf16.msra.mxu0 0
      %2389 = vmatprep.subr.bf16.mxu0 0
      %2390 = vmatpush1.bf16.msra.mxu0 0
      %2391 = vmatprep.subr.bf16.mxu0 0
      %2392 = vmatpush1.bf16.msra.mxu0 0
      %2393 = vmatprep.subr.bf16.mxu0 0
      %2394 = vmatpush1.bf16.msra.mxu0 0
      %2395 = vmatprep.subr.bf16.mxu0 0
      %2396 = vmatpush1.bf16.msra.mxu0 0
      %2397 = vmatprep.subr.bf16.mxu0 0
      %2398 = vmatpush1.bf16.msra.mxu0 0
      %2399 = vmatprep.subr.bf16.mxu0 0
      %2400 = vmatpush1.bf16.msra.mxu0 0
      %2401 = vmatprep.subr.bf16.mxu0 0
      %2402 = vmatpush1.bf16.msra.mxu0 0
      %2403 = vmatprep.subr.bf16.mxu0 0
      %2404 = vmatpush1.bf16.msra.mxu0 0
      %2405 = vmatprep.subr.bf16.mxu0 0
      %2406 = vmatpush1.bf16.msra.mxu0 0
      %2407 = vmatprep.subr.bf16.mxu0 0
      %2408 = vmatpush1.bf16.msra.mxu0 0
      %2409 = vmatprep.subr.bf16.mxu0 0
      %2410 = vmatpush1.bf16.msra.mxu0 0
      %2411 = vmatprep.subr.bf16.mxu0 0
      %2412 = vmatpush1.bf16.msra.mxu0 0
      %2413 = vmatprep.mubr.bf16.mxu0 0
      %2414 = vmatmul.mubr.bf16.gmra.mrb[0].mxu0 %v2256
      %v2415 = vpop.f32.mrb[0].mxu0
      %v2416 = vadd.f32 %v2131, %v2415
      %v2417 = vpop.f32.mrb[0].mxu0
      %v2418 = vadd.f32 %v2135, %v2417
      %v2419 = vpop.f32.mrb[0].mxu0
      %v2420 = vpop.f32.mrb[0].mxu0
      %2421 = vdwg.mxu0
      %2422 = vmatprep.subr.bf16.mxu0 %v2223
      %2423 = vmatpush1.bf16.msra.mxu0 %v2222
      %2424 = vmatprep.subr.bf16.mxu0 %v2233
      %2425 = vmatpush1.bf16.msra.mxu0 %v2232
      %2426 = vmatprep.subr.bf16.mxu0 0
      %2427 = vmatpush1.bf16.msra.mxu0 0
      %2428 = vmatprep.subr.bf16.mxu0 0
      %2429 = vmatpush1.bf16.msra.mxu0 0
      %2430 = vmatprep.subr.bf16.mxu0 0
      %2431 = vmatpush1.bf16.msra.mxu0 0
      %2432 = vmatprep.subr.bf16.mxu0 0
      %2433 = vmatpush1.bf16.msra.mxu0 0
      %2434 = vmatprep.subr.bf16.mxu0 0
      %2435 = vmatpush1.bf16.msra.mxu0 0
      %2436 = vmatprep.subr.bf16.mxu0 0
      %2437 = vmatpush1.bf16.msra.mxu0 0
      %2438 = vmatprep.subr.bf16.mxu0 0
      %2439 = vmatpush1.bf16.msra.mxu0 0
      %2440 = vmatprep.subr.bf16.mxu0 0
      %2441 = vmatpush1.bf16.msra.mxu0 0
      %2442 = vmatprep.subr.bf16.mxu0 0
      %2443 = vmatpush1.bf16.msra.mxu0 0
      %2444 = vmatprep.subr.bf16.mxu0 0
      %2445 = vmatpush1.bf16.msra.mxu0 0
      %2446 = vmatprep.subr.bf16.mxu0 0
      %2447 = vmatpush1.bf16.msra.mxu0 0
      %2448 = vmatprep.subr.bf16.mxu0 0
      %2449 = vmatpush1.bf16.msra.mxu0 0
      %2450 = vmatprep.subr.bf16.mxu0 0
      %2451 = vmatpush1.bf16.msra.mxu0 0
      %2452 = vmatprep.subr.bf16.mxu0 0
      %2453 = vmatpush1.bf16.msra.mxu0 0
      %2454 = vmatprep.mubr.bf16.mxu0 0
      %2455 = vmatmul.mubr.bf16.gmra.mrb[0].mxu0 %v2256
      %v2456 = vpop.f32.mrb[0].mxu0
      %v2457 = vadd.f32 %v2139, %v2456
      %v2458 = vpop.f32.mrb[0].mxu0
      %v2459 = vadd.f32 %v2143, %v2458
      %v2460 = vpop.f32.mrb[0].mxu0
      %v2461 = vpop.f32.mrb[0].mxu0
      %2462 = vdwg.mxu0
      %v2463 = vadd.f32 %v2293, %v2295
      %v2464 = vadd.f32 %v2463, %v2334
      %v2465 = vadd.f32 %v2464, %v2336
      %v2466 = vadd.f32 %v2465, %v2375
      %v2467 = vadd.f32 %v2466, %v2377
      %v2468 = vadd.f32 %v2467, %v2416
      %v2469 = vadd.f32 %v2468, %v2418
      %v2470 = vadd.f32 %v2469, %v2457
      %v2471 = vadd.f32 %v2470, %v2459
      %2472 = vadd.xlane.f32.xlu0 %v2471
      %v2473 = vpop.xlane.xlu0 %2472
      %v2474 = vrcp.pop 1280.0
      %v2475 = vmul.f32 %v2473, %v2474
      %v2476 = vsub.f32 %v2293, %v2475
      %v2477 = vsub.f32 %v2295, %v2475
      %v2478 = vsub.f32 %v2334, %v2475
      %v2479 = vsub.f32 %v2336, %v2475
      %v2480 = vsub.f32 %v2375, %v2475
      %v2481 = vsub.f32 %v2377, %v2475
      %v2482 = vsub.f32 %v2416, %v2475
      %v2483 = vsub.f32 %v2418, %v2475
      %v2484 = vsub.f32 %v2457, %v2475
      %v2485 = vsub.f32 %v2459, %v2475
      %v2486 = vmul.f32 %v2476, %v2476
      %v2487 = vmul.f32 %v2477, %v2477
      %v2488 = vmul.f32 %v2478, %v2478
      %v2489 = vmul.f32 %v2479, %v2479
      %v2490 = vmul.f32 %v2480, %v2480
      %v2491 = vmul.f32 %v2481, %v2481
      %v2492 = vmul.f32 %v2482, %v2482
      %v2493 = vmul.f32 %v2483, %v2483
      %v2494 = vmul.f32 %v2484, %v2484
      %v2495 = vmul.f32 %v2485, %v2485
      %v2496 = vadd.f32 %v2486, %v2487
      %v2497 = vadd.f32 %v2496, %v2488
      %v2498 = vadd.f32 %v2497, %v2489
      %v2499 = vadd.f32 %v2498, %v2490
      %v2500 = vadd.f32 %v2499, %v2491
      %v2501 = vadd.f32 %v2500, %v2492
      %v2502 = vadd.f32 %v2501, %v2493
      %v2503 = vadd.f32 %v2502, %v2494
      %v2504 = vadd.f32 %v2503, %v2495
      %2505 = vadd.xlane.f32.xlu0 %v2504
      %v2506 = vpop.xlane.xlu0 %2505
      %v2507 = vmul.f32 %v2506, %v2474
      %v2508 = vadd.f32 %v2507, 1e-05
      %v2509 = vrsqrt.pop %v2508
      %v2510 = vmul.f32 %v2476, %v2509
      %v2511 = vmul.f32 %v2477, %v2509
      %v2512 = vmul.f32 %v2478, %v2509
      %v2513 = vmul.f32 %v2479, %v2509
      %v2514 = vmul.f32 %v2480, %v2509
      %v2515 = vmul.f32 %v2481, %v2509
      %v2516 = vmul.f32 %v2482, %v2509
      %v2517 = vmul.f32 %v2483, %v2509
      %v2518 = vmul.f32 %v2484, %v2509
      %v2519 = vmul.f32 %v2485, %v2509
      %v2520 = vld [vmem:[%s6] sm:$0xff]
      %v2521 = vld [vmem:[%s6 + $0x8] sm:$0x3]
      %v2524 = vlaneseq
      %v2525 = vshrl.u32 %v2524, 7
      %v2526 = vsub.s32 0, %v2525
      %v2527 = vrot.slane %v2520, %v2526
      %v2528 = vlaneseq
      %v2529 = vshrl.u32 %v2528, 7
      %v2530 = vsub.s32 1, %v2529
      %v2531 = vrot.slane %v2520, %v2530
      %v2532 = vlaneseq
      %v2533 = vshrl.u32 %v2532, 7
      %v2534 = vsub.s32 2, %v2533
      %v2535 = vrot.slane %v2520, %v2534
      %v2536 = vlaneseq
      %v2537 = vshrl.u32 %v2536, 7
      %v2538 = vsub.s32 3, %v2537
      %v2539 = vrot.slane %v2520, %v2538
      %v2540 = vlaneseq
      %v2541 = vshrl.u32 %v2540, 7
      %v2542 = vsub.s32 4, %v2541
      %v2543 = vrot.slane %v2520, %v2542
      %v2544 = vlaneseq
      %v2545 = vshrl.u32 %v2544, 7
      %v2546 = vsub.s32 5, %v2545
      %v2547 = vrot.slane %v2520, %v2546
      %v2548 = vlaneseq
      %v2549 = vshrl.u32 %v2548, 7
      %v2550 = vsub.s32 6, %v2549
      %v2551 = vrot.slane %v2520, %v2550
      %v2552 = vlaneseq
      %v2553 = vshrl.u32 %v2552, 7
      %v2554 = vsub.s32 7, %v2553
      %v2555 = vrot.slane %v2520, %v2554
      %v2556 = vlaneseq
      %v2557 = vshrl.u32 %v2556, 7
      %v2558 = vsub.s32 0, %v2557
      %v2559 = vrot.slane %v2521, %v2558
      %v2560 = vlaneseq
      %v2561 = vshrl.u32 %v2560, 7
      %v2562 = vsub.s32 1, %v2561
      %v2563 = vrot.slane %v2521, %v2562
      %v2574 = vmul.f32 %v2510, %v2527
      %v2575 = vmul.f32 %v2511, %v2531
      %v2576 = vmul.f32 %v2512, %v2535
      %v2577 = vmul.f32 %v2513, %v2539
      %v2578 = vmul.f32 %v2514, %v2543
      %v2579 = vmul.f32 %v2515, %v2547
      %v2580 = vmul.f32 %v2516, %v2551
      %v2581 = vmul.f32 %v2517, %v2555
      %v2582 = vmul.f32 %v2518, %v2559
      %v2583 = vmul.f32 %v2519, %v2563
      %v2584 = vld [vmem:[%s7] sm:$0xff]
      %v2585 = vld [vmem:[%s7 + $0x8] sm:$0x3]
      %v2588 = vlaneseq
      %v2589 = vshrl.u32 %v2588, 7
      %v2590 = vsub.s32 0, %v2589
      %v2591 = vrot.slane %v2584, %v2590
      %v2592 = vlaneseq
      %v2593 = vshrl.u32 %v2592, 7
      %v2594 = vsub.s32 1, %v2593
      %v2595 = vrot.slane %v2584, %v2594
      %v2596 = vlaneseq
      %v2597 = vshrl.u32 %v2596, 7
      %v2598 = vsub.s32 2, %v2597
      %v2599 = vrot.slane %v2584, %v2598
      %v2600 = vlaneseq
      %v2601 = vshrl.u32 %v2600, 7
      %v2602 = vsub.s32 3, %v2601
      %v2603 = vrot.slane %v2584, %v2602
      %v2604 = vlaneseq
      %v2605 = vshrl.u32 %v2604, 7
      %v2606 = vsub.s32 4, %v2605
      %v2607 = vrot.slane %v2584, %v2606
      %v2608 = vlaneseq
      %v2609 = vshrl.u32 %v2608, 7
      %v2610 = vsub.s32 5, %v2609
      %v2611 = vrot.slane %v2584, %v2610
      %v2612 = vlaneseq
      %v2613 = vshrl.u32 %v2612, 7
      %v2614 = vsub.s32 6, %v2613
      %v2615 = vrot.slane %v2584, %v2614
      %v2616 = vlaneseq
      %v2617 = vshrl.u32 %v2616, 7
      %v2618 = vsub.s32 7, %v2617
      %v2619 = vrot.slane %v2584, %v2618
      %v2620 = vlaneseq
      %v2621 = vshrl.u32 %v2620, 7
      %v2622 = vsub.s32 0, %v2621
      %v2623 = vrot.slane %v2585, %v2622
      %v2624 = vlaneseq
      %v2625 = vshrl.u32 %v2624, 7
      %v2626 = vsub.s32 1, %v2625
      %v2627 = vrot.slane %v2585, %v2626
      %v2638 = vadd.f32 %v2574, %v2591
      %v2639 = vadd.f32 %v2575, %v2595
      %v2640 = vadd.f32 %v2576, %v2599
      %v2641 = vadd.f32 %v2577, %v2603
      %v2642 = vadd.f32 %v2578, %v2607
      %v2643 = vadd.f32 %v2579, %v2611
      %v2644 = vadd.f32 %v2580, %v2615
      %v2645 = vadd.f32 %v2581, %v2619
      %v2646 = vadd.f32 %v2582, %v2623
      %v2647 = vadd.f32 %v2583, %v2627
      %v2648 = vpack.c.bf16 %v2638, %v2638
      %v2649 = vpack.c.bf16 %v2639, %v2639
      %v2650 = vpack.c.bf16 %v2640, %v2640
      %v2651 = vpack.c.bf16 %v2641, %v2641
      %v2652 = vpack.c.bf16 %v2642, %v2642
      %v2653 = vpack.c.bf16 %v2643, %v2643
      %v2654 = vpack.c.bf16 %v2644, %v2644
      %v2655 = vpack.c.bf16 %v2645, %v2645
      %v2656 = vpack.c.bf16 %v2646, %v2646
      %v2657 = vpack.c.bf16 %v2647, %v2647
      %v2658 = vld [vmem:[%s8] sm:$0xf]
      %v2659 = vld [vmem:[%s8 + $0x4] sm:$0xf]
      %v2660 = vld [vmem:[%s8 + $0x8] sm:$0xf]
      %v2661 = vld [vmem:[%s8 + $0xc] sm:$0xf]
      %v2662 = vld [vmem:[%s8 + $0x10] sm:$0xf]
      %v2663 = vld [vmem:[%s8 + $0x14] sm:$0xf]
      %v2664 = vld [vmem:[%s8 + $0x18] sm:$0xf]
      %v2665 = vld [vmem:[%s8 + $0x1c] sm:$0xf]
      %v2666 = vld [vmem:[%s8 + $0x20] sm:$0xf]
      %v2667 = vld [vmem:[%s8 + $0x24] sm:$0xf]
      %v2668 = vld [vmem:[%s8 + $0x28] sm:$0xf]
      %v2669 = vld [vmem:[%s8 + $0x2c] sm:$0xf]
      %v2670 = vld [vmem:[%s8 + $0x30] sm:$0xf]
      %v2671 = vld [vmem:[%s8 + $0x34] sm:$0xf]
      %v2672 = vld [vmem:[%s8 + $0x38] sm:$0xf]
      %v2673 = vld [vmem:[%s8 + $0x3c] sm:$0xf]
      %v2674 = vld [vmem:[%s8 + $0x40] sm:$0xf]
      %v2675 = vld [vmem:[%s8 + $0x44] sm:$0xf]
      %v2676 = vld [vmem:[%s8 + $0x48] sm:$0xf]
      %v2677 = vld [vmem:[%s8 + $0x4c] sm:$0xf]
      %v2678 = vld [vmem:[%s8 + $0x50] sm:$0xf]
      %v2679 = vld [vmem:[%s8 + $0x54] sm:$0xf]
      %v2680 = vld [vmem:[%s8 + $0x58] sm:$0xf]
      %v2681 = vld [vmem:[%s8 + $0x5c] sm:$0xf]
      %v2682 = vld [vmem:[%s8 + $0x60] sm:$0xf]
      %v2683 = vld [vmem:[%s8 + $0x64] sm:$0xf]
      %v2684 = vld [vmem:[%s8 + $0x68] sm:$0xf]
      %v2685 = vld [vmem:[%s8 + $0x6c] sm:$0xf]
      %v2686 = vld [vmem:[%s8 + $0x70] sm:$0xf]
      %v2687 = vld [vmem:[%s8 + $0x74] sm:$0xf]
      %v2688 = vld [vmem:[%s8 + $0x78] sm:$0xf]
      %v2689 = vld [vmem:[%s8 + $0x7c] sm:$0xf]
      %v2690 = vld [vmem:[%s8 + $0x80] sm:$0xf]
      %v2691 = vld [vmem:[%s8 + $0x84] sm:$0xf]
      %v2692 = vld [vmem:[%s8 + $0x88] sm:$0xf]
      %v2693 = vld [vmem:[%s8 + $0x8c] sm:$0xf]
      %v2694 = vld [vmem:[%s8 + $0x90] sm:$0xf]
      %v2695 = vld [vmem:[%s8 + $0x94] sm:$0xf]
      %v2696 = vld [vmem:[%s8 + $0x98] sm:$0xf]
      %v2697 = vld [vmem:[%s8 + $0x9c] sm:$0xf]
      %v2698 = vld [vmem:[%s8 + $0xa0] sm:$0xf]
      %v2699 = vld [vmem:[%s8 + $0xa4] sm:$0xf]
      %v2700 = vld [vmem:[%s8 + $0xa8] sm:$0xf]
      %v2701 = vld [vmem:[%s8 + $0xac] sm:$0xf]
      %v2702 = vld [vmem:[%s8 + $0xb0] sm:$0xf]
      %v2703 = vld [vmem:[%s8 + $0xb4] sm:$0xf]
      %v2704 = vld [vmem:[%s8 + $0xb8] sm:$0xf]
      %v2705 = vld [vmem:[%s8 + $0xbc] sm:$0xf]
      %v2706 = vld [vmem:[%s8 + $0xc0] sm:$0xf]
      %v2707 = vld [vmem:[%s8 + $0xc4] sm:$0xf]
      %v2708 = vld [vmem:[%s8 + $0xc8] sm:$0xf]
      %v2709 = vld [vmem:[%s8 + $0xcc] sm:$0xf]
      %v2710 = vld [vmem:[%s8 + $0xd0] sm:$0xf]
      %v2711 = vld [vmem:[%s8 + $0xd4] sm:$0xf]
      %v2712 = vld [vmem:[%s8 + $0xd8] sm:$0xf]
      %v2713 = vld [vmem:[%s8 + $0xdc] sm:$0xf]
      %v2714 = vld [vmem:[%s8 + $0xe0] sm:$0xf]
      %v2715 = vld [vmem:[%s8 + $0xe4] sm:$0xf]
      %v2716 = vld [vmem:[%s8 + $0xe8] sm:$0xf]
      %v2717 = vld [vmem:[%s8 + $0xec] sm:$0xf]
      %v2718 = vld [vmem:[%s8 + $0xf0] sm:$0xf]
      %v2719 = vld [vmem:[%s8 + $0xf4] sm:$0xf]
      %v2720 = vld [vmem:[%s8 + $0xf8] sm:$0xf]
      %v2721 = vld [vmem:[%s8 + $0xfc] sm:$0xf]
      %v2722 = vld [vmem:[%s8 + $0x100] sm:$0xf]
      %v2723 = vld [vmem:[%s8 + $0x104] sm:$0xf]
      %v2724 = vld [vmem:[%s8 + $0x108] sm:$0xf]
      %v2725 = vld [vmem:[%s8 + $0x10c] sm:$0xf]
      %v2726 = vld [vmem:[%s8 + $0x110] sm:$0xf]
      %v2727 = vld [vmem:[%s8 + $0x114] sm:$0xf]
      %v2728 = vld [vmem:[%s8 + $0x118] sm:$0xf]
      %v2729 = vld [vmem:[%s8 + $0x11c] sm:$0xf]
      %v2730 = vld [vmem:[%s8 + $0x120] sm:$0xf]
      %v2731 = vld [vmem:[%s8 + $0x124] sm:$0xf]
      %v2732 = vld [vmem:[%s8 + $0x128] sm:$0xf]
      %v2733 = vld [vmem:[%s8 + $0x12c] sm:$0xf]
      %v2734 = vld [vmem:[%s8 + $0x130] sm:$0xf]
      %v2735 = vld [vmem:[%s8 + $0x134] sm:$0xf]
      %v2736 = vld [vmem:[%s8 + $0x138] sm:$0xf]
      %v2737 = vld [vmem:[%s8 + $0x13c] sm:$0xf]
      %v2738 = vld [vmem:[%s8 + $0x140] sm:$0xf]
      %v2739 = vld [vmem:[%s8 + $0x144] sm:$0xf]
      %v2740 = vld [vmem:[%s8 + $0x148] sm:$0xf]
      %v2741 = vld [vmem:[%s8 + $0x14c] sm:$0xf]
      %v2742 = vld [vmem:[%s8 + $0x150] sm:$0xf]
      %v2743 = vld [vmem:[%s8 + $0x154] sm:$0xf]
      %v2744 = vld [vmem:[%s8 + $0x158] sm:$0xf]
      %v2745 = vld [vmem:[%s8 + $0x15c] sm:$0xf]
      %v2746 = vld [vmem:[%s8 + $0x160] sm:$0xf]
      %v2747 = vld [vmem:[%s8 + $0x164] sm:$0xf]
      %v2748 = vld [vmem:[%s8 + $0x168] sm:$0xf]
      %v2749 = vld [vmem:[%s8 + $0x16c] sm:$0xf]
      %v2750 = vld [vmem:[%s8 + $0x170] sm:$0xf]
      %v2751 = vld [vmem:[%s8 + $0x174] sm:$0xf]
      %v2752 = vld [vmem:[%s8 + $0x178] sm:$0xf]
      %v2753 = vld [vmem:[%s8 + $0x17c] sm:$0xf]
      %v2754 = vld [vmem:[%s8 + $0x180] sm:$0xf]
      %v2755 = vld [vmem:[%s8 + $0x184] sm:$0xf]
      %v2756 = vld [vmem:[%s8 + $0x188] sm:$0xf]
      %v2757 = vld [vmem:[%s8 + $0x18c] sm:$0xf]
      %v2758 = vld [vmem:[%s8 + $0x190] sm:$0xf]
      %v2759 = vld [vmem:[%s8 + $0x194] sm:$0xf]
      %v2760 = vld [vmem:[%s8 + $0x198] sm:$0xf]
      %v2761 = vld [vmem:[%s8 + $0x19c] sm:$0xf]
      %v2762 = vld [vmem:[%s8 + $0x1a0] sm:$0xf]
      %v2763 = vld [vmem:[%s8 + $0x1a4] sm:$0xf]
      %v2764 = vld [vmem:[%s8 + $0x1a8] sm:$0xf]
      %v2765 = vld [vmem:[%s8 + $0x1ac] sm:$0xf]
      %v2766 = vld [vmem:[%s8 + $0x1b0] sm:$0xf]
      %v2767 = vld [vmem:[%s8 + $0x1b4] sm:$0xf]
      %v2768 = vld [vmem:[%s8 + $0x1b8] sm:$0xf]
      %v2769 = vld [vmem:[%s8 + $0x1bc] sm:$0xf]
      %v2770 = vld [vmem:[%s8 + $0x1c0] sm:$0xf]
      %v2771 = vld [vmem:[%s8 + $0x1c4] sm:$0xf]
      %v2772 = vld [vmem:[%s8 + $0x1c8] sm:$0xf]
      %v2773 = vld [vmem:[%s8 + $0x1cc] sm:$0xf]
      %v2774 = vld [vmem:[%s8 + $0x1d0] sm:$0xf]
      %v2775 = vld [vmem:[%s8 + $0x1d4] sm:$0xf]
      %v2776 = vld [vmem:[%s8 + $0x1d8] sm:$0xf]
      %v2777 = vld [vmem:[%s8 + $0x1dc] sm:$0xf]
      %v2778 = vld [vmem:[%s8 + $0x1e0] sm:$0xf]
      %v2779 = vld [vmem:[%s8 + $0x1e4] sm:$0xf]
      %v2780 = vld [vmem:[%s8 + $0x1e8] sm:$0xf]
      %v2781 = vld [vmem:[%s8 + $0x1ec] sm:$0xf]
      %v2782 = vld [vmem:[%s8 + $0x1f0] sm:$0xf]
      %v2783 = vld [vmem:[%s8 + $0x1f4] sm:$0xf]
      %v2784 = vld [vmem:[%s8 + $0x1f8] sm:$0xf]
      %v2785 = vld [vmem:[%s8 + $0x1fc] sm:$0xf]
      %v2786 = vld [vmem:[%s8 + $0x200] sm:$0xf]
      %v2787 = vld [vmem:[%s8 + $0x204] sm:$0xf]
      %v2788 = vld [vmem:[%s8 + $0x208] sm:$0xf]
      %v2789 = vld [vmem:[%s8 + $0x20c] sm:$0xf]
      %v2790 = vld [vmem:[%s8 + $0x210] sm:$0xf]
      %v2791 = vld [vmem:[%s8 + $0x214] sm:$0xf]
      %v2792 = vld [vmem:[%s8 + $0x218] sm:$0xf]
      %v2793 = vld [vmem:[%s8 + $0x21c] sm:$0xf]
      %v2794 = vld [vmem:[%s8 + $0x220] sm:$0xf]
      %v2795 = vld [vmem:[%s8 + $0x224] sm:$0xf]
      %v2796 = vld [vmem:[%s8 + $0x228] sm:$0xf]
      %v2797 = vld [vmem:[%s8 + $0x22c] sm:$0xf]
      %v2798 = vld [vmem:[%s8 + $0x230] sm:$0xf]
      %v2799 = vld [vmem:[%s8 + $0x234] sm:$0xf]
      %v2800 = vld [vmem:[%s8 + $0x238] sm:$0xf]
      %v2801 = vld [vmem:[%s8 + $0x23c] sm:$0xf]
      %v2802 = vld [vmem:[%s8 + $0x240] sm:$0xf]
      %v2803 = vld [vmem:[%s8 + $0x244] sm:$0xf]
      %v2804 = vld [vmem:[%s8 + $0x248] sm:$0xf]
      %v2805 = vld [vmem:[%s8 + $0x24c] sm:$0xf]
      %v2806 = vld [vmem:[%s8 + $0x250] sm:$0xf]
      %v2807 = vld [vmem:[%s8 + $0x254] sm:$0xf]
      %v2808 = vld [vmem:[%s8 + $0x258] sm:$0xf]
      %v2809 = vld [vmem:[%s8 + $0x25c] sm:$0xf]
      %v2810 = vld [vmem:[%s8 + $0x260] sm:$0xf]
      %v2811 = vld [vmem:[%s8 + $0x264] sm:$0xf]
      %v2812 = vld [vmem:[%s8 + $0x268] sm:$0xf]
      %v2813 = vld [vmem:[%s8 + $0x26c] sm:$0xf]
      %v2814 = vld [vmem:[%s8 + $0x270] sm:$0xf]
      %v2815 = vld [vmem:[%s8 + $0x274] sm:$0xf]
      %v2816 = vld [vmem:[%s8 + $0x278] sm:$0xf]
      %v2817 = vld [vmem:[%s8 + $0x27c] sm:$0xf]
      %v2818 = vld [vmem:[%s9] sm:$0x1]
      %v2820 = vlaneseq
      %v2821 = vshrl.u32 %v2820, 7
      %v2822 = vsub.s32 0, %v2821
      %v2823 = vrot.slane %v2818, %v2822
      %v2985 = vunpack.c.l.b16 %v2658
      %v2986 = vunpack.c.l.b16 %v2659
      %v2987 = vunpack.c.l.b16 %v2660
      %v2988 = vunpack.c.l.b16 %v2661
      %v2989 = vunpack.c.l.b16 %v2662
      %v2990 = vunpack.c.l.b16 %v2663
      %v2991 = vunpack.c.l.b16 %v2664
      %v2992 = vunpack.c.l.b16 %v2665
      %v2993 = vunpack.c.l.b16 %v2666
      %v2994 = vunpack.c.l.b16 %v2667
      %v2995 = vunpack.c.l.b16 %v2668
      %v2996 = vunpack.c.l.b16 %v2669
      %v2997 = vunpack.c.l.b16 %v2670
      %v2998 = vunpack.c.l.b16 %v2671
      %v2999 = vunpack.c.l.b16 %v2672
      %v3000 = vunpack.c.l.b16 %v2673
      %v3001 = vunpack.c.l.b16 %v2674
      %v3002 = vunpack.c.l.b16 %v2675
      %v3003 = vunpack.c.l.b16 %v2676
      %v3004 = vunpack.c.l.b16 %v2677
      %v3005 = vunpack.c.l.b16 %v2678
      %v3006 = vunpack.c.l.b16 %v2679
      %v3007 = vunpack.c.l.b16 %v2680
      %v3008 = vunpack.c.l.b16 %v2681
      %v3009 = vunpack.c.l.b16 %v2682
      %v3010 = vunpack.c.l.b16 %v2683
      %v3011 = vunpack.c.l.b16 %v2684
      %v3012 = vunpack.c.l.b16 %v2685
      %v3013 = vunpack.c.l.b16 %v2686
      %v3014 = vunpack.c.l.b16 %v2687
      %v3015 = vunpack.c.l.b16 %v2688
      %v3016 = vunpack.c.l.b16 %v2689
      %v3017 = vunpack.c.l.b16 %v2690
      %v3018 = vunpack.c.l.b16 %v2691
      %v3019 = vunpack.c.l.b16 %v2692
      %v3020 = vunpack.c.l.b16 %v2693
      %v3021 = vunpack.c.l.b16 %v2694
      %v3022 = vunpack.c.l.b16 %v2695
      %v3023 = vunpack.c.l.b16 %v2696
      %v3024 = vunpack.c.l.b16 %v2697
      %v3025 = vunpack.c.l.b16 %v2698
      %v3026 = vunpack.c.l.b16 %v2699
      %v3027 = vunpack.c.l.b16 %v2700
      %v3028 = vunpack.c.l.b16 %v2701
      %v3029 = vunpack.c.l.b16 %v2702
      %v3030 = vunpack.c.l.b16 %v2703
      %v3031 = vunpack.c.l.b16 %v2704
      %v3032 = vunpack.c.l.b16 %v2705
      %v3033 = vunpack.c.l.b16 %v2706
      %v3034 = vunpack.c.l.b16 %v2707
      %v3035 = vunpack.c.l.b16 %v2708
      %v3036 = vunpack.c.l.b16 %v2709
      %v3037 = vunpack.c.l.b16 %v2710
      %v3038 = vunpack.c.l.b16 %v2711
      %v3039 = vunpack.c.l.b16 %v2712
      %v3040 = vunpack.c.l.b16 %v2713
      %v3041 = vunpack.c.l.b16 %v2714
      %v3042 = vunpack.c.l.b16 %v2715
      %v3043 = vunpack.c.l.b16 %v2716
      %v3044 = vunpack.c.l.b16 %v2717
      %v3045 = vunpack.c.l.b16 %v2718
      %v3046 = vunpack.c.l.b16 %v2719
      %v3047 = vunpack.c.l.b16 %v2720
      %v3048 = vunpack.c.l.b16 %v2721
      %v3049 = vunpack.c.l.b16 %v2722
      %v3050 = vunpack.c.l.b16 %v2723
      %v3051 = vunpack.c.l.b16 %v2724
      %v3052 = vunpack.c.l.b16 %v2725
      %v3053 = vunpack.c.l.b16 %v2726
      %v3054 = vunpack.c.l.b16 %v2727
      %v3055 = vunpack.c.l.b16 %v2728
      %v3056 = vunpack.c.l.b16 %v2729
      %v3057 = vunpack.c.l.b16 %v2730
      %v3058 = vunpack.c.l.b16 %v2731
      %v3059 = vunpack.c.l.b16 %v2732
      %v3060 = vunpack.c.l.b16 %v2733
      %v3061 = vunpack.c.l.b16 %v2734
      %v3062 = vunpack.c.l.b16 %v2735
      %v3063 = vunpack.c.l.b16 %v2736
      %v3064 = vunpack.c.l.b16 %v2737
      %v3065 = vunpack.c.l.b16 %v2738
      %v3066 = vunpack.c.l.b16 %v2739
      %v3067 = vunpack.c.l.b16 %v2740
      %v3068 = vunpack.c.l.b16 %v2741
      %v3069 = vunpack.c.l.b16 %v2742
      %v3070 = vunpack.c.l.b16 %v2743
      %v3071 = vunpack.c.l.b16 %v2744
      %v3072 = vunpack.c.l.b16 %v2745
      %v3073 = vunpack.c.l.b16 %v2746
      %v3074 = vunpack.c.l.b16 %v2747
      %v3075 = vunpack.c.l.b16 %v2748
      %v3076 = vunpack.c.l.b16 %v2749
      %v3077 = vunpack.c.l.b16 %v2750
      %v3078 = vunpack.c.l.b16 %v2751
      %v3079 = vunpack.c.l.b16 %v2752
      %v3080 = vunpack.c.l.b16 %v2753
      %v3081 = vunpack.c.l.b16 %v2754
      %v3082 = vunpack.c.l.b16 %v2755
      %v3083 = vunpack.c.l.b16 %v2756
      %v3084 = vunpack.c.l.b16 %v2757
      %v3085 = vunpack.c.l.b16 %v2758
      %v3086 = vunpack.c.l.b16 %v2759
      %v3087 = vunpack.c.l.b16 %v2760
      %v3088 = vunpack.c.l.b16 %v2761
      %v3089 = vunpack.c.l.b16 %v2762
      %v3090 = vunpack.c.l.b16 %v2763
      %v3091 = vunpack.c.l.b16 %v2764
      %v3092 = vunpack.c.l.b16 %v2765
      %v3093 = vunpack.c.l.b16 %v2766
      %v3094 = vunpack.c.l.b16 %v2767
      %v3095 = vunpack.c.l.b16 %v2768
      %v3096 = vunpack.c.l.b16 %v2769
      %v3097 = vunpack.c.l.b16 %v2770
      %v3098 = vunpack.c.l.b16 %v2771
      %v3099 = vunpack.c.l.b16 %v2772
      %v3100 = vunpack.c.l.b16 %v2773
      %v3101 = vunpack.c.l.b16 %v2774
      %v3102 = vunpack.c.l.b16 %v2775
      %v3103 = vunpack.c.l.b16 %v2776
      %v3104 = vunpack.c.l.b16 %v2777
      %v3105 = vunpack.c.l.b16 %v2778
      %v3106 = vunpack.c.l.b16 %v2779
      %v3107 = vunpack.c.l.b16 %v2780
      %v3108 = vunpack.c.l.b16 %v2781
      %v3109 = vunpack.c.l.b16 %v2782
      %v3110 = vunpack.c.l.b16 %v2783
      %v3111 = vunpack.c.l.b16 %v2784
      %v3112 = vunpack.c.l.b16 %v2785
      %v3113 = vunpack.c.l.b16 %v2786
      %v3114 = vunpack.c.l.b16 %v2787
      %v3115 = vunpack.c.l.b16 %v2788
      %v3116 = vunpack.c.l.b16 %v2789
      %v3117 = vunpack.c.l.b16 %v2790
      %v3118 = vunpack.c.l.b16 %v2791
      %v3119 = vunpack.c.l.b16 %v2792
      %v3120 = vunpack.c.l.b16 %v2793
      %v3121 = vunpack.c.l.b16 %v2794
      %v3122 = vunpack.c.l.b16 %v2795
      %v3123 = vunpack.c.l.b16 %v2796
      %v3124 = vunpack.c.l.b16 %v2797
      %v3125 = vunpack.c.l.b16 %v2798
      %v3126 = vunpack.c.l.b16 %v2799
      %v3127 = vunpack.c.l.b16 %v2800
      %v3128 = vunpack.c.l.b16 %v2801
      %v3129 = vunpack.c.l.b16 %v2802
      %v3130 = vunpack.c.l.b16 %v2803
      %v3131 = vunpack.c.l.b16 %v2804
      %v3132 = vunpack.c.l.b16 %v2805
      %v3133 = vunpack.c.l.b16 %v2806
      %v3134 = vunpack.c.l.b16 %v2807
      %v3135 = vunpack.c.l.b16 %v2808
      %v3136 = vunpack.c.l.b16 %v2809
      %v3137 = vunpack.c.l.b16 %v2810
      %v3138 = vunpack.c.l.b16 %v2811
      %v3139 = vunpack.c.l.b16 %v2812
      %v3140 = vunpack.c.l.b16 %v2813
      %v3141 = vunpack.c.l.b16 %v2814
      %v3142 = vunpack.c.l.b16 %v2815
      %v3143 = vunpack.c.l.b16 %v2816
      %v3144 = vunpack.c.l.b16 %v2817
      %v3145 = vpack.c.b16 %v2986, %v2985
      %v3146 = vpack.c.b16 %v2988, %v2987
      %v3147 = vpack.c.b16 %v2990, %v2989
      %v3148 = vpack.c.b16 %v2992, %v2991
      %v3149 = vpack.c.b16 %v2994, %v2993
      %v3150 = vpack.c.b16 %v2996, %v2995
      %v3151 = vpack.c.b16 %v2998, %v2997
      %v3152 = vpack.c.b16 %v3000, %v2999
      %v3153 = vpack.c.b16 %v3002, %v3001
      %v3154 = vpack.c.b16 %v3004, %v3003
      %v3155 = vpack.c.b16 %v3006, %v3005
      %v3156 = vpack.c.b16 %v3008, %v3007
      %v3157 = vpack.c.b16 %v3010, %v3009
      %v3158 = vpack.c.b16 %v3012, %v3011
      %v3159 = vpack.c.b16 %v3014, %v3013
      %v3160 = vpack.c.b16 %v3016, %v3015
      %v3161 = vpack.c.b16 %v3018, %v3017
      %v3162 = vpack.c.b16 %v3020, %v3019
      %v3163 = vpack.c.b16 %v3022, %v3021
      %v3164 = vpack.c.b16 %v3024, %v3023
      %v3165 = vpack.c.b16 %v3026, %v3025
      %v3166 = vpack.c.b16 %v3028, %v3027
      %v3167 = vpack.c.b16 %v3030, %v3029
      %v3168 = vpack.c.b16 %v3032, %v3031
      %v3169 = vpack.c.b16 %v3034, %v3033
      %v3170 = vpack.c.b16 %v3036, %v3035
      %v3171 = vpack.c.b16 %v3038, %v3037
      %v3172 = vpack.c.b16 %v3040, %v3039
      %v3173 = vpack.c.b16 %v3042, %v3041
      %v3174 = vpack.c.b16 %v3044, %v3043
      %v3175 = vpack.c.b16 %v3046, %v3045
      %v3176 = vpack.c.b16 %v3048, %v3047
      %v3177 = vpack.c.b16 %v3050, %v3049
      %v3178 = vpack.c.b16 %v3052, %v3051
      %v3179 = vpack.c.b16 %v3054, %v3053
      %v3180 = vpack.c.b16 %v3056, %v3055
      %v3181 = vpack.c.b16 %v3058, %v3057
      %v3182 = vpack.c.b16 %v3060, %v3059
      %v3183 = vpack.c.b16 %v3062, %v3061
      %v3184 = vpack.c.b16 %v3064, %v3063
      %v3185 = vpack.c.b16 %v3066, %v3065
      %v3186 = vpack.c.b16 %v3068, %v3067
      %v3187 = vpack.c.b16 %v3070, %v3069
      %v3188 = vpack.c.b16 %v3072, %v3071
      %v3189 = vpack.c.b16 %v3074, %v3073
      %v3190 = vpack.c.b16 %v3076, %v3075
      %v3191 = vpack.c.b16 %v3078, %v3077
      %v3192 = vpack.c.b16 %v3080, %v3079
      %v3193 = vpack.c.b16 %v3082, %v3081
      %v3194 = vpack.c.b16 %v3084, %v3083
      %v3195 = vpack.c.b16 %v3086, %v3085
      %v3196 = vpack.c.b16 %v3088, %v3087
      %v3197 = vpack.c.b16 %v3090, %v3089
      %v3198 = vpack.c.b16 %v3092, %v3091
      %v3199 = vpack.c.b16 %v3094, %v3093
      %v3200 = vpack.c.b16 %v3096, %v3095
      %v3201 = vpack.c.b16 %v3098, %v3097
      %v3202 = vpack.c.b16 %v3100, %v3099
      %v3203 = vpack.c.b16 %v3102, %v3101
      %v3204 = vpack.c.b16 %v3104, %v3103
      %v3205 = vpack.c.b16 %v3106, %v3105
      %v3206 = vpack.c.b16 %v3108, %v3107
      %v3207 = vpack.c.b16 %v3110, %v3109
      %v3208 = vpack.c.b16 %v3112, %v3111
      %v3209 = vpack.c.b16 %v3114, %v3113
      %v3210 = vpack.c.b16 %v3116, %v3115
      %v3211 = vpack.c.b16 %v3118, %v3117
      %v3212 = vpack.c.b16 %v3120, %v3119
      %v3213 = vpack.c.b16 %v3122, %v3121
      %v3214 = vpack.c.b16 %v3124, %v3123
      %v3215 = vpack.c.b16 %v3126, %v3125
      %v3216 = vpack.c.b16 %v3128, %v3127
      %v3217 = vpack.c.b16 %v3130, %v3129
      %v3218 = vpack.c.b16 %v3132, %v3131
      %v3219 = vpack.c.b16 %v3134, %v3133
      %v3220 = vpack.c.b16 %v3136, %v3135
      %v3221 = vpack.c.b16 %v3138, %v3137
      %v3222 = vpack.c.b16 %v3140, %v3139
      %v3223 = vpack.c.b16 %v3142, %v3141
      %v3224 = vpack.c.b16 %v3144, %v3143
      %3305 = vmatprep.subr.bf16.mxu0 0
      %3306 = vmatpush1.bf16.msra.mxu0 %v3145
      %3307 = vmatprep.subr.bf16.mxu0 0
      %3308 = vmatpush1.bf16.msra.mxu0 %v3146
      %3309 = vmatprep.subr.bf16.mxu0 0
      %3310 = vmatpush1.bf16.msra.mxu0 %v3147
      %3311 = vmatprep.subr.bf16.mxu0 0
      %3312 = vmatpush1.bf16.msra.mxu0 %v3148
      %3313 = vmatprep.subr.bf16.mxu0 0
      %3314 = vmatpush1.bf16.msra.mxu0 %v3149
      %3315 = vmatprep.subr.bf16.mxu0 0
      %3316 = vmatpush1.bf16.msra.mxu0 %v3150
      %3317 = vmatprep.subr.bf16.mxu0 0
      %3318 = vmatpush1.bf16.msra.mxu0 %v3151
      %3319 = vmatprep.subr.bf16.mxu0 0
      %3320 = vmatpush1.bf16.msra.mxu0 %v3152
      %3321 = vmatprep.subr.bf16.mxu0 0
      %3322 = vmatpush1.bf16.msra.mxu0 %v3153
      %3323 = vmatprep.subr.bf16.mxu0 0
      %3324 = vmatpush1.bf16.msra.mxu0 %v3154
      %3325 = vmatprep.subr.bf16.mxu0 0
      %3326 = vmatpush1.bf16.msra.mxu0 %v3155
      %3327 = vmatprep.subr.bf16.mxu0 0
      %3328 = vmatpush1.bf16.msra.mxu0 %v3156
      %3329 = vmatprep.subr.bf16.mxu0 0
      %3330 = vmatpush1.bf16.msra.mxu0 %v3157
      %3331 = vmatprep.subr.bf16.mxu0 0
      %3332 = vmatpush1.bf16.msra.mxu0 %v3158
      %3333 = vmatprep.subr.bf16.mxu0 0
      %3334 = vmatpush1.bf16.msra.mxu0 %v3159
      %3335 = vmatprep.subr.bf16.mxu0 0
      %3336 = vmatpush1.bf16.msra.mxu0 %v3160
      %3337 = vmatprep.mubr.bf16.mxu0 %v2649
      %3338 = vmatmul.mubr.bf16.gmra.mrb[0].mxu0 %v2648
      %v3339 = vpop.f32.mrb[0].mxu0
      %v3340 = vadd.f32 %v2823, %v3339
      %v3341 = vpop.f32.mrb[0].mxu0
      %v3342 = vpop.f32.mrb[0].mxu0
      %v3343 = vpop.f32.mrb[0].mxu0
      %3344 = vdwg.mxu0
      %3345 = vmatprep.subr.bf16.mxu0 0
      %3346 = vmatpush1.bf16.msra.mxu0 %v3161
      %3347 = vmatprep.subr.bf16.mxu0 0
      %3348 = vmatpush1.bf16.msra.mxu0 %v3162
      %3349 = vmatprep.subr.bf16.mxu0 0
      %3350 = vmatpush1.bf16.msra.mxu0 %v3163
      %3351 = vmatprep.subr.bf16.mxu0 0
      %3352 = vmatpush1.bf16.msra.mxu0 %v3164
      %3353 = vmatprep.subr.bf16.mxu0 0
      %3354 = vmatpush1.bf16.msra.mxu0 %v3165
      %3355 = vmatprep.subr.bf16.mxu0 0
      %3356 = vmatpush1.bf16.msra.mxu0 %v3166
      %3357 = vmatprep.subr.bf16.mxu0 0
      %3358 = vmatpush1.bf16.msra.mxu0 %v3167
      %3359 = vmatprep.subr.bf16.mxu0 0
      %3360 = vmatpush1.bf16.msra.mxu0 %v3168
      %3361 = vmatprep.subr.bf16.mxu0 0
      %3362 = vmatpush1.bf16.msra.mxu0 %v3169
      %3363 = vmatprep.subr.bf16.mxu0 0
      %3364 = vmatpush1.bf16.msra.mxu0 %v3170
      %3365 = vmatprep.subr.bf16.mxu0 0
      %3366 = vmatpush1.bf16.msra.mxu0 %v3171
      %3367 = vmatprep.subr.bf16.mxu0 0
      %3368 = vmatpush1.bf16.msra.mxu0 %v3172
      %3369 = vmatprep.subr.bf16.mxu0 0
      %3370 = vmatpush1.bf16.msra.mxu0 %v3173
      %3371 = vmatprep.subr.bf16.mxu0 0
      %3372 = vmatpush1.bf16.msra.mxu0 %v3174
      %3373 = vmatprep.subr.bf16.mxu0 0
      %3374 = vmatpush1.bf16.msra.mxu0 %v3175
      %3375 = vmatprep.subr.bf16.mxu0 0
      %3376 = vmatpush1.bf16.msra.mxu0 %v3176
      %3377 = vmatprep.mubr.bf16.mxu0 %v2651
      %3378 = vmatmul.mubr.bf16.gmra.mrb[0].mxu0 %v2650
      %v3379 = vpop.f32.mrb[0].mxu0
      %v3380 = vadd.f32 %v3340, %v3379
      %v3381 = vpop.f32.mrb[0].mxu0
      %v3382 = vpop.f32.mrb[0].mxu0
      %v3383 = vpop.f32.mrb[0].mxu0
      %3384 = vdwg.mxu0
      %3385 = vmatprep.subr.bf16.mxu0 0
      %3386 = vmatpush1.bf16.msra.mxu0 %v3177
      %3387 = vmatprep.subr.bf16.mxu0 0
      %3388 = vmatpush1.bf16.msra.mxu0 %v3178
      %3389 = vmatprep.subr.bf16.mxu0 0
      %3390 = vmatpush1.bf16.msra.mxu0 %v3179
      %3391 = vmatprep.subr.bf16.mxu0 0
      %3392 = vmatpush1.bf16.msra.mxu0 %v3180
      %3393 = vmatprep.subr.bf16.mxu0 0
      %3394 = vmatpush1.bf16.msra.mxu0 %v3181
      %3395 = vmatprep.subr.bf16.mxu0 0
      %3396 = vmatpush1.bf16.msra.mxu0 %v3182
      %3397 = vmatprep.subr.bf16.mxu0 0
      %3398 = vmatpush1.bf16.msra.mxu0 %v3183
      %3399 = vmatprep.subr.bf16.mxu0 0
      %3400 = vmatpush1.bf16.msra.mxu0 %v3184
      %3401 = vmatprep.subr.bf16.mxu0 0
      %3402 = vmatpush1.bf16.msra.mxu0 %v3185
      %3403 = vmatprep.subr.bf16.mxu0 0
      %3404 = vmatpush1.bf16.msra.mxu0 %v3186
      %3405 = vmatprep.subr.bf16.mxu0 0
      %3406 = vmatpush1.bf16.msra.mxu0 %v3187
      %3407 = vmatprep.subr.bf16.mxu0 0
      %3408 = vmatpush1.bf16.msra.mxu0 %v3188
      %3409 = vmatprep.subr.bf16.mxu0 0
      %3410 = vmatpush1.bf16.msra.mxu0 %v3189
      %3411 = vmatprep.subr.bf16.mxu0 0
      %3412 = vmatpush1.bf16.msra.mxu0 %v3190
      %3413 = vmatprep.subr.bf16.mxu0 0
      %3414 = vmatpush1.bf16.msra.mxu0 %v3191
      %3415 = vmatprep.subr.bf16.mxu0 0
      %3416 = vmatpush1.bf16.msra.mxu0 %v3192
      %3417 = vmatprep.mubr.bf16.mxu0 %v2653
      %3418 = vmatmul.mubr.bf16.gmra.mrb[0].mxu0 %v2652
      %v3419 = vpop.f32.mrb[0].mxu0
      %v3420 = vadd.f32 %v3380, %v3419
      %v3421 = vpop.f32.mrb[0].mxu0
      %v3422 = vpop.f32.mrb[0].mxu0
      %v3423 = vpop.f32.mrb[0].mxu0
      %3424 = vdwg.mxu0
      %3425 = vmatprep.subr.bf16.mxu0 0
      %3426 = vmatpush1.bf16.msra.mxu0 %v3193
      %3427 = vmatprep.subr.bf16.mxu0 0
      %3428 = vmatpush1.bf16.msra.mxu0 %v3194
      %3429 = vmatprep.subr.bf16.mxu0 0
      %3430 = vmatpush1.bf16.msra.mxu0 %v3195
      %3431 = vmatprep.subr.bf16.mxu0 0
      %3432 = vmatpush1.bf16.msra.mxu0 %v3196
      %3433 = vmatprep.subr.bf16.mxu0 0
      %3434 = vmatpush1.bf16.msra.mxu0 %v3197
      %3435 = vmatprep.subr.bf16.mxu0 0
      %3436 = vmatpush1.bf16.msra.mxu0 %v3198
      %3437 = vmatprep.subr.bf16.mxu0 0
      %3438 = vmatpush1.bf16.msra.mxu0 %v3199
      %3439 = vmatprep.subr.bf16.mxu0 0
      %3440 = vmatpush1.bf16.msra.mxu0 %v3200
      %3441 = vmatprep.subr.bf16.mxu0 0
      %3442 = vmatpush1.bf16.msra.mxu0 %v3201
      %3443 = vmatprep.subr.bf16.mxu0 0
      %3444 = vmatpush1.bf16.msra.mxu0 %v3202
      %3445 = vmatprep.subr.bf16.mxu0 0
      %3446 = vmatpush1.bf16.msra.mxu0 %v3203
      %3447 = vmatprep.subr.bf16.mxu0 0
      %3448 = vmatpush1.bf16.msra.mxu0 %v3204
      %3449 = vmatprep.subr.bf16.mxu0 0
      %3450 = vmatpush1.bf16.msra.mxu0 %v3205
      %3451 = vmatprep.subr.bf16.mxu0 0
      %3452 = vmatpush1.bf16.msra.mxu0 %v3206
      %3453 = vmatprep.subr.bf16.mxu0 0
      %3454 = vmatpush1.bf16.msra.mxu0 %v3207
      %3455 = vmatprep.subr.bf16.mxu0 0
      %3456 = vmatpush1.bf16.msra.mxu0 %v3208
      %3457 = vmatprep.mubr.bf16.mxu0 %v2655
      %3458 = vmatmul.mubr.bf16.gmra.mrb[0].mxu0 %v2654
      %v3459 = vpop.f32.mrb[0].mxu0
      %v3460 = vadd.f32 %v3420, %v3459
      %v3461 = vpop.f32.mrb[0].mxu0
      %v3462 = vpop.f32.mrb[0].mxu0
      %v3463 = vpop.f32.mrb[0].mxu0
      %3464 = vdwg.mxu0
      %3465 = vmatprep.subr.bf16.mxu0 0
      %3466 = vmatpush1.bf16.msra.mxu0 %v3209
      %3467 = vmatprep.subr.bf16.mxu0 0
      %3468 = vmatpush1.bf16.msra.mxu0 %v3210
      %3469 = vmatprep.subr.bf16.mxu0 0
      %3470 = vmatpush1.bf16.msra.mxu0 %v3211
      %3471 = vmatprep.subr.bf16.mxu0 0
      %3472 = vmatpush1.bf16.msra.mxu0 %v3212
      %3473 = vmatprep.subr.bf16.mxu0 0
      %3474 = vmatpush1.bf16.msra.mxu0 %v3213
      %3475 = vmatprep.subr.bf16.mxu0 0
      %3476 = vmatpush1.bf16.msra.mxu0 %v3214
      %3477 = vmatprep.subr.bf16.mxu0 0
      %3478 = vmatpush1.bf16.msra.mxu0 %v3215
      %3479 = vmatprep.subr.bf16.mxu0 0
      %3480 = vmatpush1.bf16.msra.mxu0 %v3216
      %3481 = vmatprep.subr.bf16.mxu0 0
      %3482 = vmatpush1.bf16.msra.mxu0 %v3217
      %3483 = vmatprep.subr.bf16.mxu0 0
      %3484 = vmatpush1.bf16.msra.mxu0 %v3218
      %3485 = vmatprep.subr.bf16.mxu0 0
      %3486 = vmatpush1.bf16.msra.mxu0 %v3219
      %3487 = vmatprep.subr.bf16.mxu0 0
      %3488 = vmatpush1.bf16.msra.mxu0 %v3220
      %3489 = vmatprep.subr.bf16.mxu0 0
      %3490 = vmatpush1.bf16.msra.mxu0 %v3221
      %3491 = vmatprep.subr.bf16.mxu0 0
      %3492 = vmatpush1.bf16.msra.mxu0 %v3222
      %3493 = vmatprep.subr.bf16.mxu0 0
      %3494 = vmatpush1.bf16.msra.mxu0 %v3223
      %3495 = vmatprep.subr.bf16.mxu0 0
      %3496 = vmatpush1.bf16.msra.mxu0 %v3224
      %3497 = vmatprep.mubr.bf16.mxu0 %v2657
      %3498 = vmatmul.mubr.bf16.gmra.mrb[0].mxu0 %v2656
      %v3499 = vpop.f32.mrb[0].mxu0
      %v3500 = vadd.f32 %v3460, %v3499
      %v3501 = vpop.f32.mrb[0].mxu0
      %v3502 = vpop.f32.mrb[0].mxu0
      %v3503 = vpop.f32.mrb[0].mxu0
      %3504 = vdwg.mxu0
      %3505 = vst [vmem:[%s362] sm:$0xff] %v3500
      %p3506 = scmp.lt.s32.totalorder %s21, 1
      %s3507 = scalar_select %p3506, %s21, 1
      %s3508 = smul.addr %s3507, 8
      %s3509 = scalar_lea.vmem %s10, %s3508
      // Predicated region
      $region61: #{video_classifier_forward.2} parent=59 // pred_check
        %p3510 = pneg %p254
      $region62: #{video_classifier_forward.2} parent=59 // pred_check_branch
        %3512 = sbr.rel (%p3510) target = $region64
      $region63: #{video_classifier_forward.2} parent=59 // pred_region
        _
      $region64: #{video_classifier_forward.2} parent=59 // pred_fallthru
        _
    $region60: #{video_classifier_forward.2} parent=5 // pred_fallthru
      _
    %p3513 = scmp.le.s32.totalorder 2, %s16
    // Predicated region
    $region65: #{video_classifier_forward.2} parent=5 // pred_check
      %p3514 = pneg %p3513
    $region66: #{video_classifier_forward.2} parent=5 // pred_check_branch
      %3516 = sbr.rel (%p3514) target = $region68
    $region67: #{video_classifier_forward.2} parent=5 // pred_region
      %s3517 = ssub.s32 %s16, 2
      // Predicated region
      $region69: #{video_classifier_forward.2} parent=67 // pred_check
        %p3518 = pneg %p260
      $region70: #{video_classifier_forward.2} parent=67 // pred_check_branch
        %3520 = sbr.rel (%p3518) target = $region72
      $region71: #{video_classifier_forward.2} parent=67 // pred_region
        %p3521 = scmp.lt.s32.totalorder %s22, 1
        %s3522 = scalar_select %p3521, %s22, 1
        %s3523 = smul.addr %s3522, 8
        %s3524 = scalar_lea.vmem %s10, %s3523
      $region72: #{video_classifier_forward.2} parent=67 // pred_fallthru
        _
    $region68: #{video_classifier_forward.2} parent=5 // pred_fallthru
      _
  $region6: #{video_classifier_forward.2} parent=0 // loop_footer
    %s20 = sadd.s32 1, %s16
  $region7: #{video_classifier_forward.2} parent=0 // loop_footer_branch
    %15 = sbr.rel target = $region3
  $region8: #{video_classifier_forward.2} parent=0 // loop_exit
    _

// kernel: video_classifier_forward.3
$region0: #{video_classifier_forward.3}
  #allocation0 [shape = 'u32[]', space=smem, size = 0x4, offset = 0x4, fixed_abs, tag = 'smem constant byte address 0x4 - core index']
  #allocation1 [shape = 'u32[144,128]{1,0:T(1,128)}', space=vmem, size = 0x12000, scoped, tag = 'internal scratch']
  #allocation2 [shape = 'f32[8,8,64]{2,1,0:T(8,128)}', space=vmem, size = 0x8000, scoped, tag = 'scratch operand']
  #allocation3 [shape = 'f32[1,1]{1,0:T(1,128)S(1)}', space=vmem, size = 0x200, scoped, tag = 'scoped memory for video_classifier_forward.3']
  #allocation4 [shape = 'f32[1,1]{1,0:T(1,128)S(1)}', space=vmem, size = 0x200, scoped, tag = 'scoped memory for video_classifier_forward.3']
  %s0 = inlined_call_operand.vmem [shape: f32[8,8,128], index: 0, kind: input, shape index: {}]
  %s1 = inlined_call_operand.vmem [shape: f32[8,8,1], index: 1, kind: input, shape index: {}]
  %s2 = inlined_call_operand.vmem [shape: f32[64,64], index: 2, kind: input, shape index: {}]
  %s3 = inlined_call_operand.vmem [shape: f32[64,128], index: 3, kind: input, shape index: {}]
  %s4 = inlined_call_operand.vmem [shape: f32[1,128], index: 4, kind: input, shape index: {}]
  %s5 = inlined_call_operand.vmem [shape: f32[1,128], index: 5, kind: input, shape index: {}]
  %s6 = inlined_call_operand.<no memory space> [shape: f32[1,1], index: 6, kind: input, shape index: {}]
  %s7 = inlined_call_operand.vmem [shape: f32[64,128], index: 7, kind: input, shape index: {}]
  %s8 = inlined_call_operand.vmem [shape: f32[1,128], index: 8, kind: input, shape index: {}]
  %s9 = inlined_call_operand.vmem [shape: f32[1,64], index: 9, kind: input, shape index: {}]
  %s10 = inlined_call_operand.<no memory space> [shape: f32[1,1], index: 10, kind: input, shape index: {}]
  %s11 = inlined_call_operand.vmem [shape: f32[8,128], index: 11, kind: output, shape index: {0}]
  %s12 = inlined_call_operand.vmem [shape: f32[8,8], index: 12, kind: output, shape index: {1}]
  %13 = xla_tuple %s11, %s12
  %s14 = sld [smem:[#allocation0]]
  $region62: #{video_classifier_forward.3} parent=0
    _
  %s16 = ssub.s32 1, %s14
  %s17 = scalar_select 0, %s16, %s14
  %v18 = vstv %s6
  %19 = vst [vmem:[#allocation3] sm:$0x1] %v18
  %v20 = vstv %s10
  %21 = vst [vmem:[#allocation4] sm:$0x1] %v20
  // Predicated region
  $region2: #{video_classifier_forward.3} parent=0 // pred_check
    _
  $region3: #{video_classifier_forward.3} parent=0 // pred_check_branch
    %23 = sbr.rel (0) target = $region5
  $region4: #{video_classifier_forward.3} parent=0 // pred_region
    _
  $region5: #{video_classifier_forward.3} parent=0 // pred_fallthru
    _
  // Predicated region
  $region6: #{video_classifier_forward.3} parent=0 // pred_check
    _
  $region7: #{video_classifier_forward.3} parent=0 // pred_check_branch
    %25 = sbr.rel (0) target = $region9
  $region8: #{video_classifier_forward.3} parent=0 // pred_region
    _
  $region9: #{video_classifier_forward.3} parent=0 // pred_fallthru
    _
  // Predicated region
  $region10: #{video_classifier_forward.3} parent=0 // pred_check
    _
  $region11: #{video_classifier_forward.3} parent=0 // pred_check_branch
    %27 = sbr.rel (0) target = $region13
  $region12: #{video_classifier_forward.3} parent=0 // pred_region
    _
  $region13: #{video_classifier_forward.3} parent=0 // pred_fallthru
    _
  // Predicated region
  $region14: #{video_classifier_forward.3} parent=0 // pred_check
    _
  $region15: #{video_classifier_forward.3} parent=0 // pred_check_branch
    %29 = sbr.rel (0) target = $region17
  $region16: #{video_classifier_forward.3} parent=0 // pred_region
    _
  $region17: #{video_classifier_forward.3} parent=0 // pred_fallthru
    _
  // Predicated region
  $region18: #{video_classifier_forward.3} parent=0 // pred_check
    _
  $region19: #{video_classifier_forward.3} parent=0 // pred_check_branch
    %31 = sbr.rel (0) target = $region21
  $region20: #{video_classifier_forward.3} parent=0 // pred_region
    _
  $region21: #{video_classifier_forward.3} parent=0 // pred_fallthru
    _
  // Predicated region
  $region22: #{video_classifier_forward.3} parent=0 // pred_check
    _
  $region23: #{video_classifier_forward.3} parent=0 // pred_check_branch
    %33 = sbr.rel (0) target = $region25
  $region24: #{video_classifier_forward.3} parent=0 // pred_region
    _
  $region25: #{video_classifier_forward.3} parent=0 // pred_fallthru
    _
  // Predicated region
  $region26: #{video_classifier_forward.3} parent=0 // pred_check
    _
  $region27: #{video_classifier_forward.3} parent=0 // pred_check_branch
    %35 = sbr.rel (0) target = $region29
  $region28: #{video_classifier_forward.3} parent=0 // pred_region
    _
  $region29: #{video_classifier_forward.3} parent=0 // pred_fallthru
    _
  // Predicated region
  $region30: #{video_classifier_forward.3} parent=0 // pred_check
    _
  $region31: #{video_classifier_forward.3} parent=0 // pred_check_branch
    %37 = sbr.rel (0) target = $region33
  $region32: #{video_classifier_forward.3} parent=0 // pred_region
    _
  $region33: #{video_classifier_forward.3} parent=0 // pred_fallthru
    _
  // Predicated region
  $region34: #{video_classifier_forward.3} parent=0 // pred_check
    _
  $region35: #{video_classifier_forward.3} parent=0 // pred_check_branch
    %39 = sbr.rel (0) target = $region37
  $region36: #{video_classifier_forward.3} parent=0 // pred_region
    _
  $region37: #{video_classifier_forward.3} parent=0 // pred_fallthru
    _
  // Predicated region
  $region38: #{video_classifier_forward.3} parent=0 // pred_check
    _
  $region39: #{video_classifier_forward.3} parent=0 // pred_check_branch
    %41 = sbr.rel (0) target = $region41
  $region40: #{video_classifier_forward.3} parent=0 // pred_region
    _
  $region41: #{video_classifier_forward.3} parent=0 // pred_fallthru
    _
  // Predicated region
  $region42: #{video_classifier_forward.3} parent=0 // pred_check
    _
  $region43: #{video_classifier_forward.3} parent=0 // pred_check_branch
    %43 = sbr.rel (0) target = $region45
  $region44: #{video_classifier_forward.3} parent=0 // pred_region
    _
  $region45: #{video_classifier_forward.3} parent=0 // pred_fallthru
    _
  %v44 = vld [vmem:[%s2] sm:$0xff]
  %v45 = vld [vmem:[%s2 + $0x8] sm:$0xff]
  %v46 = vld [vmem:[%s2 + $0x10] sm:$0xff]
  %v47 = vld [vmem:[%s2 + $0x18] sm:$0xff]
  %v48 = vld [vmem:[%s2 + $0x20] sm:$0xff]
  %v49 = vld [vmem:[%s2 + $0x28] sm:$0xff]
  %v50 = vld [vmem:[%s2 + $0x30] sm:$0xff]
  %v51 = vld [vmem:[%s2 + $0x38] sm:$0xff]
  %v52 = vld [vmem:[%s0] sm:$0xff]
  %s53 = scalar_lea.vmem %s0, 56
  %v54 = vld [vmem:[%s53] sm:$0xff]
  %v55 = vld [vmem:[%s1] sm:$0xff]
  %s56 = scalar_lea.vmem %s1, 56
  %v57 = vld [vmem:[%s56] sm:$0xff]
  %vm58 = vcmask 261120
  %v59 = vsel %vm58, %v52, %v54
  %vm60 = vcmask 523264
  %v62 = vsel %vm60, 0.0, 0
  %64 = vmatprep.subr.mxu0 0.0
  %65 = vmatpush1.msra.mxu0 %v44
  %66 = vmatprep.subr.mxu0 0.0
  %67 = vmatpush1.msra.mxu0 %v45
  %68 = vmatprep.subr.mxu0 0.0
  %69 = vmatpush1.msra.mxu0 %v46
  %70 = vmatprep.subr.mxu0 0.0
  %71 = vmatpush1.msra.mxu0 %v47
  %72 = vmatprep.subr.mxu0 0.0
  %73 = vmatpush1.msra.mxu0 %v48
  %74 = vmatprep.subr.mxu0 0.0
  %75 = vmatpush1.msra.mxu0 %v49
  %76 = vmatprep.subr.mxu0 0.0
  %77 = vmatpush1.msra.mxu0 %v50
  %78 = vmatprep.subr.mxu0 0.0
  %79 = vmatpush1.msra.mxu0 %v51
  %80 = vmatprep.subr.mxu0 0.0
  %81 = vmatpush1.msra.mxu0 0.0
  %82 = vmatprep.subr.mxu0 0.0
  %83 = vmatpush1.msra.mxu0 0.0
  %84 = vmatprep.subr.mxu0 0.0
  %85 = vmatpush1.msra.mxu0 0.0
  %86 = vmatprep.subr.mxu0 0.0
  %87 = vmatpush1.msra.mxu0 0.0
  %88 = vmatprep.subr.mxu0 0.0
  %89 = vmatpush1.msra.mxu0 0.0
  %90 = vmatprep.subr.mxu0 0.0
  %91 = vmatpush1.msra.mxu0 0.0
  %92 = vmatprep.subr.mxu0 0.0
  %93 = vmatpush1.msra.mxu0 0.0
  %94 = vmatprep.subr.mxu0 0.0
  %95 = vmatpush1.msra.mxu0 0.0
  %96 = vmatprep.subr.mxu0 0.0
  %97 = vmatpush1.msra.mxu0 0.0
  %98 = vmatprep.subr.mxu0 0.0
  %99 = vmatpush1.msra.mxu0 0.0
  %100 = vmatprep.subr.mxu0 0.0
  %101 = vmatpush1.msra.mxu0 0.0
  %102 = vmatprep.subr.mxu0 0.0
  %103 = vmatpush1.msra.mxu0 0.0
  %104 = vmatprep.subr.mxu0 0.0
  %105 = vmatpush1.msra.mxu0 0.0
  %106 = vmatprep.subr.mxu0 0.0
  %107 = vmatpush1.msra.mxu0 0.0
  %108 = vmatprep.subr.mxu0 0.0
  %109 = vmatpush1.msra.mxu0 0.0
  %110 = vmatprep.subr.mxu0 0.0
  %111 = vmatpush1.msra.mxu0 0.0
  %112 = vmatprep.subr.mxu0 0.0
  %113 = vmatpush1.msra.mxu0 0.0
  %114 = vmatprep.subr.mxu0 0.0
  %115 = vmatpush1.msra.mxu0 0.0
  %116 = vmatprep.subr.mxu0 0.0
  %117 = vmatpush1.msra.mxu0 0.0
  %118 = vmatprep.subr.mxu0 0.0
  %119 = vmatpush1.msra.mxu0 0.0
  %120 = vmatprep.subr.mxu0 0.0
  %121 = vmatpush1.msra.mxu0 0.0
  %122 = vmatprep.subr.mxu0 0.0
  %123 = vmatpush1.msra.mxu0 0.0
  %124 = vmatprep.subr.mxu0 0.0
  %125 = vmatpush1.msra.mxu0 0.0
  %126 = vmatprep.subr.mxu0 0.0
  %127 = vmatpush1.msra.mxu0 0.0
  %128 = vmatprep.mubr.f32.mxu0 0.0
  %129 = vmatmul.mubr.f32.gmra.mrb[0].mxu0 %v62
  %v130 = vpop.f32.mrb[0].mxu0
  %v131 = vadd.f32 0.0, %v130
  %v132 = vpop.f32.mrb[0].mxu0
  %133 = vdwg.mxu0
  %v134 = vadd.f32 %v59, %v131
  %v135 = vtanh.pop %v134
  %137 = vset.pattern.permute.xlu0 0
  %138 = vperm.xlu0 %137, %v55
  %v139 = vpop.permute.xlu0 %138
  %v141 = vmul.f32 %v139, %v135
  %v142 = vsub.f32 1.0, %v55
  %144 = vset.pattern.permute.xlu0 0
  %145 = vperm.xlu0 %144, %v142
  %v146 = vpop.permute.xlu0 %145
  %v148 = vmul.f32 %v146, 0.0
  %v149 = vadd.f32 %v141, %v148
  %151 = vset.pattern.permute.xlu0 0
  %152 = vperm.xlu0 %151, %v57
  %v153 = vpop.permute.xlu0 %152
  %v155 = vmul.f32 %v153, %v135
  %v156 = vsub.f32 1.0, %v57
  %158 = vset.pattern.permute.xlu0 0
  %159 = vperm.xlu0 %158, %v156
  %v160 = vpop.permute.xlu0 %159
  %v162 = vmul.f32 %v160, 0.0
  %v163 = vadd.f32 %v155, %v162
  %v164 = vmul.f32 %v139, %v149
  %165 = vst.msk [vmem:[#allocation2] sm:$0xff] %vm58, %v164
  %v166 = vmul.f32 %v153, %v163
  %s167 = scalar_lea.vmem [#allocation2], 56
  %vm168 = vcmask 523520
  %169 = vst.msk [vmem:[%s167] sm:$0xff] %vm168, %v166
  %v170 = vsel %vm58, %v149, %v163
  %s171 = scalar_lea.vmem %s0, 8
  %v172 = vld [vmem:[%s171] sm:$0xff]
  %s173 = scalar_lea.vmem %s0, 48
  %v174 = vld [vmem:[%s173] sm:$0xff]
  %s175 = scalar_lea.vmem %s1, 8
  %v176 = vld [vmem:[%s175] sm:$0xff]
  %s177 = scalar_lea.vmem %s1, 48
  %v178 = vld [vmem:[%s177] sm:$0xff]
  %v179 = vsel %vm58, %v172, %v174
  %v181 = vsel %vm60, %v170, 0
  %183 = vmatprep.subr.mxu0 0.0
  %184 = vmatpush1.msra.mxu0 %v44
  %185 = vmatprep.subr.mxu0 0.0
  %186 = vmatpush1.msra.mxu0 %v45
  %187 = vmatprep.subr.mxu0 0.0
  %188 = vmatpush1.msra.mxu0 %v46
  %189 = vmatprep.subr.mxu0 0.0
  %190 = vmatpush1.msra.mxu0 %v47
  %191 = vmatprep.subr.mxu0 0.0
  %192 = vmatpush1.msra.mxu0 %v48
  %193 = vmatprep.subr.mxu0 0.0
  %194 = vmatpush1.msra.mxu0 %v49
  %195 = vmatprep.subr.mxu0 0.0
  %196 = vmatpush1.msra.mxu0 %v50
  %197 = vmatprep.subr.mxu0 0.0
  %198 = vmatpush1.msra.mxu0 %v51
  %199 = vmatprep.subr.mxu0 0.0
  %200 = vmatpush1.msra.mxu0 0.0
  %201 = vmatprep.subr.mxu0 0.0
  %202 = vmatpush1.msra.mxu0 0.0
  %203 = vmatprep.subr.mxu0 0.0
  %204 = vmatpush1.msra.mxu0 0.0
  %205 = vmatprep.subr.mxu0 0.0
  %206 = vmatpush1.msra.mxu0 0.0
  %207 = vmatprep.subr.mxu0 0.0
  %208 = vmatpush1.msra.mxu0 0.0
  %209 = vmatprep.subr.mxu0 0.0
  %210 = vmatpush1.msra.mxu0 0.0
  %211 = vmatprep.subr.mxu0 0.0
  %212 = vmatpush1.msra.mxu0 0.0
  %213 = vmatprep.subr.mxu0 0.0
  %214 = vmatpush1.msra.mxu0 0.0
  %215 = vmatprep.subr.mxu0 0.0
  %216 = vmatpush1.msra.mxu0 0.0
  %217 = vmatprep.subr.mxu0 0.0
  %218 = vmatpush1.msra.mxu0 0.0
  %219 = vmatprep.subr.mxu0 0.0
  %220 = vmatpush1.msra.mxu0 0.0
  %221 = vmatprep.subr.mxu0 0.0
  %222 = vmatpush1.msra.mxu0 0.0
  %223 = vmatprep.subr.mxu0 0.0
  %224 = vmatpush1.msra.mxu0 0.0
  %225 = vmatprep.subr.mxu0 0.0
  %226 = vmatpush1.msra.mxu0 0.0
  %227 = vmatprep.subr.mxu0 0.0
  %228 = vmatpush1.msra.mxu0 0.0
  %229 = vmatprep.subr.mxu0 0.0
  %230 = vmatpush1.msra.mxu0 0.0
  %231 = vmatprep.subr.mxu0 0.0
  %232 = vmatpush1.msra.mxu0 0.0
  %233 = vmatprep.subr.mxu0 0.0
  %234 = vmatpush1.msra.mxu0 0.0
  %235 = vmatprep.subr.mxu0 0.0
  %236 = vmatpush1.msra.mxu0 0.0
  %237 = vmatprep.subr.mxu0 0.0
  %238 = vmatpush1.msra.mxu0 0.0
  %239 = vmatprep.subr.mxu0 0.0
  %240 = vmatpush1.msra.mxu0 0.0
  %241 = vmatprep.subr.mxu0 0.0
  %242 = vmatpush1.msra.mxu0 0.0
  %243 = vmatprep.subr.mxu0 0.0
  %244 = vmatpush1.msra.mxu0 0.0
  %245 = vmatprep.subr.mxu0 0.0
  %246 = vmatpush1.msra.mxu0 0.0
  %247 = vmatprep.mubr.f32.mxu0 0.0
  %248 = vmatmul.mubr.f32.gmra.mrb[0].mxu0 %v181
  %v249 = vpop.f32.mrb[0].mxu0
  %v250 = vadd.f32 0.0, %v249
  %v251 = vpop.f32.mrb[0].mxu0
  %252 = vdwg.mxu0
  %v253 = vadd.f32 %v179, %v250
  %v254 = vtanh.pop %v253
  %256 = vset.pattern.permute.xlu0 0
  %257 = vperm.xlu0 %256, %v176
  %v258 = vpop.permute.xlu0 %257
  %v260 = vmul.f32 %v258, %v254
  %v261 = vsub.f32 1.0, %v176
  %263 = vset.pattern.permute.xlu0 0
  %264 = vperm.xlu0 %263, %v261
  %v265 = vpop.permute.xlu0 %264
  %v267 = vmul.f32 %v265, %v170
  %v268 = vadd.f32 %v260, %v267
  %270 = vset.pattern.permute.xlu0 0
  %271 = vperm.xlu0 %270, %v178
  %v272 = vpop.permute.xlu0 %271
  %v274 = vmul.f32 %v272, %v254
  %v275 = vsub.f32 1.0, %v178
  %277 = vset.pattern.permute.xlu0 0
  %278 = vperm.xlu0 %277, %v275
  %v279 = vpop.permute.xlu0 %278
  %v281 = vmul.f32 %v279, %v170
  %v282 = vadd.f32 %v274, %v281
  %v283 = vmul.f32 %v258, %v268
  %s284 = scalar_lea.vmem [#allocation2], 8
  %285 = vst.msk [vmem:[%s284] sm:$0xff] %vm58, %v283
  %v286 = vmul.f32 %v272, %v282
  %s287 = scalar_lea.vmem [#allocation2], 48
  %288 = vst.msk [vmem:[%s287] sm:$0xff] %vm168, %v286
  %v289 = vsel %vm58, %v268, %v282
  %s290 = scalar_lea.vmem %s0, 16
  %v291 = vld [vmem:[%s290] sm:$0xff]
  %s292 = scalar_lea.vmem %s0, 40
  %v293 = vld [vmem:[%s292] sm:$0xff]
  %s294 = scalar_lea.vmem %s1, 16
  %v295 = vld [vmem:[%s294] sm:$0xff]
  %s296 = scalar_lea.vmem %s1, 40
  %v297 = vld [vmem:[%s296] sm:$0xff]
  %v298 = vsel %vm58, %v291, %v293
  %v300 = vsel %vm60, %v289, 0
  %302 = vmatprep.subr.mxu0 0.0
  %303 = vmatpush1.msra.mxu0 %v44
  %304 = vmatprep.subr.mxu0 0.0
  %305 = vmatpush1.msra.mxu0 %v45
  %306 = vmatprep.subr.mxu0 0.0
  %307 = vmatpush1.msra.mxu0 %v46
  %308 = vmatprep.subr.mxu0 0.0
  %309 = vmatpush1.msra.mxu0 %v47
  %310 = vmatprep.subr.mxu0 0.0
  %311 = vmatpush1.msra.mxu0 %v48
  %312 = vmatprep.subr.mxu0 0.0
  %313 = vmatpush1.msra.mxu0 %v49
  %314 = vmatprep.subr.mxu0 0.0
  %315 = vmatpush1.msra.mxu0 %v50
  %316 = vmatprep.subr.mxu0 0.0
  %317 = vmatpush1.msra.mxu0 %v51
  %318 = vmatprep.subr.mxu0 0.0
  %319 = vmatpush1.msra.mxu0 0.0
  %320 = vmatprep.subr.mxu0 0.0
  %321 = vmatpush1.msra.mxu0 0.0
  %322 = vmatprep.subr.mxu0 0.0
  %323 = vmatpush1.msra.mxu0 0.0
  %324 = vmatprep.subr.mxu0 0.0
  %325 = vmatpush1.msra.mxu0 0.0
  %326 = vmatprep.subr.mxu0 0.0
  %327 = vmatpush1.msra.mxu0 0.0
  %328 = vmatprep.subr.mxu0 0.0
  %329 = vmatpush1.msra.mxu0 0.0
  %330 = vmatprep.subr.mxu0 0.0
  %331 = vmatpush1.msra.mxu0 0.0
  %332 = vmatprep.subr.mxu0 0.0
  %333 = vmatpush1.msra.mxu0 0.0
  %334 = vmatprep.subr.mxu0 0.0
  %335 = vmatpush1.msra.mxu0 0.0
  %336 = vmatprep.subr.mxu0 0.0
  %337 = vmatpush1.msra.mxu0 0.0
  %338 = vmatprep.subr.mxu0 0.0
  %339 = vmatpush1.msra.mxu0 0.0
  %340 = vmatprep.subr.mxu0 0.0
  %341 = vmatpush1.msra.mxu0 0.0
  %342 = vmatprep.subr.mxu0 0.0
  %343 = vmatpush1.msra.mxu0 0.0
  %344 = vmatprep.subr.mxu0 0.0
  %345 = vmatpush1.msra.mxu0 0.0
  %346 = vmatprep.subr.mxu0 0.0
  %347 = vmatpush1.msra.mxu0 0.0
  %348 = vmatprep.subr.mxu0 0.0
  %349 = vmatpush1.msra.mxu0 0.0
  %350 = vmatprep.subr.mxu0 0.0
  %351 = vmatpush1.msra.mxu0 0.0
  %352 = vmatprep.subr.mxu0 0.0
  %353 = vmatpush1.msra.mxu0 0.0
  %354 = vmatprep.subr.mxu0 0.0
  %355 = vmatpush1.msra.mxu0 0.0
  %356 = vmatprep.subr.mxu0 0.0
  %357 = vmatpush1.msra.mxu0 0.0
  %358 = vmatprep.subr.mxu0 0.0
  %359 = vmatpush1.msra.mxu0 0.0
  %360 = vmatprep.subr.mxu0 0.0
  %361 = vmatpush1.msra.mxu0 0.0
  %362 = vmatprep.subr.mxu0 0.0
  %363 = vmatpush1.msra.mxu0 0.0
  %364 = vmatprep.subr.mxu0 0.0
  %365 = vmatpush1.msra.mxu0 0.0
  %366 = vmatprep.mubr.f32.mxu0 0.0
  %367 = vmatmul.mubr.f32.gmra.mrb[0].mxu0 %v300
  %v368 = vpop.f32.mrb[0].mxu0
  %v369 = vadd.f32 0.0, %v368
  %v370 = vpop.f32.mrb[0].mxu0
  %371 = vdwg.mxu0
  %v372 = vadd.f32 %v298, %v369
  %v373 = vtanh.pop %v372
  %375 = vset.pattern.permute.xlu0 0
  %376 = vperm.xlu0 %375, %v295
  %v377 = vpop.permute.xlu0 %376
  %v379 = vmul.f32 %v377, %v373
  %v380 = vsub.f32 1.0, %v295
  %382 = vset.pattern.permute.xlu0 0
  %383 = vperm.xlu0 %382, %v380
  %v384 = vpop.permute.xlu0 %383
  %v386 = vmul.f32 %v384, %v289
  %v387 = vadd.f32 %v379, %v386
  %389 = vset.pattern.permute.xlu0 0
  %390 = vperm.xlu0 %389, %v297
  %v391 = vpop.permute.xlu0 %390
  %v393 = vmul.f32 %v391, %v373
  %v394 = vsub.f32 1.0, %v297
  %396 = vset.pattern.permute.xlu0 0
  %397 = vperm.xlu0 %396, %v394
  %v398 = vpop.permute.xlu0 %397
  %v400 = vmul.f32 %v398, %v289
  %v401 = vadd.f32 %v393, %v400
  %v402 = vmul.f32 %v377, %v387
  %s403 = scalar_lea.vmem [#allocation2], 16
  %404 = vst.msk [vmem:[%s403] sm:$0xff] %vm58, %v402
  %v405 = vmul.f32 %v391, %v401
  %s406 = scalar_lea.vmem [#allocation2], 40
  %407 = vst.msk [vmem:[%s406] sm:$0xff] %vm168, %v405
  %v408 = vsel %vm58, %v387, %v401
  %s409 = scalar_lea.vmem %s0, 24
  %v410 = vld [vmem:[%s409] sm:$0xff]
  %s411 = scalar_lea.vmem %s0, 32
  %v412 = vld [vmem:[%s411] sm:$0xff]
  %s413 = scalar_lea.vmem %s1, 24
  %v414 = vld [vmem:[%s413] sm:$0xff]
  %s415 = scalar_lea.vmem %s1, 32
  %v416 = vld [vmem:[%s415] sm:$0xff]
  %v417 = vsel %vm58, %v410, %v412
  %v419 = vsel %vm60, %v408, 0
  %421 = vmatprep.subr.mxu0 0.0
  %422 = vmatpush1.msra.mxu0 %v44
  %423 = vmatprep.subr.mxu0 0.0
  %424 = vmatpush1.msra.mxu0 %v45
  %425 = vmatprep.subr.mxu0 0.0
  %426 = vmatpush1.msra.mxu0 %v46
  %427 = vmatprep.subr.mxu0 0.0
  %428 = vmatpush1.msra.mxu0 %v47
  %429 = vmatprep.subr.mxu0 0.0
  %430 = vmatpush1.msra.mxu0 %v48
  %431 = vmatprep.subr.mxu0 0.0
  %432 = vmatpush1.msra.mxu0 %v49
  %433 = vmatprep.subr.mxu0 0.0
  %434 = vmatpush1.msra.mxu0 %v50
  %435 = vmatprep.subr.mxu0 0.0
  %436 = vmatpush1.msra.mxu0 %v51
  %437 = vmatprep.subr.mxu0 0.0
  %438 = vmatpush1.msra.mxu0 0.0
  %439 = vmatprep.subr.mxu0 0.0
  %440 = vmatpush1.msra.mxu0 0.0
  %441 = vmatprep.subr.mxu0 0.0
  %442 = vmatpush1.msra.mxu0 0.0
  %443 = vmatprep.subr.mxu0 0.0
  %444 = vmatpush1.msra.mxu0 0.0
  %445 = vmatprep.subr.mxu0 0.0
  %446 = vmatpush1.msra.mxu0 0.0
  %447 = vmatprep.subr.mxu0 0.0
  %448 = vmatpush1.msra.mxu0 0.0
  %449 = vmatprep.subr.mxu0 0.0
  %450 = vmatpush1.msra.mxu0 0.0
  %451 = vmatprep.subr.mxu0 0.0
  %452 = vmatpush1.msra.mxu0 0.0
  %453 = vmatprep.subr.mxu0 0.0
  %454 = vmatpush1.msra.mxu0 0.0
  %455 = vmatprep.subr.mxu0 0.0
  %456 = vmatpush1.msra.mxu0 0.0
  %457 = vmatprep.subr.mxu0 0.0
  %458 = vmatpush1.msra.mxu0 0.0
  %459 = vmatprep.subr.mxu0 0.0
  %460 = vmatpush1.msra.mxu0 0.0
  %461 = vmatprep.subr.mxu0 0.0
  %462 = vmatpush1.msra.mxu0 0.0
  %463 = vmatprep.subr.mxu0 0.0
  %464 = vmatpush1.msra.mxu0 0.0
  %465 = vmatprep.subr.mxu0 0.0
  %466 = vmatpush1.msra.mxu0 0.0
  %467 = vmatprep.subr.mxu0 0.0
  %468 = vmatpush1.msra.mxu0 0.0
  %469 = vmatprep.subr.mxu0 0.0
  %470 = vmatpush1.msra.mxu0 0.0
  %471 = vmatprep.subr.mxu0 0.0
  %472 = vmatpush1.msra.mxu0 0.0
  %473 = vmatprep.subr.mxu0 0.0
  %474 = vmatpush1.msra.mxu0 0.0
  %475 = vmatprep.subr.mxu0 0.0
  %476 = vmatpush1.msra.mxu0 0.0
  %477 = vmatprep.subr.mxu0 0.0
  %478 = vmatpush1.msra.mxu0 0.0
  %479 = vmatprep.subr.mxu0 0.0
  %480 = vmatpush1.msra.mxu0 0.0
  %481 = vmatprep.subr.mxu0 0.0
  %482 = vmatpush1.msra.mxu0 0.0
  %483 = vmatprep.subr.mxu0 0.0
  %484 = vmatpush1.msra.mxu0 0.0
  %485 = vmatprep.mubr.f32.mxu0 0.0
  %486 = vmatmul.mubr.f32.gmra.mrb[0].mxu0 %v419
  %v487 = vpop.f32.mrb[0].mxu0
  %v488 = vadd.f32 0.0, %v487
  %v489 = vpop.f32.mrb[0].mxu0
  %490 = vdwg.mxu0
  %v491 = vadd.f32 %v417, %v488
  %v492 = vtanh.pop %v491
  %494 = vset.pattern.permute.xlu0 0
  %495 = vperm.xlu0 %494, %v414
  %v496 = vpop.permute.xlu0 %495
  %v498 = vmul.f32 %v496, %v492
  %v499 = vsub.f32 1.0, %v414
  %501 = vset.pattern.permute.xlu0 0
  %502 = vperm.xlu0 %501, %v499
  %v503 = vpop.permute.xlu0 %502
  %v505 = vmul.f32 %v503, %v408
  %v506 = vadd.f32 %v498, %v505
  %508 = vset.pattern.permute.xlu0 0
  %509 = vperm.xlu0 %508, %v416
  %v510 = vpop.permute.xlu0 %509
  %v512 = vmul.f32 %v510, %v492
  %v513 = vsub.f32 1.0, %v416
  %515 = vset.pattern.permute.xlu0 0
  %516 = vperm.xlu0 %515, %v513
  %v517 = vpop.permute.xlu0 %516
  %v519 = vmul.f32 %v517, %v408
  %v520 = vadd.f32 %v512, %v519
  %v521 = vmul.f32 %v496, %v506
  %s522 = scalar_lea.vmem [#allocation2], 24
  %523 = vst.msk [vmem:[%s522] sm:$0xff] %vm58, %v521
  %v524 = vmul.f32 %v510, %v520
  %s525 = scalar_lea.vmem [#allocation2], 32
  %526 = vst.msk [vmem:[%s525] sm:$0xff] %vm168, %v524
  %v527 = vsel %vm58, %v506, %v520
  %v528 = vld [vmem:[%s411] sm:$0xff]
  %v529 = vld [vmem:[%s409] sm:$0xff]
  %v530 = vld [vmem:[%s415] sm:$0xff]
  %v531 = vld [vmem:[%s413] sm:$0xff]
  %v532 = vsel %vm58, %v528, %v529
  %v534 = vsel %vm60, %v527, 0
  %536 = vmatprep.subr.mxu0 0.0
  %537 = vmatpush1.msra.mxu0 %v44
  %538 = vmatprep.subr.mxu0 0.0
  %539 = vmatpush1.msra.mxu0 %v45
  %540 = vmatprep.subr.mxu0 0.0
  %541 = vmatpush1.msra.mxu0 %v46
  %542 = vmatprep.subr.mxu0 0.0
  %543 = vmatpush1.msra.mxu0 %v47
  %544 = vmatprep.subr.mxu0 0.0
  %545 = vmatpush1.msra.mxu0 %v48
  %546 = vmatprep.subr.mxu0 0.0
  %547 = vmatpush1.msra.mxu0 %v49
  %548 = vmatprep.subr.mxu0 0.0
  %549 = vmatpush1.msra.mxu0 %v50
  %550 = vmatprep.subr.mxu0 0.0
  %551 = vmatpush1.msra.mxu0 %v51
  %552 = vmatprep.subr.mxu0 0.0
  %553 = vmatpush1.msra.mxu0 0.0
  %554 = vmatprep.subr.mxu0 0.0
  %555 = vmatpush1.msra.mxu0 0.0
  %556 = vmatprep.subr.mxu0 0.0
  %557 = vmatpush1.msra.mxu0 0.0
  %558 = vmatprep.subr.mxu0 0.0
  %559 = vmatpush1.msra.mxu0 0.0
  %560 = vmatprep.subr.mxu0 0.0
  %561 = vmatpush1.msra.mxu0 0.0
  %562 = vmatprep.subr.mxu0 0.0
  %563 = vmatpush1.msra.mxu0 0.0
  %564 = vmatprep.subr.mxu0 0.0
  %565 = vmatpush1.msra.mxu0 0.0
  %566 = vmatprep.subr.mxu0 0.0
  %567 = vmatpush1.msra.mxu0 0.0
  %568 = vmatprep.subr.mxu0 0.0
  %569 = vmatpush1.msra.mxu0 0.0
  %570 = vmatprep.subr.mxu0 0.0
  %571 = vmatpush1.msra.mxu0 0.0
  %572 = vmatprep.subr.mxu0 0.0
  %573 = vmatpush1.msra.mxu0 0.0
  %574 = vmatprep.subr.mxu0 0.0
  %575 = vmatpush1.msra.mxu0 0.0
  %576 = vmatprep.subr.mxu0 0.0
  %577 = vmatpush1.msra.mxu0 0.0
  %578 = vmatprep.subr.mxu0 0.0
  %579 = vmatpush1.msra.mxu0 0.0
  %580 = vmatprep.subr.mxu0 0.0
  %581 = vmatpush1.msra.mxu0 0.0
  %582 = vmatprep.subr.mxu0 0.0
  %583 = vmatpush1.msra.mxu0 0.0
  %584 = vmatprep.subr.mxu0 0.0
  %585 = vmatpush1.msra.mxu0 0.0
  %586 = vmatprep.subr.mxu0 0.0
  %587 = vmatpush1.msra.mxu0 0.0
  %588 = vmatprep.subr.mxu0 0.0
  %589 = vmatpush1.msra.mxu0 0.0
  %590 = vmatprep.subr.mxu0 0.0
  %591 = vmatpush1.msra.mxu0 0.0
  %592 = vmatprep.subr.mxu0 0.0
  %593 = vmatpush1.msra.mxu0 0.0
  %594 = vmatprep.subr.mxu0 0.0
  %595 = vmatpush1.msra.mxu0 0.0
  %596 = vmatprep.subr.mxu0 0.0
  %597 = vmatpush1.msra.mxu0 0.0
  %598 = vmatprep.subr.mxu0 0.0
  %599 = vmatpush1.msra.mxu0 0.0
  %600 = vmatprep.mubr.f32.mxu0 0.0
  %601 = vmatmul.mubr.f32.gmra.mrb[0].mxu0 %v534
  %v602 = vpop.f32.mrb[0].mxu0
  %v603 = vadd.f32 0.0, %v602
  %v604 = vpop.f32.mrb[0].mxu0
  %605 = vdwg.mxu0
  %v606 = vadd.f32 %v532, %v603
  %v607 = vtanh.pop %v606
  %609 = vset.pattern.permute.xlu0 0
  %610 = vperm.xlu0 %609, %v530
  %v611 = vpop.permute.xlu0 %610
  %v613 = vmul.f32 %v611, %v607
  %v614 = vsub.f32 1.0, %v530
  %616 = vset.pattern.permute.xlu0 0
  %617 = vperm.xlu0 %616, %v614
  %v618 = vpop.permute.xlu0 %617
  %v620 = vmul.f32 %v618, %v527
  %v621 = vadd.f32 %v613, %v620
  %623 = vset.pattern.permute.xlu0 0
  %624 = vperm.xlu0 %623, %v531
  %v625 = vpop.permute.xlu0 %624
  %v627 = vmul.f32 %v625, %v607
  %v628 = vsub.f32 1.0, %v531
  %630 = vset.pattern.permute.xlu0 0
  %631 = vperm.xlu0 %630, %v628
  %v632 = vpop.permute.xlu0 %631
  %v634 = vmul.f32 %v632, %v527
  %v635 = vadd.f32 %v627, %v634
  %v636 = vmul.f32 %v611, %v621
  %637 = vst.msk [vmem:[%s525] sm:$0xff] %vm58, %v636
  %v638 = vmul.f32 %v625, %v635
  %639 = vst.msk [vmem:[%s522] sm:$0xff] %vm168, %v638
  %v640 = vsel %vm58, %v621, %v635
  %v641 = vld [vmem:[%s292] sm:$0xff]
  %v642 = vld [vmem:[%s290] sm:$0xff]
  %v643 = vld [vmem:[%s296] sm:$0xff]
  %v644 = vld [vmem:[%s294] sm:$0xff]
  %v645 = vsel %vm58, %v641, %v642
  %v647 = vsel %vm60, %v640, 0
  %649 = vmatprep.subr.mxu0 0.0
  %650 = vmatpush1.msra.mxu0 %v44
  %651 = vmatprep.subr.mxu0 0.0
  %652 = vmatpush1.msra.mxu0 %v45
  %653 = vmatprep.subr.mxu0 0.0
  %654 = vmatpush1.msra.mxu0 %v46
  %655 = vmatprep.subr.mxu0 0.0
  %656 = vmatpush1.msra.mxu0 %v47
  %657 = vmatprep.subr.mxu0 0.0
  %658 = vmatpush1.msra.mxu0 %v48
  %659 = vmatprep.subr.mxu0 0.0
  %660 = vmatpush1.msra.mxu0 %v49
  %661 = vmatprep.subr.mxu0 0.0
  %662 = vmatpush1.msra.mxu0 %v50
  %663 = vmatprep.subr.mxu0 0.0
  %664 = vmatpush1.msra.mxu0 %v51
  %665 = vmatprep.subr.mxu0 0.0
  %666 = vmatpush1.msra.mxu0 0.0
  %667 = vmatprep.subr.mxu0 0.0
  %668 = vmatpush1.msra.mxu0 0.0
  %669 = vmatprep.subr.mxu0 0.0
  %670 = vmatpush1.msra.mxu0 0.0
  %671 = vmatprep.subr.mxu0 0.0
  %672 = vmatpush1.msra.mxu0 0.0
  %673 = vmatprep.subr.mxu0 0.0
  %674 = vmatpush1.msra.mxu0 0.0
  %675 = vmatprep.subr.mxu0 0.0
  %676 = vmatpush1.msra.mxu0 0.0
  %677 = vmatprep.subr.mxu0 0.0
  %678 = vmatpush1.msra.mxu0 0.0
  %679 = vmatprep.subr.mxu0 0.0
  %680 = vmatpush1.msra.mxu0 0.0
  %681 = vmatprep.subr.mxu0 0.0
  %682 = vmatpush1.msra.mxu0 0.0
  %683 = vmatprep.subr.mxu0 0.0
  %684 = vmatpush1.msra.mxu0 0.0
  %685 = vmatprep.subr.mxu0 0.0
  %686 = vmatpush1.msra.mxu0 0.0
  %687 = vmatprep.subr.mxu0 0.0
  %688 = vmatpush1.msra.mxu0 0.0
  %689 = vmatprep.subr.mxu0 0.0
  %690 = vmatpush1.msra.mxu0 0.0
  %691 = vmatprep.subr.mxu0 0.0
  %692 = vmatpush1.msra.mxu0 0.0
  %693 = vmatprep.subr.mxu0 0.0
  %694 = vmatpush1.msra.mxu0 0.0
  %695 = vmatprep.subr.mxu0 0.0
  %696 = vmatpush1.msra.mxu0 0.0
  %697 = vmatprep.subr.mxu0 0.0
  %698 = vmatpush1.msra.mxu0 0.0
  %699 = vmatprep.subr.mxu0 0.0
  %700 = vmatpush1.msra.mxu0 0.0
  %701 = vmatprep.subr.mxu0 0.0
  %702 = vmatpush1.msra.mxu0 0.0
  %703 = vmatprep.subr.mxu0 0.0
  %704 = vmatpush1.msra.mxu0 0.0
  %705 = vmatprep.subr.mxu0 0.0
  %706 = vmatpush1.msra.mxu0 0.0
  %707 = vmatprep.subr.mxu0 0.0
  %708 = vmatpush1.msra.mxu0 0.0
  %709 = vmatprep.subr.mxu0 0.0
  %710 = vmatpush1.msra.mxu0 0.0
  %711 = vmatprep.subr.mxu0 0.0
  %712 = vmatpush1.msra.mxu0 0.0
  %713 = vmatprep.mubr.f32.mxu0 0.0
  %714 = vmatmul.mubr.f32.gmra.mrb[0].mxu0 %v647
  %v715 = vpop.f32.mrb[0].mxu0
  %v716 = vadd.f32 0.0, %v715
  %v717 = vpop.f32.mrb[0].mxu0
  %718 = vdwg.mxu0
  %v719 = vadd.f32 %v645, %v716
  %v720 = vtanh.pop %v719
  %722 = vset.pattern.permute.xlu0 0
  %723 = vperm.xlu0 %722, %v643
  %v724 = vpop.permute.xlu0 %723
  %v726 = vmul.f32 %v724, %v720
  %v727 = vsub.f32 1.0, %v643
  %729 = vset.pattern.permute.xlu0 0
  %730 = vperm.xlu0 %729, %v727
  %v731 = vpop.permute.xlu0 %730
  %v733 = vmul.f32 %v731, %v640
  %v734 = vadd.f32 %v726, %v733
  %736 = vset.pattern.permute.xlu0 0
  %737 = vperm.xlu0 %736, %v644
  %v738 = vpop.permute.xlu0 %737
  %v740 = vmul.f32 %v738, %v720
  %v741 = vsub.f32 1.0, %v644
  %743 = vset.pattern.permute.xlu0 0
  %744 = vperm.xlu0 %743, %v741
  %v745 = vpop.permute.xlu0 %744
  %v747 = vmul.f32 %v745, %v640
  %v748 = vadd.f32 %v740, %v747
  %v749 = vmul.f32 %v724, %v734
  %750 = vst.msk [vmem:[%s406] sm:$0xff] %vm58, %v749
  %v751 = vmul.f32 %v738, %v748
  %752 = vst.msk [vmem:[%s403] sm:$0xff] %vm168, %v751
  %v753 = vsel %vm58, %v734, %v748
  %v754 = vld [vmem:[%s173] sm:$0xff]
  %v755 = vld [vmem:[%s171] sm:$0xff]
  %v756 = vld [vmem:[%s177] sm:$0xff]
  %v757 = vld [vmem:[%s175] sm:$0xff]
  %v758 = vsel %vm58, %v754, %v755
  %v760 = vsel %vm60, %v753, 0
  %762 = vmatprep.subr.mxu0 0.0
  %763 = vmatpush1.msra.mxu0 %v44
  %764 = vmatprep.subr.mxu0 0.0
  %765 = vmatpush1.msra.mxu0 %v45
  %766 = vmatprep.subr.mxu0 0.0
  %767 = vmatpush1.msra.mxu0 %v46
  %768 = vmatprep.subr.mxu0 0.0
  %769 = vmatpush1.msra.mxu0 %v47
  %770 = vmatprep.subr.mxu0 0.0
  %771 = vmatpush1.msra.mxu0 %v48
  %772 = vmatprep.subr.mxu0 0.0
  %773 = vmatpush1.msra.mxu0 %v49
  %774 = vmatprep.subr.mxu0 0.0
  %775 = vmatpush1.msra.mxu0 %v50
  %776 = vmatprep.subr.mxu0 0.0
  %777 = vmatpush1.msra.mxu0 %v51
  %778 = vmatprep.subr.mxu0 0.0
  %779 = vmatpush1.msra.mxu0 0.0
  %780 = vmatprep.subr.mxu0 0.0
  %781 = vmatpush1.msra.mxu0 0.0
  %782 = vmatprep.subr.mxu0 0.0
  %783 = vmatpush1.msra.mxu0 0.0
  %784 = vmatprep.subr.mxu0 0.0
  %785 = vmatpush1.msra.mxu0 0.0
  %786 = vmatprep.subr.mxu0 0.0
  %787 = vmatpush1.msra.mxu0 0.0
  %788 = vmatprep.subr.mxu0 0.0
  %789 = vmatpush1.msra.mxu0 0.0
  %790 = vmatprep.subr.mxu0 0.0
  %791 = vmatpush1.msra.mxu0 0.0
  %792 = vmatprep.subr.mxu0 0.0
  %793 = vmatpush1.msra.mxu0 0.0
  %794 = vmatprep.subr.mxu0 0.0
  %795 = vmatpush1.msra.mxu0 0.0
  %796 = vmatprep.subr.mxu0 0.0
  %797 = vmatpush1.msra.mxu0 0.0
  %798 = vmatprep.subr.mxu0 0.0
  %799 = vmatpush1.msra.mxu0 0.0
  %800 = vmatprep.subr.mxu0 0.0
  %801 = vmatpush1.msra.mxu0 0.0
  %802 = vmatprep.subr.mxu0 0.0
  %803 = vmatpush1.msra.mxu0 0.0
  %804 = vmatprep.subr.mxu0 0.0
  %805 = vmatpush1.msra.mxu0 0.0
  %806 = vmatprep.subr.mxu0 0.0
  %807 = vmatpush1.msra.mxu0 0.0
  %808 = vmatprep.subr.mxu0 0.0
  %809 = vmatpush1.msra.mxu0 0.0
  %810 = vmatprep.subr.mxu0 0.0
  %811 = vmatpush1.msra.mxu0 0.0
  %812 = vmatprep.subr.mxu0 0.0
  %813 = vmatpush1.msra.mxu0 0.0
  %814 = vmatprep.subr.mxu0 0.0
  %815 = vmatpush1.msra.mxu0 0.0
  %816 = vmatprep.subr.mxu0 0.0
  %817 = vmatpush1.msra.mxu0 0.0
  %818 = vmatprep.subr.mxu0 0.0
  %819 = vmatpush1.msra.mxu0 0.0
  %820 = vmatprep.subr.mxu0 0.0
  %821 = vmatpush1.msra.mxu0 0.0
  %822 = vmatprep.subr.mxu0 0.0
  %823 = vmatpush1.msra.mxu0 0.0
  %824 = vmatprep.subr.mxu0 0.0
  %825 = vmatpush1.msra.mxu0 0.0
  %826 = vmatprep.mubr.f32.mxu0 0.0
  %827 = vmatmul.mubr.f32.gmra.mrb[0].mxu0 %v760
  %v828 = vpop.f32.mrb[0].mxu0
  %v829 = vadd.f32 0.0, %v828
  %v830 = vpop.f32.mrb[0].mxu0
  %831 = vdwg.mxu0
  %v832 = vadd.f32 %v758, %v829
  %v833 = vtanh.pop %v832
  %835 = vset.pattern.permute.xlu0 0
  %836 = vperm.xlu0 %835, %v756
  %v837 = vpop.permute.xlu0 %836
  %v839 = vmul.f32 %v837, %v833
  %v840 = vsub.f32 1.0, %v756
  %842 = vset.pattern.permute.xlu0 0
  %843 = vperm.xlu0 %842, %v840
  %v844 = vpop.permute.xlu0 %843
  %v846 = vmul.f32 %v844, %v753
  %v847 = vadd.f32 %v839, %v846
  %849 = vset.pattern.permute.xlu0 0
  %850 = vperm.xlu0 %849, %v757
  %v851 = vpop.permute.xlu0 %850
  %v853 = vmul.f32 %v851, %v833
  %v854 = vsub.f32 1.0, %v757
  %856 = vset.pattern.permute.xlu0 0
  %857 = vperm.xlu0 %856, %v854
  %v858 = vpop.permute.xlu0 %857
  %v860 = vmul.f32 %v858, %v753
  %v861 = vadd.f32 %v853, %v860
  %v862 = vmul.f32 %v837, %v847
  %863 = vst.msk [vmem:[%s287] sm:$0xff] %vm58, %v862
  %v864 = vmul.f32 %v851, %v861
  %865 = vst.msk [vmem:[%s284] sm:$0xff] %vm168, %v864
  %v866 = vsel %vm58, %v847, %v861
  %v867 = vld [vmem:[%s53] sm:$0xff]
  %v868 = vld [vmem:[%s0] sm:$0xff]
  %v869 = vld [vmem:[%s56] sm:$0xff]
  %v870 = vld [vmem:[%s1] sm:$0xff]
  %v871 = vsel %vm58, %v867, %v868
  %v873 = vsel %vm60, %v866, 0
  %875 = vmatprep.subr.mxu0 0.0
  %876 = vmatpush1.msra.mxu0 %v44
  %877 = vmatprep.subr.mxu0 0.0
  %878 = vmatpush1.msra.mxu0 %v45
  %879 = vmatprep.subr.mxu0 0.0
  %880 = vmatpush1.msra.mxu0 %v46
  %881 = vmatprep.subr.mxu0 0.0
  %882 = vmatpush1.msra.mxu0 %v47
  %883 = vmatprep.subr.mxu0 0.0
  %884 = vmatpush1.msra.mxu0 %v48
  %885 = vmatprep.subr.mxu0 0.0
  %886 = vmatpush1.msra.mxu0 %v49
  %887 = vmatprep.subr.mxu0 0.0
  %888 = vmatpush1.msra.mxu0 %v50
  %889 = vmatprep.subr.mxu0 0.0
  %890 = vmatpush1.msra.mxu0 %v51
  %891 = vmatprep.subr.mxu0 0.0
  %892 = vmatpush1.msra.mxu0 0.0
  %893 = vmatprep.subr.mxu0 0.0
  %894 = vmatpush1.msra.mxu0 0.0
  %895 = vmatprep.subr.mxu0 0.0
  %896 = vmatpush1.msra.mxu0 0.0
  %897 = vmatprep.subr.mxu0 0.0
  %898 = vmatpush1.msra.mxu0 0.0
  %899 = vmatprep.subr.mxu0 0.0
  %900 = vmatpush1.msra.mxu0 0.0
  %901 = vmatprep.subr.mxu0 0.0
  %902 = vmatpush1.msra.mxu0 0.0
  %903 = vmatprep.subr.mxu0 0.0
  %904 = vmatpush1.msra.mxu0 0.0
  %905 = vmatprep.subr.mxu0 0.0
  %906 = vmatpush1.msra.mxu0 0.0
  %907 = vmatprep.subr.mxu0 0.0
  %908 = vmatpush1.msra.mxu0 0.0
  %909 = vmatprep.subr.mxu0 0.0
  %910 = vmatpush1.msra.mxu0 0.0
  %911 = vmatprep.subr.mxu0 0.0
  %912 = vmatpush1.msra.mxu0 0.0
  %913 = vmatprep.subr.mxu0 0.0
  %914 = vmatpush1.msra.mxu0 0.0
  %915 = vmatprep.subr.mxu0 0.0
  %916 = vmatpush1.msra.mxu0 0.0
  %917 = vmatprep.subr.mxu0 0.0
  %918 = vmatpush1.msra.mxu0 0.0
  %919 = vmatprep.subr.mxu0 0.0
  %920 = vmatpush1.msra.mxu0 0.0
  %921 = vmatprep.subr.mxu0 0.0
  %922 = vmatpush1.msra.mxu0 0.0
  %923 = vmatprep.subr.mxu0 0.0
  %924 = vmatpush1.msra.mxu0 0.0
  %925 = vmatprep.subr.mxu0 0.0
  %926 = vmatpush1.msra.mxu0 0.0
  %927 = vmatprep.subr.mxu0 0.0
  %928 = vmatpush1.msra.mxu0 0.0
  %929 = vmatprep.subr.mxu0 0.0
  %930 = vmatpush1.msra.mxu0 0.0
  %931 = vmatprep.subr.mxu0 0.0
  %932 = vmatpush1.msra.mxu0 0.0
  %933 = vmatprep.subr.mxu0 0.0
  %934 = vmatpush1.msra.mxu0 0.0
  %935 = vmatprep.subr.mxu0 0.0
  %936 = vmatpush1.msra.mxu0 0.0
  %937 = vmatprep.subr.mxu0 0.0
  %938 = vmatpush1.msra.mxu0 0.0
  %939 = vmatprep.mubr.f32.mxu0 0.0
  %940 = vmatmul.mubr.f32.gmra.mrb[0].mxu0 %v873
  %v941 = vpop.f32.mrb[0].mxu0
  %v942 = vadd.f32 0.0, %v941
  %v943 = vpop.f32.mrb[0].mxu0
  %944 = vdwg.mxu0
  %v945 = vadd.f32 %v871, %v942
  %v946 = vtanh.pop %v945
  %948 = vset.pattern.permute.xlu0 0
  %949 = vperm.xlu0 %948, %v869
  %v950 = vpop.permute.xlu0 %949
  %v952 = vmul.f32 %v950, %v946
  %v953 = vsub.f32 1.0, %v869
  %955 = vset.pattern.permute.xlu0 0
  %956 = vperm.xlu0 %955, %v953
  %v957 = vpop.permute.xlu0 %956
  %v959 = vmul.f32 %v957, %v866
  %v960 = vadd.f32 %v952, %v959
  %962 = vset.pattern.permute.xlu0 0
  %963 = vperm.xlu0 %962, %v870
  %v964 = vpop.permute.xlu0 %963
  %v966 = vmul.f32 %v964, %v946
  %v967 = vsub.f32 1.0, %v870
  %969 = vset.pattern.permute.xlu0 0
  %970 = vperm.xlu0 %969, %v967
  %v971 = vpop.permute.xlu0 %970
  %v973 = vmul.f32 %v971, %v866
  %v974 = vadd.f32 %v966, %v973
  %v975 = vmul.f32 %v950, %v960
  %976 = vst.msk [vmem:[%s167] sm:$0xff] %vm58, %v975
  %v977 = vmul.f32 %v964, %v974
  %978 = vst.msk [vmem:[#allocation2] sm:$0xff] %vm168, %v977
  %v979 = vld [vmem:[#allocation2] sm:$0xff]
  %v980 = vld [vmem:[#allocation2 + $0x8] sm:$0xff]
  %v981 = vld [vmem:[#allocation2 + $0x10] sm:$0xff]
  %v982 = vld [vmem:[#allocation2 + $0x18] sm:$0xff]
  %v983 = vld [vmem:[#allocation2 + $0x20] sm:$0xff]
  %v984 = vld [vmem:[#allocation2 + $0x28] sm:$0xff]
  %v985 = vld [vmem:[#allocation2 + $0x30] sm:$0xff]
  %v986 = vld [vmem:[#allocation2 + $0x38] sm:$0xff]
  %v987 = vld [vmem:[%s3] sm:$0xff]
  %v988 = vld [vmem:[%s3 + $0x8] sm:$0xff]
  %v989 = vld [vmem:[%s3 + $0x10] sm:$0xff]
  %v990 = vld [vmem:[%s3 + $0x18] sm:$0xff]
  %v991 = vld [vmem:[%s3 + $0x20] sm:$0xff]
  %v992 = vld [vmem:[%s3 + $0x28] sm:$0xff]
  %v993 = vld [vmem:[%s3 + $0x30] sm:$0xff]
  %v994 = vld [vmem:[%s3 + $0x38] sm:$0xff]
  %v995 = vld [vmem:[%s4] sm:$0x1]
  %v997 = vlaneseq
  %v998 = vshrl.u32 %v997, 7
  %v999 = vsub.s32 0, %v998
  %v1000 = vrot.slane %v995, %v999
  %v1003 = vsel %vm60, %v979, 0
  %v1006 = vsel %vm60, %v980, 0
  %v1009 = vsel %vm60, %v981, 0
  %v1012 = vsel %vm60, %v982, 0
  %v1015 = vsel %vm60, %v983, 0
  %v1018 = vsel %vm60, %v984, 0
  %v1021 = vsel %vm60, %v985, 0
  %v1024 = vsel %vm60, %v986, 0
  %1026 = vmatprep.subr.mxu0 0.0
  %1027 = vmatpush1.msra.mxu0 %v987
  %1028 = vmatprep.subr.mxu0 0.0
  %1029 = vmatpush1.msra.mxu0 %v988
  %1030 = vmatprep.subr.mxu0 0.0
  %1031 = vmatpush1.msra.mxu0 %v989
  %1032 = vmatprep.subr.mxu0 0.0
  %1033 = vmatpush1.msra.mxu0 %v990
  %1034 = vmatprep.subr.mxu0 0.0
  %1035 = vmatpush1.msra.mxu0 %v991
  %1036 = vmatprep.subr.mxu0 0.0
  %1037 = vmatpush1.msra.mxu0 %v992
  %1038 = vmatprep.subr.mxu0 0.0
  %1039 = vmatpush1.msra.mxu0 %v993
  %1040 = vmatprep.subr.mxu0 0.0
  %1041 = vmatpush1.msra.mxu0 %v994
  %1042 = vmatprep.subr.mxu0 0.0
  %1043 = vmatpush1.msra.mxu0 0.0
  %1044 = vmatprep.subr.mxu0 0.0
  %1045 = vmatpush1.msra.mxu0 0.0
  %1046 = vmatprep.subr.mxu0 0.0
  %1047 = vmatpush1.msra.mxu0 0.0
  %1048 = vmatprep.subr.mxu0 0.0
  %1049 = vmatpush1.msra.mxu0 0.0
  %1050 = vmatprep.subr.mxu0 0.0
  %1051 = vmatpush1.msra.mxu0 0.0
  %1052 = vmatprep.subr.mxu0 0.0
  %1053 = vmatpush1.msra.mxu0 0.0
  %1054 = vmatprep.subr.mxu0 0.0
  %1055 = vmatpush1.msra.mxu0 0.0
  %1056 = vmatprep.subr.mxu0 0.0
  %1057 = vmatpush1.msra.mxu0 0.0
  %1058 = vmatprep.subr.mxu0 0.0
  %1059 = vmatpush1.msra.mxu0 0.0
  %1060 = vmatprep.subr.mxu0 0.0
  %1061 = vmatpush1.msra.mxu0 0.0
  %1062 = vmatprep.subr.mxu0 0.0
  %1063 = vmatpush1.msra.mxu0 0.0
  %1064 = vmatprep.subr.mxu0 0.0
  %1065 = vmatpush1.msra.mxu0 0.0
  %1066 = vmatprep.subr.mxu0 0.0
  %1067 = vmatpush1.msra.mxu0 0.0
  %1068 = vmatprep.subr.mxu0 0.0
  %1069 = vmatpush1.msra.mxu0 0.0
  %1070 = vmatprep.subr.mxu0 0.0
  %1071 = vmatpush1.msra.mxu0 0.0
  %1072 = vmatprep.subr.mxu0 0.0
  %1073 = vmatpush1.msra.mxu0 0.0
  %1074 = vmatprep.subr.mxu0 0.0
  %1075 = vmatpush1.msra.mxu0 0.0
  %1076 = vmatprep.subr.mxu0 0.0
  %1077 = vmatpush1.msra.mxu0 0.0
  %1078 = vmatprep.subr.mxu0 0.0
  %1079 = vmatpush1.msra.mxu0 0.0
  %1080 = vmatprep.subr.mxu0 0.0
  %1081 = vmatpush1.msra.mxu0 0.0
  %1082 = vmatprep.subr.mxu0 0.0
  %1083 = vmatpush1.msra.mxu0 0.0
  %1084 = vmatprep.subr.mxu0 0.0
  %1085 = vmatpush1.msra.mxu0 0.0
  %1086 = vmatprep.subr.mxu0 0.0
  %1087 = vmatpush1.msra.mxu0 0.0
  %1088 = vmatprep.subr.mxu0 0.0
  %1089 = vmatpush1.msra.mxu0 0.0
  %1090 = vmatprep.mubr.f32.mxu0 0.0
  %1091 = vmatmul.mubr.f32.gmra.mrb[0].mxu0 %v1003
  %v1092 = vpop.f32.mrb[0].mxu0
  %v1093 = vadd.f32 %v1000, %v1092
  %v1094 = vpop.f32.mrb[0].mxu0
  %1095 = vmatprep.mubr.f32.mxu0 0.0
  %1096 = vmatmul.mubr.f32.gmra.mrb[0].mxu0 %v1006
  %v1097 = vpop.f32.mrb[0].mxu0
  %v1098 = vadd.f32 %v1000, %v1097
  %v1099 = vpop.f32.mrb[0].mxu0
  %1100 = vmatprep.mubr.f32.mxu0 0.0
  %1101 = vmatmul.mubr.f32.gmra.mrb[0].mxu0 %v1009
  %v1102 = vpop.f32.mrb[0].mxu0
  %v1103 = vadd.f32 %v1000, %v1102
  %v1104 = vpop.f32.mrb[0].mxu0
  %1105 = vmatprep.mubr.f32.mxu0 0.0
  %1106 = vmatmul.mubr.f32.gmra.mrb[0].mxu0 %v1012
  %v1107 = vpop.f32.mrb[0].mxu0
  %v1108 = vadd.f32 %v1000, %v1107
  %v1109 = vpop.f32.mrb[0].mxu0
  %1110 = vmatprep.mubr.f32.mxu0 0.0
  %1111 = vmatmul.mubr.f32.gmra.mrb[0].mxu0 %v1015
  %v1112 = vpop.f32.mrb[0].mxu0
  %v1113 = vadd.f32 %v1000, %v1112
  %v1114 = vpop.f32.mrb[0].mxu0
  %1115 = vmatprep.mubr.f32.mxu0 0.0
  %1116 = vmatmul.mubr.f32.gmra.mrb[0].mxu0 %v1018
  %v1117 = vpop.f32.mrb[0].mxu0
  %v1118 = vadd.f32 %v1000, %v1117
  %v1119 = vpop.f32.mrb[0].mxu0
  %1120 = vmatprep.mubr.f32.mxu0 0.0
  %1121 = vmatmul.mubr.f32.gmra.mrb[0].mxu0 %v1021
  %v1122 = vpop.f32.mrb[0].mxu0
  %v1123 = vadd.f32 %v1000, %v1122
  %v1124 = vpop.f32.mrb[0].mxu0
  %1125 = vmatprep.mubr.f32.mxu0 0.0
  %1126 = vmatmul.mubr.f32.gmra.mrb[0].mxu0 %v1024
  %v1127 = vpop.f32.mrb[0].mxu0
  %v1128 = vadd.f32 %v1000, %v1127
  %v1129 = vpop.f32.mrb[0].mxu0
  %1130 = vdwg.mxu0
  %v1131 = vmax.f32 %v1093, 0.0
  %v1132 = vmax.f32 %v1098, 0.0
  %v1133 = vmax.f32 %v1103, 0.0
  %v1134 = vmax.f32 %v1108, 0.0
  %v1135 = vmax.f32 %v1113, 0.0
  %v1136 = vmax.f32 %v1118, 0.0
  %v1137 = vmax.f32 %v1123, 0.0
  %v1138 = vmax.f32 %v1128, 0.0
  %v1139 = vld [vmem:[%s5] sm:$0x1]
  %v1141 = vlaneseq
  %v1142 = vshrl.u32 %v1141, 7
  %v1143 = vsub.s32 0, %v1142
  %v1144 = vrot.slane %v1139, %v1143
  %v1146 = vmul.f32 %v1131, %v1144
  %v1147 = vmul.f32 %v1132, %v1144
  %v1148 = vmul.f32 %v1133, %v1144
  %v1149 = vmul.f32 %v1134, %v1144
  %v1150 = vmul.f32 %v1135, %v1144
  %v1151 = vmul.f32 %v1136, %v1144
  %v1152 = vmul.f32 %v1137, %v1144
  %v1153 = vmul.f32 %v1138, %v1144
  %1154 = vadd.xlane.f32.xlu0 %v1146
  %v1155 = vpop.xlane.xlu0 %1154
  %1156 = vadd.xlane.f32.xlu0 %v1147
  %v1157 = vpop.xlane.xlu0 %1156
  %1158 = vadd.xlane.f32.xlu0 %v1148
  %v1159 = vpop.xlane.xlu0 %1158
  %1160 = vadd.xlane.f32.xlu0 %v1149
  %v1161 = vpop.xlane.xlu0 %1160
  %1162 = vadd.xlane.f32.xlu0 %v1150
  %v1163 = vpop.xlane.xlu0 %1162
  %1164 = vadd.xlane.f32.xlu0 %v1151
  %v1165 = vpop.xlane.xlu0 %1164
  %1166 = vadd.xlane.f32.xlu0 %v1152
  %v1167 = vpop.xlane.xlu0 %1166
  %1168 = vadd.xlane.f32.xlu0 %v1153
  %v1169 = vpop.xlane.xlu0 %1168
  %v1170 = vld [vmem:[#allocation3] sm:$0x1]
  %v1172 = vlaneseq
  %v1173 = vshrl.u32 %v1172, 7
  %v1174 = vsub.s32 0, %v1173
  %v1175 = vrot.slane %v1170, %v1174
  %v1177 = vadd.f32 %v1155, %v1175
  %v1178 = vadd.f32 %v1157, %v1175
  %v1179 = vadd.f32 %v1159, %v1175
  %v1180 = vadd.f32 %v1161, %v1175
  %v1181 = vadd.f32 %v1163, %v1175
  %v1182 = vadd.f32 %v1165, %v1175
  %v1183 = vadd.f32 %v1167, %v1175
  %v1184 = vadd.f32 %v1169, %v1175
  %vm1185 = vcmask 7168
  %v1186 = vsel %vm1185, %v1177, -inf
  %v1187 = vsel %vm1185, %v1178, -inf
  %v1188 = vsel %vm1185, %v1179, -inf
  %v1189 = vsel %vm1185, %v1180, -inf
  %v1190 = vsel %vm1185, %v1181, -inf
  %v1191 = vmax.f32 %v1186, %v1190
  %v1192 = vsel %vm1185, %v1182, -inf
  %v1193 = vmax.f32 %v1187, %v1192
  %v1194 = vsel %vm1185, %v1183, -inf
  %v1195 = vmax.f32 %v1188, %v1194
  %v1196 = vsel %vm1185, %v1184, -inf
  %v1197 = vmax.f32 %v1189, %v1196
  %v1198 = vmax.f32 %v1191, %v1193
  %v1199 = vmax.f32 %v1195, %v1197
  %v1200 = vmax.f32 %v1198, %v1199
  %v1201 = vsub.f32 %v1177, %v1200
  %v1202 = vsub.f32 %v1178, %v1200
  %v1203 = vsub.f32 %v1179, %v1200
  %v1204 = vsub.f32 %v1180, %v1200
  %v1205 = vsub.f32 %v1181, %v1200
  %v1206 = vsub.f32 %v1182, %v1200
  %v1207 = vsub.f32 %v1183, %v1200
  %v1208 = vsub.f32 %v1184, %v1200
  %v1209 = vmul.f32 %v1201, 1.442695
  %v1210 = vpow.pop %v1209
  %v1211 = vmul.f32 %v1202, 1.442695
  %v1212 = vpow.pop %v1211
  %v1213 = vmul.f32 %v1203, 1.442695
  %v1214 = vpow.pop %v1213
  %v1215 = vmul.f32 %v1204, 1.442695
  %v1216 = vpow.pop %v1215
  %v1217 = vmul.f32 %v1205, 1.442695
  %v1218 = vpow.pop %v1217
  %v1219 = vmul.f32 %v1206, 1.442695
  %v1220 = vpow.pop %v1219
  %v1221 = vmul.f32 %v1207, 1.442695
  %v1222 = vpow.pop %v1221
  %v1223 = vmul.f32 %v1208, 1.442695
  %v1224 = vpow.pop %v1223
  %v1225 = vsel %vm1185, %v1210, 0.0
  %v1226 = vsel %vm1185, %v1212, 0.0
  %v1227 = vadd.f32 %v1225, %v1226
  %v1228 = vsel %vm1185, %v1214, 0.0
  %v1229 = vadd.f32 %v1227, %v1228
  %v1230 = vsel %vm1185, %v1216, 0.0
  %v1231 = vadd.f32 %v1229, %v1230
  %v1232 = vsel %vm1185, %v1218, 0.0
  %v1233 = vadd.f32 %v1231, %v1232
  %v1234 = vsel %vm1185, %v1220, 0.0
  %v1235 = vadd.f32 %v1233, %v1234
  %v1236 = vsel %vm1185, %v1222, 0.0
  %v1237 = vadd.f32 %v1235, %v1236
  %v1238 = vsel %vm1185, %v1224, 0.0
  %v1239 = vadd.f32 %v1237, %v1238
  %v1240 = vrcp.pop %v1239
  %v1241 = vmul.f32 %v1210, %v1240
  %v1242 = vmul.f32 %v1212, %v1240
  %v1243 = vmul.f32 %v1214, %v1240
  %v1244 = vmul.f32 %v1216, %v1240
  %v1245 = vmul.f32 %v1218, %v1240
  %v1246 = vmul.f32 %v1220, %v1240
  %v1247 = vmul.f32 %v1222, %v1240
  %v1248 = vmul.f32 %v1224, %v1240
  %v1249 = vld [vmem:[%s1] sm:$0xff]
  %v1250 = vld [vmem:[%s1 + $0x8] sm:$0xff]
  %v1251 = vld [vmem:[%s1 + $0x10] sm:$0xff]
  %v1252 = vld [vmem:[%s1 + $0x18] sm:$0xff]
  %v1253 = vld [vmem:[%s1 + $0x20] sm:$0xff]
  %v1254 = vld [vmem:[%s1 + $0x28] sm:$0xff]
  %v1255 = vld [vmem:[%s1 + $0x30] sm:$0xff]
  %v1256 = vld [vmem:[%s1 + $0x38] sm:$0xff]
  %vm1257 = vcmp.gt.f32.partialorder %v1249, 0.0
  %vm1258 = vcmp.gt.f32.partialorder %v1250, 0.0
  %vm1259 = vcmp.gt.f32.partialorder %v1251, 0.0
  %vm1260 = vcmp.gt.f32.partialorder %v1252, 0.0
  %vm1261 = vcmp.gt.f32.partialorder %v1253, 0.0
  %vm1262 = vcmp.gt.f32.partialorder %v1254, 0.0
  %vm1263 = vcmp.gt.f32.partialorder %v1255, 0.0
  %vm1264 = vcmp.gt.f32.partialorder %v1256, 0.0
  %v1265 = vsel %vm1257, %v1241, -1e+09
  %v1266 = vsel %vm1258, %v1242, -1e+09
  %v1267 = vsel %vm1259, %v1243, -1e+09
  %v1268 = vsel %vm1260, %v1244, -1e+09
  %v1269 = vsel %vm1261, %v1245, -1e+09
  %v1270 = vsel %vm1262, %v1246, -1e+09
  %v1271 = vsel %vm1263, %v1247, -1e+09
  %v1272 = vsel %vm1264, %v1248, -1e+09
  %v1273 = vsel %vm1185, %v1265, -inf
  %v1274 = vsel %vm1185, %v1266, -inf
  %v1275 = vsel %vm1185, %v1267, -inf
  %v1276 = vsel %vm1185, %v1268, -inf
  %v1277 = vsel %vm1185, %v1269, -inf
  %v1278 = vmax.f32 %v1273, %v1277
  %v1279 = vsel %vm1185, %v1270, -inf
  %v1280 = vmax.f32 %v1274, %v1279
  %v1281 = vsel %vm1185, %v1271, -inf
  %v1282 = vmax.f32 %v1275, %v1281
  %v1283 = vsel %vm1185, %v1272, -inf
  %v1284 = vmax.f32 %v1276, %v1283
  %v1285 = vmax.f32 %v1278, %v1280
  %v1286 = vmax.f32 %v1282, %v1284
  %v1287 = vmax.f32 %v1285, %v1286
  %v1288 = vsub.f32 %v1265, %v1287
  %v1289 = vsub.f32 %v1266, %v1287
  %v1290 = vsub.f32 %v1267, %v1287
  %v1291 = vsub.f32 %v1268, %v1287
  %v1292 = vsub.f32 %v1269, %v1287
  %v1293 = vsub.f32 %v1270, %v1287
  %v1294 = vsub.f32 %v1271, %v1287
  %v1295 = vsub.f32 %v1272, %v1287
  %v1296 = vmul.f32 %v1288, 1.442695
  %v1297 = vpow.pop %v1296
  %v1298 = vmul.f32 %v1289, 1.442695
  %v1299 = vpow.pop %v1298
  %v1300 = vmul.f32 %v1290, 1.442695
  %v1301 = vpow.pop %v1300
  %v1302 = vmul.f32 %v1291, 1.442695
  %v1303 = vpow.pop %v1302
  %v1304 = vmul.f32 %v1292, 1.442695
  %v1305 = vpow.pop %v1304
  %v1306 = vmul.f32 %v1293, 1.442695
  %v1307 = vpow.pop %v1306
  %v1308 = vmul.f32 %v1294, 1.442695
  %v1309 = vpow.pop %v1308
  %v1310 = vmul.f32 %v1295, 1.442695
  %v1311 = vpow.pop %v1310
  %v1312 = vsel %vm1185, %v1297, 0.0
  %v1313 = vsel %vm1185, %v1299, 0.0
  %v1314 = vadd.f32 %v1312, %v1313
  %v1315 = vsel %vm1185, %v1301, 0.0
  %v1316 = vadd.f32 %v1314, %v1315
  %v1317 = vsel %vm1185, %v1303, 0.0
  %v1318 = vadd.f32 %v1316, %v1317
  %v1319 = vsel %vm1185, %v1305, 0.0
  %v1320 = vadd.f32 %v1318, %v1319
  %v1321 = vsel %vm1185, %v1307, 0.0
  %v1322 = vadd.f32 %v1320, %v1321
  %v1323 = vsel %vm1185, %v1309, 0.0
  %v1324 = vadd.f32 %v1322, %v1323
  %v1325 = vsel %vm1185, %v1311, 0.0
  %v1326 = vadd.f32 %v1324, %v1325
  %v1327 = vrcp.pop %v1326
  %v1328 = vmul.f32 %v1297, %v1327
  %v1329 = vmul.f32 %v1299, %v1327
  %v1330 = vmul.f32 %v1301, %v1327
  %v1331 = vmul.f32 %v1303, %v1327
  %v1332 = vmul.f32 %v1305, %v1327
  %v1333 = vmul.f32 %v1307, %v1327
  %v1334 = vmul.f32 %v1309, %v1327
  %v1335 = vmul.f32 %v1311, %v1327
  %1337 = vset.pattern.permute.xlu0 0
  %1338 = vperm.xlu0 %1337, %v1328
  %v1339 = vpop.permute.xlu0 %1338
  %1342 = vset.pattern.permute.xlu0 0
  %1343 = vperm.xlu0 %1342, %v1329
  %v1344 = vpop.permute.xlu0 %1343
  %1347 = vset.pattern.permute.xlu0 0
  %1348 = vperm.xlu0 %1347, %v1330
  %v1349 = vpop.permute.xlu0 %1348
  %1352 = vset.pattern.permute.xlu0 0
  %1353 = vperm.xlu0 %1352, %v1331
  %v1354 = vpop.permute.xlu0 %1353
  %1357 = vset.pattern.permute.xlu0 0
  %1358 = vperm.xlu0 %1357, %v1332
  %v1359 = vpop.permute.xlu0 %1358
  %1362 = vset.pattern.permute.xlu0 0
  %1363 = vperm.xlu0 %1362, %v1333
  %v1364 = vpop.permute.xlu0 %1363
  %1367 = vset.pattern.permute.xlu0 0
  %1368 = vperm.xlu0 %1367, %v1334
  %v1369 = vpop.permute.xlu0 %1368
  %1372 = vset.pattern.permute.xlu0 0
  %1373 = vperm.xlu0 %1372, %v1335
  %v1374 = vpop.permute.xlu0 %1373
  %v1376 = vmul.f32 %v979, %v1339
  %v1377 = vmul.f32 %v980, %v1344
  %v1378 = vmul.f32 %v981, %v1349
  %v1379 = vmul.f32 %v982, %v1354
  %v1380 = vmul.f32 %v983, %v1359
  %v1381 = vmul.f32 %v984, %v1364
  %v1382 = vmul.f32 %v985, %v1369
  %v1383 = vmul.f32 %v986, %v1374
  %v1384 = vsel %vm60, %v1376, 0.0
  %v1385 = vsel %vm60, %v1377, 0.0
  %v1386 = vadd.f32 %v1384, %v1385
  %v1387 = vsel %vm60, %v1378, 0.0
  %v1388 = vadd.f32 %v1386, %v1387
  %v1389 = vsel %vm60, %v1379, 0.0
  %v1390 = vadd.f32 %v1388, %v1389
  %v1391 = vsel %vm60, %v1380, 0.0
  %v1392 = vadd.f32 %v1390, %v1391
  %v1393 = vsel %vm60, %v1381, 0.0
  %v1394 = vadd.f32 %v1392, %v1393
  %v1395 = vsel %vm60, %v1382, 0.0
  %v1396 = vadd.f32 %v1394, %v1395
  %v1397 = vsel %vm60, %v1383, 0.0
  %v1398 = vadd.f32 %v1396, %v1397
  %v1399 = vld [vmem:[%s7] sm:$0xff]
  %v1400 = vld [vmem:[%s7 + $0x8] sm:$0xff]
  %v1401 = vld [vmem:[%s7 + $0x10] sm:$0xff]
  %v1402 = vld [vmem:[%s7 + $0x18] sm:$0xff]
  %v1403 = vld [vmem:[%s7 + $0x20] sm:$0xff]
  %v1404 = vld [vmem:[%s7 + $0x28] sm:$0xff]
  %v1405 = vld [vmem:[%s7 + $0x30] sm:$0xff]
  %v1406 = vld [vmem:[%s7 + $0x38] sm:$0xff]
  %v1407 = vld [vmem:[%s8] sm:$0x1]
  %v1409 = vlaneseq
  %v1410 = vshrl.u32 %v1409, 7
  %v1411 = vsub.s32 0, %v1410
  %v1412 = vrot.slane %v1407, %v1411
  %v1415 = vsel %vm60, %v1398, 0
  %1417 = vmatprep.subr.mxu0 0.0
  %1418 = vmatpush1.msra.mxu0 %v1399
  %1419 = vmatprep.subr.mxu0 0.0
  %1420 = vmatpush1.msra.mxu0 %v1400
  %1421 = vmatprep.subr.mxu0 0.0
  %1422 = vmatpush1.msra.mxu0 %v1401
  %1423 = vmatprep.subr.mxu0 0.0
  %1424 = vmatpush1.msra.mxu0 %v1402
  %1425 = vmatprep.subr.mxu0 0.0
  %1426 = vmatpush1.msra.mxu0 %v1403
  %1427 = vmatprep.subr.mxu0 0.0
  %1428 = vmatpush1.msra.mxu0 %v1404
  %1429 = vmatprep.subr.mxu0 0.0
  %1430 = vmatpush1.msra.mxu0 %v1405
  %1431 = vmatprep.subr.mxu0 0.0
  %1432 = vmatpush1.msra.mxu0 %v1406
  %1433 = vmatprep.subr.mxu0 0.0
  %1434 = vmatpush1.msra.mxu0 0.0
  %1435 = vmatprep.subr.mxu0 0.0
  %1436 = vmatpush1.msra.mxu0 0.0
  %1437 = vmatprep.subr.mxu0 0.0
  %1438 = vmatpush1.msra.mxu0 0.0
  %1439 = vmatprep.subr.mxu0 0.0
  %1440 = vmatpush1.msra.mxu0 0.0
  %1441 = vmatprep.subr.mxu0 0.0
  %1442 = vmatpush1.msra.mxu0 0.0
  %1443 = vmatprep.subr.mxu0 0.0
  %1444 = vmatpush1.msra.mxu0 0.0
  %1445 = vmatprep.subr.mxu0 0.0
  %1446 = vmatpush1.msra.mxu0 0.0
  %1447 = vmatprep.subr.mxu0 0.0
  %1448 = vmatpush1.msra.mxu0 0.0
  %1449 = vmatprep.subr.mxu0 0.0
  %1450 = vmatpush1.msra.mxu0 0.0
  %1451 = vmatprep.subr.mxu0 0.0
  %1452 = vmatpush1.msra.mxu0 0.0
  %1453 = vmatprep.subr.mxu0 0.0
  %1454 = vmatpush1.msra.mxu0 0.0
  %1455 = vmatprep.subr.mxu0 0.0
  %1456 = vmatpush1.msra.mxu0 0.0
  %1457 = vmatprep.subr.mxu0 0.0
  %1458 = vmatpush1.msra.mxu0 0.0
  %1459 = vmatprep.subr.mxu0 0.0
  %1460 = vmatpush1.msra.mxu0 0.0
  %1461 = vmatprep.subr.mxu0 0.0
  %1462 = vmatpush1.msra.mxu0 0.0
  %1463 = vmatprep.subr.mxu0 0.0
  %1464 = vmatpush1.msra.mxu0 0.0
  %1465 = vmatprep.subr.mxu0 0.0
  %1466 = vmatpush1.msra.mxu0 0.0
  %1467 = vmatprep.subr.mxu0 0.0
  %1468 = vmatpush1.msra.mxu0 0.0
  %1469 = vmatprep.subr.mxu0 0.0
  %1470 = vmatpush1.msra.mxu0 0.0
  %1471 = vmatprep.subr.mxu0 0.0
  %1472 = vmatpush1.msra.mxu0 0.0
  %1473 = vmatprep.subr.mxu0 0.0
  %1474 = vmatpush1.msra.mxu0 0.0
  %1475 = vmatprep.subr.mxu0 0.0
  %1476 = vmatpush1.msra.mxu0 0.0
  %1477 = vmatprep.subr.mxu0 0.0
  %1478 = vmatpush1.msra.mxu0 0.0
  %1479 = vmatprep.subr.mxu0 0.0
  %1480 = vmatpush1.msra.mxu0 0.0
  %1481 = vmatprep.mubr.f32.mxu0 0.0
  %1482 = vmatmul.mubr.f32.gmra.mrb[0].mxu0 %v1415
  %v1483 = vpop.f32.mrb[0].mxu0
  %v1484 = vadd.f32 %v1412, %v1483
  %v1485 = vpop.f32.mrb[0].mxu0
  %1486 = vdwg.mxu0
  %1487 = vst [vmem:[%s11] sm:$0xff] %v1484
  %v1488 = vld [vmem:[%s9] sm:$0x1]
  %v1490 = vlaneseq
  %v1491 = vshrl.u32 %v1490, 7
  %v1492 = vsub.s32 0, %v1491
  %v1493 = vrot.slane %v1488, %v1492
  %v1495 = vmul.f32 %v979, %v1493
  %v1496 = vmul.f32 %v980, %v1493
  %v1497 = vmul.f32 %v981, %v1493
  %v1498 = vmul.f32 %v982, %v1493
  %v1499 = vmul.f32 %v983, %v1493
  %v1500 = vmul.f32 %v984, %v1493
  %v1501 = vmul.f32 %v985, %v1493
  %v1502 = vmul.f32 %v986, %v1493
  %v1503 = vsel %vm60, %v1495, 0.0
  %1504 = vadd.xlane.f32.xlu0 %v1503
  %v1505 = vpop.xlane.xlu0 %1504
  %v1506 = vsel %vm60, %v1496, 0.0
  %1507 = vadd.xlane.f32.xlu0 %v1506
  %v1508 = vpop.xlane.xlu0 %1507
  %v1509 = vsel %vm60, %v1497, 0.0
  %1510 = vadd.xlane.f32.xlu0 %v1509
  %v1511 = vpop.xlane.xlu0 %1510
  %v1512 = vsel %vm60, %v1498, 0.0
  %1513 = vadd.xlane.f32.xlu0 %v1512
  %v1514 = vpop.xlane.xlu0 %1513
  %v1515 = vsel %vm60, %v1499, 0.0
  %1516 = vadd.xlane.f32.xlu0 %v1515
  %v1517 = vpop.xlane.xlu0 %1516
  %v1518 = vsel %vm60, %v1500, 0.0
  %1519 = vadd.xlane.f32.xlu0 %v1518
  %v1520 = vpop.xlane.xlu0 %1519
  %v1521 = vsel %vm60, %v1501, 0.0
  %1522 = vadd.xlane.f32.xlu0 %v1521
  %v1523 = vpop.xlane.xlu0 %1522
  %v1524 = vsel %vm60, %v1502, 0.0
  %1525 = vadd.xlane.f32.xlu0 %v1524
  %v1526 = vpop.xlane.xlu0 %1525
  %v1535 = vlaneseq
  %v1536 = vand.u32 %v1535, 127
  %v1537 = vlaneseq
  %v1538 = vshrl.u32 %v1537, 7
  %v1539 = vsub.s32 %v1536, %v1538
  %v1540 = vrot.slane %v1505, %v1539
  %v1541 = vlaneseq
  %v1542 = vshrl.u32 %v1541, 7
  %v1543 = vsub.s32 %v1536, %v1542
  %v1544 = vrot.slane %v1508, %v1543
  %v1545 = vlaneseq
  %v1546 = vshrl.u32 %v1545, 7
  %v1547 = vsub.s32 %v1536, %v1546
  %v1548 = vrot.slane %v1511, %v1547
  %v1549 = vlaneseq
  %v1550 = vshrl.u32 %v1549, 7
  %v1551 = vsub.s32 %v1536, %v1550
  %v1552 = vrot.slane %v1514, %v1551
  %v1553 = vlaneseq
  %v1554 = vshrl.u32 %v1553, 7
  %v1555 = vsub.s32 %v1536, %v1554
  %v1556 = vrot.slane %v1517, %v1555
  %v1557 = vlaneseq
  %v1558 = vshrl.u32 %v1557, 7
  %v1559 = vsub.s32 %v1536, %v1558
  %v1560 = vrot.slane %v1520, %v1559
  %v1561 = vlaneseq
  %v1562 = vshrl.u32 %v1561, 7
  %v1563 = vsub.s32 %v1536, %v1562
  %v1564 = vrot.slane %v1523, %v1563
  %v1565 = vlaneseq
  %v1566 = vshrl.u32 %v1565, 7
  %v1567 = vsub.s32 %v1536, %v1566
  %v1568 = vrot.slane %v1526, %v1567
  %vm1569 = vcmask 1041409
  %v1570 = vsel %vm1569, %v1544, %v1540
  %vm1571 = vcmask 1042434
  %v1572 = vsel %vm1571, %v1548, %v1570
  %vm1573 = vcmask 1043459
  %v1574 = vsel %vm1573, %v1552, %v1572
  %vm1575 = vcmask 1044484
  %v1576 = vsel %vm1575, %v1556, %v1574
  %vm1577 = vcmask 1045509
  %v1578 = vsel %vm1577, %v1560, %v1576
  %vm1579 = vcmask 1046534
  %v1580 = vsel %vm1579, %v1564, %v1578
  %vm1581 = vcmask 1047559
  %v1582 = vsel %vm1581, %v1568, %v1580
  %1584 = vxpose.xlu0.b32.start [1/16] %v1582, 128
  %1585 = vxpose.xlu0.b32.cont [2/16] 0.0, 128
  %1586 = vxpose.xlu0.b32.cont [3/16] 0.0, 128
  %1587 = vxpose.xlu0.b32.cont [4/16] 0.0, 128
  %1588 = vxpose.xlu0.b32.cont [5/16] 0.0, 128
  %1589 = vxpose.xlu0.b32.cont [6/16] 0.0, 128
  %1590 = vxpose.xlu0.b32.cont [7/16] 0.0, 128
  %1591 = vxpose.xlu0.b32.cont [8/16] 0.0, 128
  %1592 = vxpose.xlu0.b32.cont [9/16] 0.0, 128
  %1593 = vxpose.xlu0.b32.cont [10/16] 0.0, 128
  %1594 = vxpose.xlu0.b32.cont [11/16] 0.0, 128
  %1595 = vxpose.xlu0.b32.cont [12/16] 0.0, 128
  %1596 = vxpose.xlu0.b32.cont [13/16] 0.0, 128
  %1597 = vxpose.xlu0.b32.cont [14/16] 0.0, 128
  %1598 = vxpose.xlu0.b32.cont [15/16] 0.0, 128
  %1599 = vxpose.xlu0.b32.end [16/16] 0.0, 128
  %v1600 = vpop.trf.xlu0
  %v1601 = vpop.trf.xlu0
  %v1602 = vpop.trf.xlu0
  %v1603 = vpop.trf.xlu0
  %v1604 = vpop.trf.xlu0
  %v1605 = vpop.trf.xlu0
  %v1606 = vpop.trf.xlu0
  %v1607 = vpop.trf.xlu0
  %v1608 = vpop.trf.xlu0
  %v1609 = vpop.trf.xlu0
  %v1610 = vpop.trf.xlu0
  %v1611 = vpop.trf.xlu0
  %v1612 = vpop.trf.xlu0
  %v1613 = vpop.trf.xlu0
  %v1614 = vpop.trf.xlu0
  %v1615 = vpop.trf.xlu0
  %v1616 = vld [vmem:[#allocation4] sm:$0x1]
  %v1618 = vlaneseq
  %v1619 = vshrl.u32 %v1618, 7
  %v1620 = vsub.s32 0, %v1619
  %v1621 = vrot.slane %v1616, %v1620
  %1622 = vset.pattern.permute.xlu0 0
  %1623 = vperm.xlu0 %1622, %v1621
  %v1624 = vpop.permute.xlu0 %1623
  %v1626 = vadd.f32 %v1600, %v1624
  %vm1627 = vcmask 64512
  %1628 = vst.msk [vmem:[%s12] sm:$0xff] %vm1627, %v1626
  // Predicated region
  $region46: #{video_classifier_forward.3} parent=0 // pred_check
    _
  $region47: #{video_classifier_forward.3} parent=0 // pred_check_branch
    %1630 = sbr.rel (0) target = $region49
  $region48: #{video_classifier_forward.3} parent=0 // pred_region
    _
  $region49: #{video_classifier_forward.3} parent=0 // pred_fallthru
    _
  // Predicated region
  $region50: #{video_classifier_forward.3} parent=0 // pred_check
    _
  $region51: #{video_classifier_forward.3} parent=0 // pred_check_branch
    %1632 = sbr.rel (0) target = $region53
  $region52: #{video_classifier_forward.3} parent=0 // pred_region
    _
  $region53: #{video_classifier_forward.3} parent=0 // pred_fallthru
    _
  // Predicated region
  $region54: #{video_classifier_forward.3} parent=0 // pred_check
    _
  $region55: #{video_classifier_forward.3} parent=0 // pred_check_branch
    %1634 = sbr.rel (0) target = $region57
  $region56: #{video_classifier_forward.3} parent=0 // pred_region
    _
  $region57: #{video_classifier_forward.3} parent=0 // pred_fallthru
    _
  // Predicated region
  $region58: #{video_classifier_forward.3} parent=0 // pred_check
    _
  $region59: #{video_classifier_forward.3} parent=0 // pred_check_branch
    %1636 = sbr.rel (0) target = $region61
  $region60: #{video_classifier_forward.3} parent=0 // pred_region
    _
  $region61: #{video_classifier_forward.3} parent=0 // pred_fallthru
    _

</llo_original>
